<compile_context>
chip_gen: v5e
topology: v5e:2x2
jax: 0.10.0
libtpu: 0.0.40
codegen_flags: <defaults>
</compile_context>

<pallas_src>
import functools

import jax
import jax.numpy as jnp
from jax.experimental import pallas as pl
from jax.experimental.pallas import tpu as pltpu

LANE = 128
COL0 = 8                       # sublane-aligned start of the pad-scratch interior
_TAP_GROUPS = ((0, 1), (2, 3), (4, 5), (6, 7), (8,))   # K=256 pairs + one K=128


def _round_up(x, m):
    return (x + m - 1) // m * m


def _pick_row_tile(H, W, Cp, row_tile):
    """Row-band height.  Explicit row_tile must divide H; auto picks the
    largest divisor of H whose f32 band stays under ~8 MiB (pipelining room)."""
    if row_tile is not None:
        if H % row_tile != 0:
            raise ValueError(f"row_tile={row_tile} must divide H={H}")
        return row_tile
    budget = 8 << 20
    for d in range(H, 0, -1):
        if H % d == 0 and (d + 4) * (W + 2) * Cp * 4 <= budget:
            return d
    return 1


def _vmem_limit(buffer_bytes, scratch_bytes=0):
    """Scoped-VMEM request: double-buffered pipeline buffers + scratch +
    headroom for in-kernel temporaries, clamped under v7x physical VMEM."""
    total = 2 * sum(buffer_bytes) + scratch_bytes
    total = int(total * 1.5) + (4 << 20)
    return max(min(total, 64 << 20), 32 << 20)


def _conv3x3_acc(xp, w_ref, n_rows, n_cols, c_in, row0, col0):
    """Tap-accumulated 3x3 conv (no materialized im2col).

    xp:    padded activation (array or VMEM ref), sliced per tap.
    w_ref: (9*c_in, c_out) tap-major weights.
    Returns an (n_rows*n_cols, c_out) float32 accumulator.
    """
    acc = None
    for group in _TAP_GROUPS:
        parts = []
        for tap in group:
            dy, dx = divmod(tap, 3)
            parts.append(xp[row0 + dy:row0 + dy + n_rows,
                            col0 + dx:col0 + dx + n_cols, :])
        a = parts[0] if len(parts) == 1 else jnp.concatenate(parts, axis=-1)
        a = a.reshape(n_rows * n_cols, len(group) * c_in)
        w = w_ref[group[0] * c_in:(group[-1] + 1) * c_in, :]
        d = jnp.dot(a, w, preferred_element_type=jnp.float32)
        acc = d if acc is None else acc + d
    return acc


# --------------------------- pass A: conv1 + bn1 stats -----------------------
def _make_conv1_kernel(TH, W, Cin_p, inter_dtype):
    def kernel(x_ref, w_ref, y_ref, stats_ref):
        xp = x_ref[...]                                   # (TH+4, W+2, Cin_p)
        y = _conv3x3_acc(xp, w_ref, TH + 2, W, Cin_p, 0, 0)
        Cout_p = y.shape[-1]
        y3 = y.reshape(TH + 2, W, Cout_p)                 # band + 1-row halo each side
        y_ref[...] = y3.astype(inter_dtype)
        # Single-pass BN partials over the band's OWN rows only (halo rows are
        # owned / counted by the neighbouring band or do not exist).
        interior = y3[1:TH + 1].reshape(TH * W, Cout_p)
        s = jnp.sum(interior, axis=0, keepdims=True)
        ss = jnp.sum(interior * interior, axis=0, keepdims=True)
        stats_ref[...] = jnp.concatenate([s, ss], axis=0)
    return kernel


# ---------------- pass B: fused bn1 affine + relu + conv2 + bn2 stats --------
def _make_conv2_kernel(TH, W, C, compute_dtype, inter_dtype):
    f32 = jnp.float32

    def kernel(y1_ref, scale_ref, bias_ref, w_ref, y2_ref, stats_ref, pad_ref):
        t = pl.program_id(1)
        last_t = pl.num_programs(1) - 1
        scale = scale_ref[...].reshape(1, 1, C)
        bias = bias_ref[...].reshape(1, 1, C)
        h = jnp.maximum(y1_ref[...].astype(f32) * scale + bias, 0.0)  # (TH+2, W, C)

        # Pad scratch: interior at columns [COL0, COL0+W) (sublane-aligned,
        # unmasked store); halo columns COL0-1 / COL0+W re-zeroed each step
        # (tiny); halo rows come from the neighbour band or are zeroed at the
        # image boundary (t==0 / t==T-1) via a 0/1 scalar mask.
        zcol = jnp.zeros((TH + 2, 1, C), compute_dtype)
        pad_ref[:, COL0 - 1:COL0, :] = zcol
        pad_ref[:, COL0 + W:COL0 + W + 1, :] = zcol
        top_keep = (t > 0).astype(f32)
        bot_keep = (t < last_t).astype(f32)
        pad_ref[0:1, COL0:COL0 + W, :] = (h[0:1] * top_keep).astype(compute_dtype)
        pad_ref[TH + 1:TH + 2, COL0:COL0 + W, :] = (
            h[TH + 1:TH + 2] * bot_keep).astype(compute_dtype)
        pad_ref[1:TH + 1, COL0:COL0 + W, :] = h[1:TH + 1].astype(compute_dtype)

        y2 = _conv3x3_acc(pad_ref, w_ref, TH, W, C, 0, COL0 - 1)      # (TH*W, C) f32
        y2_ref[...] = y2.reshape(TH, W, C).astype(inter_dtype)
        s = jnp.sum(y2, axis=0, keepdims=True)
        ss = jnp.sum(y2 * y2, axis=0, keepdims=True)
        stats_ref[...] = jnp.concatenate([s, ss], axis=0)
    return kernel


# ---------------- pass C: fused bn2 affine + residual + relu -----------------
def _make_residual_kernel(TH, W, Cout_p, Cin_p, same_planes):
    f32 = jnp.float32
    if same_planes:
        def kernel(y2_ref, scale_ref, bias_ref, xres_ref, out_ref):
            scale = scale_ref[...].reshape(1, 1, Cout_p)
            bias = bias_ref[...].reshape(1, 1, Cout_p)
            o = y2_ref[...].astype(f32) * scale + bias + xres_ref[...].astype(f32)
            out_ref[...] = jnp.maximum(o, 0.0)
    else:
        def kernel(y2_ref, scale_ref, bias_ref, xres_ref, ws_ref, out_ref):
            scale = scale_ref[...].reshape(1, 1, Cout_p)
            bias = bias_ref[...].reshape(1, 1, Cout_p)
            o = y2_ref[...].astype(f32) * scale + bias
            sc = jnp.dot(xres_ref[...].reshape(TH * W, Cin_p), ws_ref[...],
                         preferred_element_type=jnp.float32)
            o = o + sc.reshape(TH, W, Cout_p)
            out_ref[...] = jnp.maximum(o, 0.0)
    return kernel


# -------------------------------- wrapper ------------------------------------
@functools.partial(jax.jit, static_argnames=("compute_dtype", "row_tile"))
def basic_block_forward(x_nchw, params, eps=1e-5, *,
                        compute_dtype=jnp.bfloat16, row_tile=None):
    """Forward matching PyTorch BasicBlock.forward (training-mode BatchNorm).

    compute_dtype: MXU operand / HBM-intermediate dtype (bf16 in production,
                   f32 for tight validation).  Accumulation & BN math are f32.
    row_tile:      row-band height (must divide H); None -> auto.
    """
    N, Cin, H, W = x_nchw.shape
    Cout = params["w1"].shape[0]                 # torch conv weight (Cout,Cin,3,3)
    same_planes = (Cin == Cout)
    Cin_p = _round_up(Cin, LANE)
    Cout_p = _round_up(Cout, LANE)
    f32 = jnp.float32
    inter_dtype = compute_dtype                  # HBM intermediates y1/y2/x_res
    csize = jnp.dtype(compute_dtype).itemsize
    isize = jnp.dtype(inter_dtype).itemsize

    TH = _pick_row_tile(H, W, max(Cin_p, Cout_p), row_tile)
    T = H // TH

    # ---- layout glue (plain JAX, once per block) -----------------------------
    x_nhwc = jnp.transpose(x_nchw, (0, 2, 3, 1)).astype(f32)
    x_c = jnp.pad(x_nhwc, ((0, 0), (0, 0), (0, 0), (0, Cin_p - Cin)))
    x_res_b = x_c.reshape(N, T, TH, W, Cin_p).astype(inter_dtype)
    # Double row padding so pass A can also compute the 1-row halo of each band.
    x_pad2 = jnp.pad(x_c, ((0, 0), (2, 2), (1, 1), (0, 0))).astype(compute_dtype)
    row_idx = (jnp.arange(T) * TH)[:, None] + jnp.arange(TH + 4)[None, :]
    x_bands = x_pad2[:, row_idx]                 # (N, T, TH+4, W+2, Cin_p)

    def conv_weight(w, ci, ci_p, co, co_p):      # (Cout,Cin,3,3) -> tap-major (9*ci_p, co_p)
        w = jnp.transpose(w, (2, 3, 1, 0)).astype(compute_dtype)
        w = jnp.pad(w, ((0, 0), (0, 0), (0, ci_p - ci), (0, co_p - co)))
        return w.reshape(9 * ci_p, co_p)

    w1 = conv_weight(params["w1"], Cin, Cin_p, Cout, Cout_p)
    w2 = conv_weight(params["w2"], Cout, Cout_p, Cout, Cout_p)

    def chan_vec(v):
        return jnp.pad(v.astype(f32).reshape(1, Cout), ((0, 0), (0, Cout_p - Cout)))

    g1, b1 = chan_vec(params["g1"]), chan_vec(params["b1"])
    g2, b2 = chan_vec(params["g2"]), chan_vec(params["b2"])

    grid = (N, T)
    sem = ("parallel", "parallel")

    # ---------------------------------- pass A --------------------------------
    bufA = [(TH + 4) * (W + 2) * Cin_p * csize, 9 * Cin_p * Cout_p * csize,
            (TH + 2) * W * Cout_p * isize, 2 * Cout_p * 4]
    y1b, stats1 = pl.pallas_call(
        _make_conv1_kernel(TH, W, Cin_p, inter_dtype),
        grid=grid,
        in_specs=[
            pl.BlockSpec((None, None, TH + 4, W + 2, Cin_p),
                         lambda n, t: (n, t, 0, 0, 0)),
            pl.BlockSpec((9 * Cin_p, Cout_p), lambda n, t: (0, 0)),
        ],
        out_specs=[
            pl.BlockSpec((None, None, TH + 2, W, Cout_p),
                         lambda n, t: (n, t, 0, 0, 0)),
            pl.BlockSpec((None, None, 2, Cout_p), lambda n, t: (n, t, 0, 0)),
        ],
        out_shape=[
            jax.ShapeDtypeStruct((N, T, TH + 2, W, Cout_p), inter_dtype),
            jax.ShapeDtypeStruct((N, T, 2, Cout_p), f32),
        ],
        compiler_params=pltpu.CompilerParams(
            dimension_semantics=sem, vmem_limit_bytes=_vmem_limit(bufA)),
    )(x_bands, w1)

    # Per-channel BN finalisation (tiny glue): fold mean/var/gamma/beta into a
    # single scale/bias so the next pass is one fused multiply-add.
    # Padded lanes: gamma=0 -> scale=0, bias=0 -> padded channels stay 0.
    def bn_scale_bias(stats, g, b):
        s = jnp.sum(stats, axis=(0, 1))          # (2, Cout_p)
        cnt = jnp.asarray(N * H * W, f32)
        mean = s[0] / cnt
        var = jnp.maximum(s[1] / cnt - mean * mean, 0.0)
        scale = g[0] * jax.lax.rsqrt(var + eps)
        bias = b[0] - mean * scale
        return scale.reshape(1, Cout_p), bias.reshape(1, Cout_p)

    scale1, bias1 = bn_scale_bias(stats1, g1, b1)

    # ---------------------------------- pass B --------------------------------
    W_alloc = _round_up(COL0 + W + 1, 8)
    bufB = [(TH + 2) * W * Cout_p * isize, Cout_p * 4, Cout_p * 4,
            9 * Cout_p * Cout_p * csize, TH * W * Cout_p * isize, 2 * Cout_p * 4]
    scratchB = (TH + 2) * W_alloc * Cout_p * csize
    y2b, stats2 = pl.pallas_call(
        _make_conv2_kernel(TH, W, Cout_p, compute_dtype, inter_dtype),
        grid=grid,
        in_specs=[
            pl.BlockSpec((None, None, TH + 2, W, Cout_p),
                         lambda n, t: (n, t, 0, 0, 0)),
            pl.BlockSpec((1, Cout_p), lambda n, t: (0, 0)),
            pl.BlockSpec((1, Cout_p), lambda n, t: (0, 0)),
            pl.BlockSpec((9 * Cout_p, Cout_p), lambda n, t: (0, 0)),
        ],
        out_specs=[
            pl.BlockSpec((None, None, TH, W, Cout_p),
                         lambda n, t: (n, t, 0, 0, 0)),
            pl.BlockSpec((None, None, 2, Cout_p), lambda n, t: (n, t, 0, 0)),
        ],
        out_shape=[
            jax.ShapeDtypeStruct((N, T, TH, W, Cout_p), inter_dtype),
            jax.ShapeDtypeStruct((N, T, 2, Cout_p), f32),
        ],
        scratch_shapes=[pltpu.VMEM((TH + 2, W_alloc, Cout_p), compute_dtype)],
        compiler_params=pltpu.CompilerParams(
            dimension_semantics=sem, vmem_limit_bytes=_vmem_limit(bufB, scratchB)),
    )(y1b, scale1, bias1, w2)

    scale2, bias2 = bn_scale_bias(stats2, g2, b2)

    # ---------------------------------- pass C --------------------------------
    in_specs = [
        pl.BlockSpec((None, None, TH, W, Cout_p), lambda n, t: (n, t, 0, 0, 0)),
        pl.BlockSpec((1, Cout_p), lambda n, t: (0, 0)),
        pl.BlockSpec((1, Cout_p), lambda n, t: (0, 0)),
        pl.BlockSpec((None, None, TH, W, Cin_p), lambda n, t: (n, t, 0, 0, 0)),
    ]
    args = [y2b, scale2, bias2, x_res_b]
    bufC = [TH * W * Cout_p * isize, Cout_p * 4, Cout_p * 4,
            TH * W * Cin_p * isize, TH * W * Cout_p * 4]
    if not same_planes:
        ws = jnp.transpose(params["ws"][:, :, 0, 0], (1, 0))
        ws = jnp.pad(ws, ((0, Cin_p - Cin), (0, Cout_p - Cout))).astype(compute_dtype)
        in_specs.append(pl.BlockSpec((Cin_p, Cout_p), lambda n, t: (0, 0)))
        args.append(ws)
        bufC.append(Cin_p * Cout_p * csize)

    aliases = {0: 0} if jnp.dtype(inter_dtype) == jnp.dtype(f32) else {}
    out_b = pl.pallas_call(
        _make_residual_kernel(TH, W, Cout_p, Cin_p, same_planes),
        grid=grid,
        in_specs=in_specs,
        out_specs=pl.BlockSpec((None, None, TH, W, Cout_p),
                               lambda n, t: (n, t, 0, 0, 0)),
        out_shape=jax.ShapeDtypeStruct((N, T, TH, W, Cout_p), f32),
        input_output_aliases=aliases,
        compiler_params=pltpu.CompilerParams(
            dimension_semantics=sem, vmem_limit_bytes=_vmem_limit(bufC)),
    )(*args)

    # Banded lane-padded NHWC -> NCHW, strip channel padding (glue).
    out = out_b.reshape(N, H, W, Cout_p)[..., :Cout]
    return jnp.transpose(out, (0, 3, 1, 2))


# ---------------------- pure-JAX reference (for checking) --------------------
def _bn_train(x, g, b, eps):
    m = jnp.mean(x, axis=(0, 2, 3), keepdims=True)
    v = jnp.mean((x - m) ** 2, axis=(0, 2, 3), keepdims=True)
    return (x - m) * jax.lax.rsqrt(v + eps) * g.reshape(1, -1, 1, 1) + b.reshape(1, -1, 1, 1)


def reference_forward(x, p, eps=1e-5):
    dn = ("NCHW", "OIHW", "NCHW")
    Cin, Cout = x.shape[1], p["w1"].shape[0]
    out = jax.lax.conv_general_dilated(x, p["w1"], (1, 1), ((1, 1), (1, 1)),
                                       dimension_numbers=dn)
    out = jnp.maximum(_bn_train(out, p["g1"], p["b1"], eps), 0.0)
    out = jax.lax.conv_general_dilated(out, p["w2"], (1, 1), ((1, 1), (1, 1)),
                                       dimension_numbers=dn)
    out = _bn_train(out, p["g2"], p["b2"], eps)
    if Cin != Cout:
        out = out + jax.lax.conv_general_dilated(x, p["ws"], (1, 1), ((0, 0), (0, 0)),
                                                 dimension_numbers=dn)
    else:
        out = out + x
    return jnp.maximum(out, 0.0)


def _make_params(key, Cin, Cout, with_shortcut):
    k1, k2, k3, k4, k5, k6, k7 = jax.random.split(key, 7)
    p = {
        "w1": 0.2 * jax.random.normal(k1, (Cout, Cin, 3, 3), jnp.float32),
        "w2": 0.2 * jax.random.normal(k2, (Cout, Cout, 3, 3), jnp.float32),
        "g1": 1.0 + 0.1 * jax.random.normal(k4, (Cout,), jnp.float32),
        "b1": 0.1 * jax.random.normal(k5, (Cout,), jnp.float32),
        "g2": 1.0 + 0.1 * jax.random.normal(k6, (Cout,), jnp.float32),
        "b2": 0.1 * jax.random.normal(k7, (Cout,), jnp.float32),
    }
    if with_shortcut:
        p["ws"] = 0.2 * jax.random.normal(k3, (Cout, Cin, 1, 1), jnp.float32)
    return p


if __name__ == "__main__":
    key = jax.random.PRNGKey(0)
    kx1, kp1, kx2, kp2 = jax.random.split(key, 4)

    # Config 1: inplanes != outplanes (1x1 shortcut path), 2 row bands (T=2),
    # f32 compute for a tight numerical check.
    N, Cin, Cout, H, W = 2, 4, 8, 16, 16
    x = jax.random.normal(kx1, (N, Cin, H, W), dtype=jnp.float32)
    params = _make_params(kp1, Cin, Cout, with_shortcut=True)
    ref = jax.block_until_ready(reference_forward(x, params))
    out = jax.block_until_ready(
        basic_block_forward(x, params, compute_dtype=jnp.float32, row_tile=8))
    assert out.shape == (N, Cout, H, W), out.shape
    err = float(jnp.max(jnp.abs(out - ref)))
    if err > 2e-2:
        raise AssertionError(f"shortcut/f32 path mismatch, max abs err = {err}")

    # Same config through the bf16 production path (loose tolerance).
    out_bf = jax.block_until_ready(
        basic_block_forward(x, params, compute_dtype=jnp.bfloat16, row_tile=8))
    err_bf = float(jnp.max(jnp.abs(out_bf - ref)))
    if err_bf > 2.5e-1:
        raise AssertionError(f"shortcut/bf16 path mismatch, max abs err = {err_bf}")

    # Config 2: inplanes == outplanes (identity residual), auto row tile (T=1).
    N, Cin, Cout, H, W = 2, 8, 8, 16, 16
    x2 = jax.random.normal(kx2, (N, Cin, H, W), dtype=jnp.float32)
    params2 = _make_params(kp2, Cin, Cout, with_shortcut=False)
    ref2 = jax.block_until_ready(reference_forward(x2, params2))
    out2 = jax.block_until_ready(
        basic_block_forward(x2, params2, compute_dtype=jnp.float32))
    assert out2.shape == (N, Cout, H, W), out2.shape
    err2 = float(jnp.max(jnp.abs(out2 - ref2)))
    if err2 > 2e-2:
        raise AssertionError(f"identity path mismatch, max abs err = {err2}")

    print("KERNEL_OK")
</pallas_src>

<mosaic_0001>
module attributes {stable_mosaic.version = 11 : i64} {
  func.func @kernel(%arg0: i32, %arg1: i32, %arg2: memref<1x1x12x18x128xf32, #tpu.memory_space<vmem>>, %arg3: memref<1152x128xf32, #tpu.memory_space<vmem>>, %arg4: memref<1x1x10x16x128xf32, #tpu.memory_space<vmem>>, %arg5: memref<1x1x2x128xf32, #tpu.memory_space<vmem>>) attributes {dimension_semantics = [#tpu.dimension_semantics<parallel>, #tpu.dimension_semantics<parallel>], iteration_bounds = array<i64: 2, 2>, scalar_prefetch = 0 : i64, scratch_operands = 0 : i64, tpu.core_type = #tpu.core_type<tc>, window_params = [{transform_indices = @transform_0, window_bounds = array<i64: 1, 1, 12, 18, 128>}, {pipeline_mode = #tpu.pipeline_mode<synchronous>, transform_indices = @transform_1, window_bounds = array<i64: 1152, 128>}, {transform_indices = @transform_2, window_bounds = array<i64: 1, 1, 10, 16, 128>}, {transform_indices = @transform_3, window_bounds = array<i64: 1, 1, 2, 128>}]} {
    %c0 = arith.constant 0 : index
    %c0_0 = arith.constant 0 : index
    %c0_1 = arith.constant 0 : index
    %c0_2 = arith.constant 0 : index
    %c0_3 = arith.constant 0 : index
    %0 = vector.load %arg2[%c0, %c0_0, %c0_1, %c0_2, %c0_3] : memref<1x1x12x18x128xf32, #tpu.memory_space<vmem>>, vector<1x1x12x18x128xf32>
    %1 = vector.shape_cast %0 : vector<1x1x12x18x128xf32> to vector<12x18x128xf32>
    %2 = vector.extract_strided_slice %1 {offsets = [0, 0, 0], sizes = [10, 16, 128], strides = [1, 1, 1]} : vector<12x18x128xf32> to vector<10x16x128xf32>
    %3 = vector.extract_strided_slice %1 {offsets = [0, 1, 0], sizes = [10, 16, 128], strides = [1, 1, 1]} : vector<12x18x128xf32> to vector<10x16x128xf32>
    %4 = tpu.concatenate %2, %3 in 2 : vector<10x16x128xf32>, vector<10x16x128xf32> -> vector<10x16x256xf32>
    %5 = vector.shape_cast %4 : vector<10x16x256xf32> to vector<160x256xf32>
    %c0_4 = arith.constant 0 : index
    %c0_5 = arith.constant 0 : index
    %6 = vector.load %arg3[%c0_4, %c0_5] : memref<1152x128xf32, #tpu.memory_space<vmem>>, vector<256x128xf32>
    %cst = arith.constant dense<0.000000e+00> : vector<160x128xf32>
    %7 = tpu.matmul %5, %6, %cst {dimension_numbers = #tpu.dot_dimension_numbers<[1], [0], [0], [1], [0, 0, 1, 1], [], []>} : vector<160x256xf32>, vector<256x128xf32>, vector<160x128xf32> -> vector<160x128xf32>
    %8 = vector.extract_strided_slice %1 {offsets = [0, 2, 0], sizes = [10, 16, 128], strides = [1, 1, 1]} : vector<12x18x128xf32> to vector<10x16x128xf32>
    %9 = vector.extract_strided_slice %1 {offsets = [1, 0, 0], sizes = [10, 16, 128], strides = [1, 1, 1]} : vector<12x18x128xf32> to vector<10x16x128xf32>
    %10 = tpu.concatenate %8, %9 in 2 : vector<10x16x128xf32>, vector<10x16x128xf32> -> vector<10x16x256xf32>
    %11 = vector.shape_cast %10 : vector<10x16x256xf32> to vector<160x256xf32>
    %c256 = arith.constant 256 : index
    %c0_6 = arith.constant 0 : index
    %12 = vector.load %arg3[%c256, %c0_6] : memref<1152x128xf32, #tpu.memory_space<vmem>>, vector<256x128xf32>
    %cst_7 = arith.constant dense<0.000000e+00> : vector<160x128xf32>
    %13 = tpu.matmul %11, %12, %cst_7 {dimension_numbers = #tpu.dot_dimension_numbers<[1], [0], [0], [1], [0, 0, 1, 1], [], []>} : vector<160x256xf32>, vector<256x128xf32>, vector<160x128xf32> -> vector<160x128xf32>
    %14 = arith.addf %7, %13 : vector<160x128xf32>
    %15 = vector.extract_strided_slice %1 {offsets = [1, 1, 0], sizes = [10, 16, 128], strides = [1, 1, 1]} : vector<12x18x128xf32> to vector<10x16x128xf32>
    %16 = vector.extract_strided_slice %1 {offsets = [1, 2, 0], sizes = [10, 16, 128], strides = [1, 1, 1]} : vector<12x18x128xf32> to vector<10x16x128xf32>
    %17 = tpu.concatenate %15, %16 in 2 : vector<10x16x128xf32>, vector<10x16x128xf32> -> vector<10x16x256xf32>
    %18 = vector.shape_cast %17 : vector<10x16x256xf32> to vector<160x256xf32>
    %c512 = arith.constant 512 : index
    %c0_8 = arith.constant 0 : index
    %19 = vector.load %arg3[%c512, %c0_8] : memref<1152x128xf32, #tpu.memory_space<vmem>>, vector<256x128xf32>
    %cst_9 = arith.constant dense<0.000000e+00> : vector<160x128xf32>
    %20 = tpu.matmul %18, %19, %cst_9 {dimension_numbers = #tpu.dot_dimension_numbers<[1], [0], [0], [1], [0, 0, 1, 1], [], []>} : vector<160x256xf32>, vector<256x128xf32>, vector<160x128xf32> -> vector<160x128xf32>
    %21 = arith.addf %14, %20 : vector<160x128xf32>
    %22 = vector.extract_strided_slice %1 {offsets = [2, 0, 0], sizes = [10, 16, 128], strides = [1, 1, 1]} : vector<12x18x128xf32> to vector<10x16x128xf32>
    %23 = vector.extract_strided_slice %1 {offsets = [2, 1, 0], sizes = [10, 16, 128], strides = [1, 1, 1]} : vector<12x18x128xf32> to vector<10x16x128xf32>
    %24 = tpu.concatenate %22, %23 in 2 : vector<10x16x128xf32>, vector<10x16x128xf32> -> vector<10x16x256xf32>
    %25 = vector.shape_cast %24 : vector<10x16x256xf32> to vector<160x256xf32>
    %c768 = arith.constant 768 : index
    %c0_10 = arith.constant 0 : index
    %26 = vector.load %arg3[%c768, %c0_10] : memref<1152x128xf32, #tpu.memory_space<vmem>>, vector<256x128xf32>
    %cst_11 = arith.constant dense<0.000000e+00> : vector<160x128xf32>
    %27 = tpu.matmul %25, %26, %cst_11 {dimension_numbers = #tpu.dot_dimension_numbers<[1], [0], [0], [1], [0, 0, 1, 1], [], []>} : vector<160x256xf32>, vector<256x128xf32>, vector<160x128xf32> -> vector<160x128xf32>
    %28 = arith.addf %21, %27 : vector<160x128xf32>
    %29 = vector.extract_strided_slice %1 {offsets = [2, 2, 0], sizes = [10, 16, 128], strides = [1, 1, 1]} : vector<12x18x128xf32> to vector<10x16x128xf32>
    %30 = vector.shape_cast %29 : vector<10x16x128xf32> to vector<160x128xf32>
    %c1024 = arith.constant 1024 : index
    %c0_12 = arith.constant 0 : index
    %31 = vector.load %arg3[%c1024, %c0_12] : memref<1152x128xf32, #tpu.memory_space<vmem>>, vector<128x128xf32>
    %cst_13 = arith.constant dense<0.000000e+00> : vector<160x128xf32>
    %32 = tpu.matmul %30, %31, %cst_13 {dimension_numbers = #tpu.dot_dimension_numbers<[1], [0], [0], [1], [0, 0, 1, 1], [], []>} : vector<160x128xf32>, vector<128x128xf32>, vector<160x128xf32> -> vector<160x128xf32>
    %33 = arith.addf %28, %32 : vector<160x128xf32>
    %34 = vector.shape_cast %33 : vector<160x128xf32> to vector<10x16x128xf32>
    %c0_14 = arith.constant 0 : index
    %c0_15 = arith.constant 0 : index
    %c0_16 = arith.constant 0 : index
    %c0_17 = arith.constant 0 : index
    %c0_18 = arith.constant 0 : index
    %35 = vector.load %arg4[%c0_14, %c0_15, %c0_16, %c0_17, %c0_18] : memref<1x1x10x16x128xf32, #tpu.memory_space<vmem>>, vector<1x1x10x16x128xf32>
    %36 = vector.shape_cast %35 : vector<1x1x10x16x128xf32> to vector<10x16x128xf32>
    %37 = vector.shape_cast %34 : vector<10x16x128xf32> to vector<1x1x10x16x128xf32>
    tpu.vector_store %arg4[%c0_14, %c0_15, %c0_16, %c0_17, %c0_18], %37 {strides = array<i32>} : memref<1x1x10x16x128xf32, #tpu.memory_space<vmem>>, vector<1x1x10x16x128xf32>,
    %38 = vector.extract_strided_slice %34 {offsets = [1, 0, 0], sizes = [8, 16, 128], strides = [1, 1, 1]} : vector<10x16x128xf32> to vector<8x16x128xf32>
    %39 = vector.shape_cast %38 : vector<8x16x128xf32> to vector<128x128xf32>
    %cst_19 = arith.constant dense<0.000000e+00> : vector<128xf32>
    %40 = vector.multi_reduction <add>, %39, %cst_19 [0] : vector<128x128xf32> to vector<128xf32>
    %41 = vector.shape_cast %40 : vector<128xf32> to vector<1x128xf32>
    %42 = arith.mulf %39, %39 : vector<128x128xf32>
    %cst_20 = arith.constant dense<0.000000e+00> : vector<128xf32>
    %43 = vector.multi_reduction <add>, %42, %cst_20 [0] : vector<128x128xf32> to vector<128xf32>
    %44 = vector.shape_cast %43 : vector<128xf32> to vector<1x128xf32>
    %45 = tpu.concatenate %41, %44 in 0 : vector<1x128xf32>, vector<1x128xf32> -> vector<2x128xf32>
    %c0_21 = arith.constant 0 : index
    %c0_22 = arith.constant 0 : index
    %c0_23 = arith.constant 0 : index
    %c0_24 = arith.constant 0 : index
    %46 = vector.load %arg5[%c0_21, %c0_22, %c0_23, %c0_24] : memref<1x1x2x128xf32, #tpu.memory_space<vmem>>, vector<1x1x2x128xf32>
    %47 = vector.shape_cast %46 : vector<1x1x2x128xf32> to vector<2x128xf32>
    %48 = vector.shape_cast %45 : vector<2x128xf32> to vector<1x1x2x128xf32>
    tpu.vector_store %arg5[%c0_21, %c0_22, %c0_23, %c0_24], %48 {strides = array<i32>} : memref<1x1x2x128xf32, #tpu.memory_space<vmem>>, vector<1x1x2x128xf32>,
    return
  }
  func.func @transform_0(%arg0: i32, %arg1: i32) -> (i32, i32, i32, i32, i32) {
    %c0_i32 = arith.constant 0 : i32
    %c0_i32_0 = arith.constant 0 : i32
    %c0_i32_1 = arith.constant 0 : i32
    %c0_i32_2 = arith.constant 0 : i32
    return %arg0, %arg1, %c0_i32, %c0_i32_0, %c0_i32_1 : i32, i32, i32, i32, i32
  }
  func.func @transform_1(%arg0: i32, %arg1: i32) -> (i32, i32) {
    %c0_i32 = arith.constant 0 : i32
    %c0_i32_0 = arith.constant 0 : i32
    %c0_i32_1 = arith.constant 0 : i32
    return %c0_i32, %c0_i32_0 : i32, i32
  }
  func.func @transform_2(%arg0: i32, %arg1: i32) -> (i32, i32, i32, i32, i32) {
    %c0_i32 = arith.constant 0 : i32
    %c0_i32_0 = arith.constant 0 : i32
    %c0_i32_1 = arith.constant 0 : i32
    %c0_i32_2 = arith.constant 0 : i32
    return %arg0, %arg1, %c0_i32, %c0_i32_0, %c0_i32_1 : i32, i32, i32, i32, i32
  }
  func.func @transform_3(%arg0: i32, %arg1: i32) -> (i32, i32, i32, i32) {
    %c0_i32 = arith.constant 0 : i32
    %c0_i32_0 = arith.constant 0 : i32
    %c0_i32_1 = arith.constant 0 : i32
    return %arg0, %arg1, %c0_i32, %c0_i32_0 : i32, i32, i32, i32
  }
}

module attributes {stable_mosaic.version = 11 : i64} {
  func.func @kernel(%arg0: i32, %arg1: i32, %arg2: memref<1x1x10x16x128xf32, #tpu.memory_space<vmem>>, %arg3: memref<1x128xf32, #tpu.memory_space<vmem>>, %arg4: memref<1x128xf32, #tpu.memory_space<vmem>>, %arg5: memref<1152x128xf32, #tpu.memory_space<vmem>>, %arg6: memref<1x1x8x16x128xf32, #tpu.memory_space<vmem>>, %arg7: memref<1x1x2x128xf32, #tpu.memory_space<vmem>>, %arg8: memref<10x32x128xf32, #tpu.memory_space<vmem>>) attributes {dimension_semantics = [#tpu.dimension_semantics<parallel>, #tpu.dimension_semantics<parallel>], iteration_bounds = array<i64: 2, 2>, scalar_prefetch = 0 : i64, scratch_operands = 1 : i64, tpu.core_type = #tpu.core_type<tc>, window_params = [{transform_indices = @transform_0, window_bounds = array<i64: 1, 1, 10, 16, 128>}, {pipeline_mode = #tpu.pipeline_mode<synchronous>, transform_indices = @transform_1, window_bounds = array<i64: 1, 128>}, {pipeline_mode = #tpu.pipeline_mode<synchronous>, transform_indices = @transform_2, window_bounds = array<i64: 1, 128>}, {pipeline_mode = #tpu.pipeline_mode<synchronous>, transform_indices = @transform_3, window_bounds = array<i64: 1152, 128>}, {transform_indices = @transform_4, window_bounds = array<i64: 1, 1, 8, 16, 128>}, {transform_indices = @transform_5, window_bounds = array<i64: 1, 1, 2, 128>}]} {
    %c0 = arith.constant 0 : index
    %c0_0 = arith.constant 0 : index
    %0 = vector.load %arg3[%c0, %c0_0] : memref<1x128xf32, #tpu.memory_space<vmem>>, vector<1x128xf32>
    %1 = vector.shape_cast %0 : vector<1x128xf32> to vector<1x1x128xf32>
    %c0_1 = arith.constant 0 : index
    %c0_2 = arith.constant 0 : index
    %2 = vector.load %arg4[%c0_1, %c0_2] : memref<1x128xf32, #tpu.memory_space<vmem>>, vector<1x128xf32>
    %3 = vector.shape_cast %2 : vector<1x128xf32> to vector<1x1x128xf32>
    %c0_3 = arith.constant 0 : index
    %c0_4 = arith.constant 0 : index
    %c0_5 = arith.constant 0 : index
    %c0_6 = arith.constant 0 : index
    %c0_7 = arith.constant 0 : index
    %4 = vector.load %arg2[%c0_3, %c0_4, %c0_5, %c0_6, %c0_7] : memref<1x1x10x16x128xf32, #tpu.memory_space<vmem>>, vector<1x1x10x16x128xf32>
    %5 = vector.shape_cast %4 : vector<1x1x10x16x128xf32> to vector<10x16x128xf32>
    %6 = vector.broadcast %1 : vector<1x1x128xf32> to vector<10x16x128xf32>
    %7 = arith.mulf %5, %6 : vector<10x16x128xf32>
    %8 = vector.broadcast %3 : vector<1x1x128xf32> to vector<10x16x128xf32>
    %9 = arith.addf %7, %8 : vector<10x16x128xf32>
    %cst = arith.constant 0.000000e+00 : f32
    %10 = vector.broadcast %cst : f32 to vector<10x16x128xf32>
    %11 = arith.maximumf %9, %10 : vector<10x16x128xf32>
    %cst_8 = arith.constant 0.000000e+00 : f32
    %12 = vector.broadcast %cst_8 : f32 to vector<10x1x128xf32>
    %c0_9 = arith.constant 0 : index
    %c7 = arith.constant 7 : index
    %c0_10 = arith.constant 0 : index
    %13 = vector.load %arg8[%c0_9, %c7, %c0_10] : memref<10x32x128xf32, #tpu.memory_space<vmem>>, vector<10x1x128xf32>
    tpu.vector_store %arg8[%c0_9, %c7, %c0_10], %12 {strides = array<i32>} : memref<10x32x128xf32, #tpu.memory_space<vmem>>, vector<10x1x128xf32>,
    %c0_11 = arith.constant 0 : index
    %c24 = arith.constant 24 : index
    %c0_12 = arith.constant 0 : index
    %14 = vector.load %arg8[%c0_11, %c24, %c0_12] : memref<10x32x128xf32, #tpu.memory_space<vmem>>, vector<10x1x128xf32>
    tpu.vector_store %arg8[%c0_11, %c24, %c0_12], %12 {strides = array<i32>} : memref<10x32x128xf32, #tpu.memory_space<vmem>>, vector<10x1x128xf32>,
    %c0_i32 = arith.constant 0 : i32
    %15 = arith.cmpi sgt, %arg1, %c0_i32 : i32
    %16 = arith.extui %15 : i1 to i32
    %17 = arith.sitofp %16 : i32 to f32
    %c1_i32 = arith.constant 1 : i32
    %18 = arith.cmpi slt, %arg1, %c1_i32 : i32
    %19 = arith.extui %18 : i1 to i32
    %20 = arith.sitofp %19 : i32 to f32
    %21 = vector.extract_strided_slice %11 {offsets = [0, 0, 0], sizes = [1, 16, 128], strides = [1, 1, 1]} : vector<10x16x128xf32> to vector<1x16x128xf32>
    %22 = vector.broadcast %17 : f32 to vector<1x16x128xf32>
    %23 = arith.mulf %21, %22 : vector<1x16x128xf32>
    %c0_13 = arith.constant 0 : index
    %c8 = arith.constant 8 : index
    %c0_14 = arith.constant 0 : index
    %24 = vector.load %arg8[%c0_13, %c8, %c0_14] : memref<10x32x128xf32, #tpu.memory_space<vmem>>, vector<1x16x128xf32>
    tpu.vector_store %arg8[%c0_13, %c8, %c0_14], %23 {strides = array<i32>} : memref<10x32x128xf32, #tpu.memory_space<vmem>>, vector<1x16x128xf32>,
    %25 = vector.extract_strided_slice %11 {offsets = [9, 0, 0], sizes = [1, 16, 128], strides = [1, 1, 1]} : vector<10x16x128xf32> to vector<1x16x128xf32>
    %26 = vector.broadcast %20 : f32 to vector<1x16x128xf32>
    %27 = arith.mulf %25, %26 : vector<1x16x128xf32>
    %c9 = arith.constant 9 : index
    %c8_15 = arith.constant 8 : index
    %c0_16 = arith.constant 0 : index
    %28 = vector.load %arg8[%c9, %c8_15, %c0_16] : memref<10x32x128xf32, #tpu.memory_space<vmem>>, vector<1x16x128xf32>
    tpu.vector_store %arg8[%c9, %c8_15, %c0_16], %27 {strides = array<i32>} : memref<10x32x128xf32, #tpu.memory_space<vmem>>, vector<1x16x128xf32>,
    %29 = vector.extract_strided_slice %11 {offsets = [1, 0, 0], sizes = [8, 16, 128], strides = [1, 1, 1]} : vector<10x16x128xf32> to vector<8x16x128xf32>
    %c1 = arith.constant 1 : index
    %c8_17 = arith.constant 8 : index
    %c0_18 = arith.constant 0 : index
    %30 = vector.load %arg8[%c1, %c8_17, %c0_18] : memref<10x32x128xf32, #tpu.memory_space<vmem>>, vector<8x16x128xf32>
    tpu.vector_store %arg8[%c1, %c8_17, %c0_18], %29 {strides = array<i32>} : memref<10x32x128xf32, #tpu.memory_space<vmem>>, vector<8x16x128xf32>,
    %c0_19 = arith.constant 0 : index
    %c7_20 = arith.constant 7 : index
    %c0_21 = arith.constant 0 : index
    %31 = vector.load %arg8[%c0_19, %c7_20, %c0_21] : memref<10x32x128xf32, #tpu.memory_space<vmem>>, vector<8x16x128xf32>
    %c0_22 = arith.constant 0 : index
    %c8_23 = arith.constant 8 : index
    %c0_24 = arith.constant 0 : index
    %32 = vector.load %arg8[%c0_22, %c8_23, %c0_24] : memref<10x32x128xf32, #tpu.memory_space<vmem>>, vector<8x16x128xf32>
    %33 = tpu.concatenate %31, %32 in 2 : vector<8x16x128xf32>, vector<8x16x128xf32> -> vector<8x16x256xf32>
    %34 = vector.shape_cast %33 : vector<8x16x256xf32> to vector<128x256xf32>
    %c0_25 = arith.constant 0 : index
    %c0_26 = arith.constant 0 : index
    %35 = vector.load %arg5[%c0_25, %c0_26] : memref<1152x128xf32, #tpu.memory_space<vmem>>, vector<256x128xf32>
    %cst_27 = arith.constant dense<0.000000e+00> : vector<128x128xf32>
    %36 = tpu.matmul %34, %35, %cst_27 {dimension_numbers = #tpu.dot_dimension_numbers<[1], [0], [0], [1], [0, 0, 1, 1], [], []>} : vector<128x256xf32>, vector<256x128xf32>, vector<128x128xf32> -> vector<128x128xf32>
    %c0_28 = arith.constant 0 : index
    %c9_29 = arith.constant 9 : index
    %c0_30 = arith.constant 0 : index
    %37 = vector.load %arg8[%c0_28, %c9_29, %c0_30] : memref<10x32x128xf32, #tpu.memory_space<vmem>>, vector<8x16x128xf32>
    %c1_31 = arith.constant 1 : index
    %c7_32 = arith.constant 7 : index
    %c0_33 = arith.constant 0 : index
    %38 = vector.load %arg8[%c1_31, %c7_32, %c0_33] : memref<10x32x128xf32, #tpu.memory_space<vmem>>, vector<8x16x128xf32>
    %39 = tpu.concatenate %37, %38 in 2 : vector<8x16x128xf32>, vector<8x16x128xf32> -> vector<8x16x256xf32>
    %40 = vector.shape_cast %39 : vector<8x16x256xf32> to vector<128x256xf32>
    %c256 = arith.constant 256 : index
    %c0_34 = arith.constant 0 : index
    %41 = vector.load %arg5[%c256, %c0_34] : memref<1152x128xf32, #tpu.memory_space<vmem>>, vector<256x128xf32>
    %cst_35 = arith.constant dense<0.000000e+00> : vector<128x128xf32>
    %42 = tpu.matmul %40, %41, %cst_35 {dimension_numbers = #tpu.dot_dimension_numbers<[1], [0], [0], [1], [0, 0, 1, 1], [], []>} : vector<128x256xf32>, vector<256x128xf32>, vector<128x128xf32> -> vector<128x128xf32>
    %43 = arith.addf %36, %42 : vector<128x128xf32>
    %c1_36 = arith.constant 1 : index
    %c8_37 = arith.constant 8 : index
    %c0_38 = arith.constant 0 : index
    %44 = vector.load %arg8[%c1_36, %c8_37, %c0_38] : memref<10x32x128xf32, #tpu.memory_space<vmem>>, vector<8x16x128xf32>
    %c1_39 = arith.constant 1 : index
    %c9_40 = arith.constant 9 : index
    %c0_41 = arith.constant 0 : index
    %45 = vector.load %arg8[%c1_39, %c9_40, %c0_41] : memref<10x32x128xf32, #tpu.memory_space<vmem>>, vector<8x16x128xf32>
    %46 = tpu.concatenate %44, %45 in 2 : vector<8x16x128xf32>, vector<8x16x128xf32> -> vector<8x16x256xf32>
    %47 = vector.shape_cast %46 : vector<8x16x256xf32> to vector<128x256xf32>
    %c512 = arith.constant 512 : index
    %c0_42 = arith.constant 0 : index
    %48 = vector.load %arg5[%c512, %c0_42] : memref<1152x128xf32, #tpu.memory_space<vmem>>, vector<256x128xf32>
    %cst_43 = arith.constant dense<0.000000e+00> : vector<128x128xf32>
    %49 = tpu.matmul %47, %48, %cst_43 {dimension_numbers = #tpu.dot_dimension_numbers<[1], [0], [0], [1], [0, 0, 1, 1], [], []>} : vector<128x256xf32>, vector<256x128xf32>, vector<128x128xf32> -> vector<128x128xf32>
    %50 = arith.addf %43, %49 : vector<128x128xf32>
    %c2 = arith.constant 2 : index
    %c7_44 = arith.constant 7 : index
    %c0_45 = arith.constant 0 : index
    %51 = vector.load %arg8[%c2, %c7_44, %c0_45] : memref<10x32x128xf32, #tpu.memory_space<vmem>>, vector<8x16x128xf32>
    %c2_46 = arith.constant 2 : index
    %c8_47 = arith.constant 8 : index
    %c0_48 = arith.constant 0 : index
    %52 = vector.load %arg8[%c2_46, %c8_47, %c0_48] : memref<10x32x128xf32, #tpu.memory_space<vmem>>, vector<8x16x128xf32>
    %53 = tpu.concatenate %51, %52 in 2 : vector<8x16x128xf32>, vector<8x16x128xf32> -> vector<8x16x256xf32>
    %54 = vector.shape_cast %53 : vector<8x16x256xf32> to vector<128x256xf32>
    %c768 = arith.constant 768 : index
    %c0_49 = arith.constant 0 : index
    %55 = vector.load %arg5[%c768, %c0_49] : memref<1152x128xf32, #tpu.memory_space<vmem>>, vector<256x128xf32>
    %cst_50 = arith.constant dense<0.000000e+00> : vector<128x128xf32>
    %56 = tpu.matmul %54, %55, %cst_50 {dimension_numbers = #tpu.dot_dimension_numbers<[1], [0], [0], [1], [0, 0, 1, 1], [], []>} : vector<128x256xf32>, vector<256x128xf32>, vector<128x128xf32> -> vector<128x128xf32>
    %57 = arith.addf %50, %56 : vector<128x128xf32>
    %c2_51 = arith.constant 2 : index
    %c9_52 = arith.constant 9 : index
    %c0_53 = arith.constant 0 : index
    %58 = vector.load %arg8[%c2_51, %c9_52, %c0_53] : memref<10x32x128xf32, #tpu.memory_space<vmem>>, vector<8x16x128xf32>
    %59 = vector.shape_cast %58 : vector<8x16x128xf32> to vector<128x128xf32>
    %c1024 = arith.constant 1024 : index
    %c0_54 = arith.constant 0 : index
    %60 = vector.load %arg5[%c1024, %c0_54] : memref<1152x128xf32, #tpu.memory_space<vmem>>, vector<128x128xf32>
    %cst_55 = arith.constant dense<0.000000e+00> : vector<128x128xf32>
    %61 = tpu.matmul %59, %60, %cst_55 {dimension_numbers = #tpu.dot_dimension_numbers<[1], [0], [0], [1], [0, 0, 1, 1], [], []>} : vector<128x128xf32>, vector<128x128xf32>, vector<128x128xf32> -> vector<128x128xf32>
    %62 = arith.addf %57, %61 : vector<128x128xf32>
    %63 = vector.shape_cast %62 : vector<128x128xf32> to vector<8x16x128xf32>
    %c0_56 = arith.constant 0 : index
    %c0_57 = arith.constant 0 : index
    %c0_58 = arith.constant 0 : index
    %c0_59 = arith.constant 0 : index
    %c0_60 = arith.constant 0 : index
    %64 = vector.load %arg6[%c0_56, %c0_57, %c0_58, %c0_59, %c0_60] : memref<1x1x8x16x128xf32, #tpu.memory_space<vmem>>, vector<1x1x8x16x128xf32>
    %65 = vector.shape_cast %64 : vector<1x1x8x16x128xf32> to vector<8x16x128xf32>
    %66 = vector.shape_cast %63 : vector<8x16x128xf32> to vector<1x1x8x16x128xf32>
    tpu.vector_store %arg6[%c0_56, %c0_57, %c0_58, %c0_59, %c0_60], %66 {strides = array<i32>} : memref<1x1x8x16x128xf32, #tpu.memory_space<vmem>>, vector<1x1x8x16x128xf32>,
    %cst_61 = arith.constant dense<0.000000e+00> : vector<128xf32>
    %67 = vector.multi_reduction <add>, %62, %cst_61 [0] : vector<128x128xf32> to vector<128xf32>
    %68 = vector.shape_cast %67 : vector<128xf32> to vector<1x128xf32>
    %69 = arith.mulf %62, %62 : vector<128x128xf32>
    %cst_62 = arith.constant dense<0.000000e+00> : vector<128xf32>
    %70 = vector.multi_reduction <add>, %69, %cst_62 [0] : vector<128x128xf32> to vector<128xf32>
    %71 = vector.shape_cast %70 : vector<128xf32> to vector<1x128xf32>
    %72 = tpu.concatenate %68, %71 in 0 : vector<1x128xf32>, vector<1x128xf32> -> vector<2x128xf32>
    %c0_63 = arith.constant 0 : index
    %c0_64 = arith.constant 0 : index
    %c0_65 = arith.constant 0 : index
    %c0_66 = arith.constant 0 : index
    %73 = vector.load %arg7[%c0_63, %c0_64, %c0_65, %c0_66] : memref<1x1x2x128xf32, #tpu.memory_space<vmem>>, vector<1x1x2x128xf32>
    %74 = vector.shape_cast %73 : vector<1x1x2x128xf32> to vector<2x128xf32>
    %75 = vector.shape_cast %72 : vector<2x128xf32> to vector<1x1x2x128xf32>
    tpu.vector_store %arg7[%c0_63, %c0_64, %c0_65, %c0_66], %75 {strides = array<i32>} : memref<1x1x2x128xf32, #tpu.memory_space<vmem>>, vector<1x1x2x128xf32>,
    return
  }
  func.func @transform_0(%arg0: i32, %arg1: i32) -> (i32, i32, i32, i32, i32) {
    %c0_i32 = arith.constant 0 : i32
    %c0_i32_0 = arith.constant 0 : i32
    %c0_i32_1 = arith.constant 0 : i32
    %c0_i32_2 = arith.constant 0 : i32
    return %arg0, %arg1, %c0_i32, %c0_i32_0, %c0_i32_1 : i32, i32, i32, i32, i32
  }
  func.func @transform_1(%arg0: i32, %arg1: i32) -> (i32, i32) {
    %c0_i32 = arith.constant 0 : i32
    %c0_i32_0 = arith.constant 0 : i32
    %c0_i32_1 = arith.constant 0 : i32
    return %c0_i32, %c0_i32_0 : i32, i32
  }
  func.func @transform_2(%arg0: i32, %arg1: i32) -> (i32, i32) {
    %c0_i32 = arith.constant 0 : i32
    %c0_i32_0 = arith.constant 0 : i32
    %c0_i32_1 = arith.constant 0 : i32
    return %c0_i32, %c0_i32_0 : i32, i32
  }
  func.func @transform_3(%arg0: i32, %arg1: i32) -> (i32, i32) {
    %c0_i32 = arith.constant 0 : i32
    %c0_i32_0 = arith.constant 0 : i32
    %c0_i32_1 = arith.constant 0 : i32
    return %c0_i32, %c0_i32_0 : i32, i32
  }
  func.func @transform_4(%arg0: i32, %arg1: i32) -> (i32, i32, i32, i32, i32) {
    %c0_i32 = arith.constant 0 : i32
    %c0_i32_0 = arith.constant 0 : i32
    %c0_i32_1 = arith.constant 0 : i32
    %c0_i32_2 = arith.constant 0 : i32
    return %arg0, %arg1, %c0_i32, %c0_i32_0, %c0_i32_1 : i32, i32, i32, i32, i32
  }
  func.func @transform_5(%arg0: i32, %arg1: i32) -> (i32, i32, i32, i32) {
    %c0_i32 = arith.constant 0 : i32
    %c0_i32_0 = arith.constant 0 : i32
    %c0_i32_1 = arith.constant 0 : i32
    return %arg0, %arg1, %c0_i32, %c0_i32_0 : i32, i32, i32, i32
  }
}

module attributes {stable_mosaic.version = 11 : i64} {
  func.func @kernel(%arg0: i32, %arg1: i32, %arg2: memref<1x1x8x16x128xf32, #tpu.memory_space<vmem>>, %arg3: memref<1x128xf32, #tpu.memory_space<vmem>>, %arg4: memref<1x128xf32, #tpu.memory_space<vmem>>, %arg5: memref<1x1x8x16x128xf32, #tpu.memory_space<vmem>>, %arg6: memref<128x128xf32, #tpu.memory_space<vmem>>, %arg7: memref<1x1x8x16x128xf32, #tpu.memory_space<vmem>>) attributes {dimension_semantics = [#tpu.dimension_semantics<parallel>, #tpu.dimension_semantics<parallel>], iteration_bounds = array<i64: 2, 2>, scalar_prefetch = 0 : i64, scratch_operands = 0 : i64, tpu.core_type = #tpu.core_type<tc>, window_params = [{transform_indices = @transform_0, window_bounds = array<i64: 1, 1, 8, 16, 128>}, {pipeline_mode = #tpu.pipeline_mode<synchronous>, transform_indices = @transform_1, window_bounds = array<i64: 1, 128>}, {pipeline_mode = #tpu.pipeline_mode<synchronous>, transform_indices = @transform_2, window_bounds = array<i64: 1, 128>}, {transform_indices = @transform_3, window_bounds = array<i64: 1, 1, 8, 16, 128>}, {pipeline_mode = #tpu.pipeline_mode<synchronous>, transform_indices = @transform_4, window_bounds = array<i64: 128, 128>}, {transform_indices = @transform_5, window_bounds = array<i64: 1, 1, 8, 16, 128>}]} {
    %c0 = arith.constant 0 : index
    %c0_0 = arith.constant 0 : index
    %0 = vector.load %arg3[%c0, %c0_0] : memref<1x128xf32, #tpu.memory_space<vmem>>, vector<1x128xf32>
    %1 = vector.shape_cast %0 : vector<1x128xf32> to vector<1x1x128xf32>
    %c0_1 = arith.constant 0 : index
    %c0_2 = arith.constant 0 : index
    %2 = vector.load %arg4[%c0_1, %c0_2] : memref<1x128xf32, #tpu.memory_space<vmem>>, vector<1x128xf32>
    %3 = vector.shape_cast %2 : vector<1x128xf32> to vector<1x1x128xf32>
    %c0_3 = arith.constant 0 : index
    %c0_4 = arith.constant 0 : index
    %c0_5 = arith.constant 0 : index
    %c0_6 = arith.constant 0 : index
    %c0_7 = arith.constant 0 : index
    %4 = vector.load %arg2[%c0_3, %c0_4, %c0_5, %c0_6, %c0_7] : memref<1x1x8x16x128xf32, #tpu.memory_space<vmem>>, vector<1x1x8x16x128xf32>
    %5 = vector.shape_cast %4 : vector<1x1x8x16x128xf32> to vector<8x16x128xf32>
    %6 = vector.broadcast %1 : vector<1x1x128xf32> to vector<8x16x128xf32>
    %7 = arith.mulf %5, %6 : vector<8x16x128xf32>
    %8 = vector.broadcast %3 : vector<1x1x128xf32> to vector<8x16x128xf32>
    %9 = arith.addf %7, %8 : vector<8x16x128xf32>
    %c0_8 = arith.constant 0 : index
    %c0_9 = arith.constant 0 : index
    %c0_10 = arith.constant 0 : index
    %c0_11 = arith.constant 0 : index
    %c0_12 = arith.constant 0 : index
    %10 = vector.load %arg5[%c0_8, %c0_9, %c0_10, %c0_11, %c0_12] : memref<1x1x8x16x128xf32, #tpu.memory_space<vmem>>, vector<1x1x8x16x128xf32>
    %11 = vector.shape_cast %10 : vector<1x1x8x16x128xf32> to vector<8x16x128xf32>
    %12 = vector.shape_cast %11 : vector<8x16x128xf32> to vector<128x128xf32>
    %c0_13 = arith.constant 0 : index
    %c0_14 = arith.constant 0 : index
    %13 = vector.load %arg6[%c0_13, %c0_14] : memref<128x128xf32, #tpu.memory_space<vmem>>, vector<128x128xf32>
    %cst = arith.constant dense<0.000000e+00> : vector<128x128xf32>
    %14 = tpu.matmul %12, %13, %cst {dimension_numbers = #tpu.dot_dimension_numbers<[1], [0], [0], [1], [0, 0, 1, 1], [], []>} : vector<128x128xf32>, vector<128x128xf32>, vector<128x128xf32> -> vector<128x128xf32>
    %15 = vector.shape_cast %14 : vector<128x128xf32> to vector<8x16x128xf32>
    %16 = arith.addf %9, %15 : vector<8x16x128xf32>
    %cst_15 = arith.constant 0.000000e+00 : f32
    %17 = vector.broadcast %cst_15 : f32 to vector<8x16x128xf32>
    %18 = arith.maximumf %16, %17 : vector<8x16x128xf32>
    %c0_16 = arith.constant 0 : index
    %c0_17 = arith.constant 0 : index
    %c0_18 = arith.constant 0 : index
    %c0_19 = arith.constant 0 : index
    %c0_20 = arith.constant 0 : index
    %19 = vector.load %arg7[%c0_16, %c0_17, %c0_18, %c0_19, %c0_20] : memref<1x1x8x16x128xf32, #tpu.memory_space<vmem>>, vector<1x1x8x16x128xf32>
    %20 = vector.shape_cast %19 : vector<1x1x8x16x128xf32> to vector<8x16x128xf32>
    %21 = vector.shape_cast %18 : vector<8x16x128xf32> to vector<1x1x8x16x128xf32>
    tpu.vector_store %arg7[%c0_16, %c0_17, %c0_18, %c0_19, %c0_20], %21 {strides = array<i32>} : memref<1x1x8x16x128xf32, #tpu.memory_space<vmem>>, vector<1x1x8x16x128xf32>,
    return
  }
  func.func @transform_0(%arg0: i32, %arg1: i32) -> (i32, i32, i32, i32, i32) {
    %c0_i32 = arith.constant 0 : i32
    %c0_i32_0 = arith.constant 0 : i32
    %c0_i32_1 = arith.constant 0 : i32
    %c0_i32_2 = arith.constant 0 : i32
    return %arg0, %arg1, %c0_i32, %c0_i32_0, %c0_i32_1 : i32, i32, i32, i32, i32
  }
  func.func @transform_1(%arg0: i32, %arg1: i32) -> (i32, i32) {
    %c0_i32 = arith.constant 0 : i32
    %c0_i32_0 = arith.constant 0 : i32
    %c0_i32_1 = arith.constant 0 : i32
    return %c0_i32, %c0_i32_0 : i32, i32
  }
  func.func @transform_2(%arg0: i32, %arg1: i32) -> (i32, i32) {
    %c0_i32 = arith.constant 0 : i32
    %c0_i32_0 = arith.constant 0 : i32
    %c0_i32_1 = arith.constant 0 : i32
    return %c0_i32, %c0_i32_0 : i32, i32
  }
  func.func @transform_3(%arg0: i32, %arg1: i32) -> (i32, i32, i32, i32, i32) {
    %c0_i32 = arith.constant 0 : i32
    %c0_i32_0 = arith.constant 0 : i32
    %c0_i32_1 = arith.constant 0 : i32
    %c0_i32_2 = arith.constant 0 : i32
    return %arg0, %arg1, %c0_i32, %c0_i32_0, %c0_i32_1 : i32, i32, i32, i32, i32
  }
  func.func @transform_4(%arg0: i32, %arg1: i32) -> (i32, i32) {
    %c0_i32 = arith.constant 0 : i32
    %c0_i32_0 = arith.constant 0 : i32
    %c0_i32_1 = arith.constant 0 : i32
    return %c0_i32, %c0_i32_0 : i32, i32
  }
  func.func @transform_5(%arg0: i32, %arg1: i32) -> (i32, i32, i32, i32, i32) {
    %c0_i32 = arith.constant 0 : i32
    %c0_i32_0 = arith.constant 0 : i32
    %c0_i32_1 = arith.constant 0 : i32
    %c0_i32_2 = arith.constant 0 : i32
    return %arg0, %arg1, %c0_i32, %c0_i32_0, %c0_i32_1 : i32, i32, i32, i32, i32
  }
}

</mosaic_0001>

<llo_original>
// kernel: basic_block_forward.5
$region0: #{basic_block_forward.5}
  #allocation0 [shape = 'u32[]', space=smem, size = 0x4, offset = 0x4, fixed_abs, tag = 'smem constant byte address 0x4 - core index']
  #allocation1 [shape = 'u32[72,128]{1,0:T(1,128)}', space=vmem, size = 0x9000, scoped, tag = 'internal scratch']
  %s0 = inlined_call_operand.vmem [shape: f32[2,2,8,16,128], index: 0, kind: input, shape index: {}, may-alias: {0,5}]
  %s1 = inlined_call_operand.vmem [shape: f32[1,128], index: 1, kind: input, shape index: {}]
  %s2 = inlined_call_operand.vmem [shape: f32[1,128], index: 2, kind: input, shape index: {}]
  %s3 = inlined_call_operand.vmem [shape: f32[2,2,8,16,128], index: 3, kind: input, shape index: {}]
  %s4 = inlined_call_operand.vmem [shape: f32[128,128], index: 4, kind: input, shape index: {}]
  %s5 = inlined_call_operand.vmem [shape: f32[2,2,8,16,128], index: 5, kind: output, shape index: {}, may-alias: {0,5}]
  %s6 = sld [smem:[#allocation0]]
  $region53: #{basic_block_forward.5} parent=0
    _
  %s8 = ssub.s32 1, %s6
  %s9 = scalar_select 0, %s8, %s6
  loop: start=0, step=1, limit=6
  $region2: #{basic_block_forward.5} parent=0 // loop_pre_header
    _
  $region3: #{basic_block_forward.5} parent=0 // loop_header
    %s11 = sphi 0, %s15
    %p12 = scmp.ge.s32.totalorder %s11, 6
    %s18 = sphi 0, %s30
    %s19 = sphi 0, %s26
    %s20 = sphi 0, %s18
    %s21 = sphi 0, %s19
    %s22 = sphi 0, %s20
    %s23 = sphi 0, %s21
    %s35 = sphi 0, %s37
    %s38 = sphi 0, %s35
    %s39 = sphi 0, %s38
    %s55 = sphi 0, %s39
    %s59 = sphi 0, %s59
    %s61 = sphi 0, %s59
    %s62 = sphi 0, %s61
    %s76 = sphi 0, %s62
    %s80 = sphi 0, %s80
    %s82 = sphi 0, %s80
    %s83 = sphi 0, %s82
    %s97 = sphi 0, %s83
    %s105 = sphi 0, %s107
    %s108 = sphi 0, %s105
    %s109 = sphi 0, %s108
    %s125 = sphi 0, %s109
    %s129 = sphi 0, %s129
    %s131 = sphi 0, %s129
    %s132 = sphi 0, %s131
    %s146 = sphi 0, %s132
    %s154 = sphi 0, %s156
    %s157 = sphi 0, %s154
    %s158 = sphi 0, %s157
    %s174 = sphi 0, %s158
  $region4: #{basic_block_forward.5} parent=0 // loop_header_branch
    %14 = sbr.rel (%p12) target = $region8
  $region5: #{basic_block_forward.5} parent=0 // loop_body
    %s16 = ssub.s32 %s11, 1
    %s17 = ssub.s32 %s11, 2
    %s24 = sadd.s32 1, %s19
    %p25 = scmp.ge.s32.totalorder %s24, 2
    %s26 = scalar_select %p25, 0, %s24
    %s27 = sadd.s32 1, %s18
    %s28 = scalar_select %p25, %s27, %s18
    %p29 = scmp.ge.s32.totalorder %s28, 2
    %s30 = scalar_select %p29, 0, %s28
    %s31 = ssub.s32 %s18, %s30
    %s32 = ssub.s32 %s19, %s26
    %s33 = sor.u32 %s31, %s32
    %p34 = scmp.eq.s32.totalorder %s33, 0
    %s36 = sadd.s32 %s35, 1
    %s37 = scalar_select %p34, %s35, %s36
    %p40 = pneg %p34
    %p41 = scmp.eq.s32.totalorder %s11, 3
    %p42 = por %p40, %p41
    %p43 = scmp.ne.s32.totalorder %s35, %s38
    %p44 = scmp.eq.s32.totalorder %s11, 0
    %p45 = por %p43, %p44
    %p46 = scmp.ne.s32.totalorder %s35, %s38
    %p47 = scmp.eq.s32.totalorder %s16, 3
    %p48 = por %p46, %p47
    %p49 = scmp.ne.s32.totalorder %s38, %s39
    %p50 = scmp.eq.s32.totalorder %s16, 0
    %p51 = por %p49, %p50
    %p52 = scmp.ne.s32.totalorder %s38, %s39
    %p53 = scmp.eq.s32.totalorder %s17, 3
    %p54 = por %p52, %p53
    %p56 = scmp.ne.s32.totalorder %s39, %s55
    %p57 = scmp.eq.s32.totalorder %s17, 0
    %p58 = por %p56, %p57
    %s60 = sadd.s32 %s59, 1
    %p63 = scmp.eq.s32.totalorder %s11, 3
    %p64 = scmp.ne.s32.totalorder %s59, %s61
    %p65 = scmp.eq.s32.totalorder %s11, 0
    %p66 = por %p64, %p65
    %p67 = scmp.ne.s32.totalorder %s59, %s61
    %p68 = scmp.eq.s32.totalorder %s16, 3
    %p69 = por %p67, %p68
    %p70 = scmp.ne.s32.totalorder %s61, %s62
    %p71 = scmp.eq.s32.totalorder %s16, 0
    %p72 = por %p70, %p71
    %p73 = scmp.ne.s32.totalorder %s61, %s62
    %p74 = scmp.eq.s32.totalorder %s17, 3
    %p75 = por %p73, %p74
    %p77 = scmp.ne.s32.totalorder %s62, %s76
    %p78 = scmp.eq.s32.totalorder %s17, 0
    %p79 = por %p77, %p78
    %s81 = sadd.s32 %s80, 1
    %p84 = scmp.eq.s32.totalorder %s11, 3
    %p85 = scmp.ne.s32.totalorder %s80, %s82
    %p86 = scmp.eq.s32.totalorder %s11, 0
    %p87 = por %p85, %p86
    %p88 = scmp.ne.s32.totalorder %s80, %s82
    %p89 = scmp.eq.s32.totalorder %s16, 3
    %p90 = por %p88, %p89
    %p91 = scmp.ne.s32.totalorder %s82, %s83
    %p92 = scmp.eq.s32.totalorder %s16, 0
    %p93 = por %p91, %p92
    %p94 = scmp.ne.s32.totalorder %s82, %s83
    %p95 = scmp.eq.s32.totalorder %s17, 3
    %p96 = por %p94, %p95
    %p98 = scmp.ne.s32.totalorder %s83, %s97
    %p99 = scmp.eq.s32.totalorder %s17, 0
    %p100 = por %p98, %p99
    %s101 = ssub.s32 %s18, %s30
    %s102 = ssub.s32 %s19, %s26
    %s103 = sor.u32 %s101, %s102
    %p104 = scmp.eq.s32.totalorder %s103, 0
    %s106 = sadd.s32 %s105, 1
    %s107 = scalar_select %p104, %s105, %s106
    %p110 = pneg %p104
    %p111 = scmp.eq.s32.totalorder %s11, 3
    %p112 = por %p110, %p111
    %p113 = scmp.ne.s32.totalorder %s105, %s108
    %p114 = scmp.eq.s32.totalorder %s11, 0
    %p115 = por %p113, %p114
    %p116 = scmp.ne.s32.totalorder %s105, %s108
    %p117 = scmp.eq.s32.totalorder %s16, 3
    %p118 = por %p116, %p117
    %p119 = scmp.ne.s32.totalorder %s108, %s109
    %p120 = scmp.eq.s32.totalorder %s16, 0
    %p121 = por %p119, %p120
    %p122 = scmp.ne.s32.totalorder %s108, %s109
    %p123 = scmp.eq.s32.totalorder %s17, 3
    %p124 = por %p122, %p123
    %p126 = scmp.ne.s32.totalorder %s109, %s125
    %p127 = scmp.eq.s32.totalorder %s17, 0
    %p128 = por %p126, %p127
    %s130 = sadd.s32 %s129, 1
    %p133 = scmp.eq.s32.totalorder %s11, 3
    %p134 = scmp.ne.s32.totalorder %s129, %s131
    %p135 = scmp.eq.s32.totalorder %s11, 0
    %p136 = por %p134, %p135
    %p137 = scmp.ne.s32.totalorder %s129, %s131
    %p138 = scmp.eq.s32.totalorder %s16, 3
    %p139 = por %p137, %p138
    %p140 = scmp.ne.s32.totalorder %s131, %s132
    %p141 = scmp.eq.s32.totalorder %s16, 0
    %p142 = por %p140, %p141
    %p143 = scmp.ne.s32.totalorder %s131, %s132
    %p144 = scmp.eq.s32.totalorder %s17, 3
    %p145 = por %p143, %p144
    %p147 = scmp.ne.s32.totalorder %s132, %s146
    %p148 = scmp.eq.s32.totalorder %s17, 0
    %p149 = por %p147, %p148
    %s150 = ssub.s32 %s18, %s30
    %s151 = ssub.s32 %s19, %s26
    %s152 = sor.u32 %s150, %s151
    %p153 = scmp.eq.s32.totalorder %s152, 0
    %s155 = sadd.s32 %s154, 1
    %s156 = scalar_select %p153, %s154, %s155
    %p159 = pneg %p153
    %p160 = scmp.eq.s32.totalorder %s11, 3
    %p161 = por %p159, %p160
    %p162 = scmp.ne.s32.totalorder %s154, %s157
    %p163 = scmp.eq.s32.totalorder %s11, 0
    %p164 = por %p162, %p163
    %p165 = scmp.ne.s32.totalorder %s154, %s157
    %p166 = scmp.eq.s32.totalorder %s16, 3
    %p167 = por %p165, %p166
    %p168 = scmp.ne.s32.totalorder %s157, %s158
    %p169 = scmp.eq.s32.totalorder %s16, 0
    %p170 = por %p168, %p169
    %p171 = scmp.ne.s32.totalorder %s157, %s158
    %p172 = scmp.eq.s32.totalorder %s17, 3
    %p173 = por %p171, %p172
    %p175 = scmp.ne.s32.totalorder %s158, %s174
    %p176 = scmp.eq.s32.totalorder %s17, 0
    %p177 = por %p175, %p176
    %p178 = scmp.le.s32.totalorder 1, %s11
    %p179 = scmp.lt.s32.totalorder %s11, 5
    %p180 = pnand %p178, %p179
    %p181 = pneg %p180
    // Predicated region
    $region9: #{basic_block_forward.5} parent=5 // pred_check
      _
    $region10: #{basic_block_forward.5} parent=5 // pred_check_branch
      %183 = sbr.rel (%p180) target = $region12
    $region11: #{basic_block_forward.5} parent=5 // pred_region
      %s184 = ssub.s32 %s11, 1
      // Predicated region
      $region13: #{basic_block_forward.5} parent=11 // pred_check
        %p185 = pneg %p72
      $region14: #{basic_block_forward.5} parent=11 // pred_check_branch
        %187 = sbr.rel (%p185) target = $region16
      $region15: #{basic_block_forward.5} parent=11 // pred_region
        _
      $region16: #{basic_block_forward.5} parent=11 // pred_fallthru
        _
      // Predicated region
      $region17: #{basic_block_forward.5} parent=11 // pred_check
        %p188 = pneg %p93
      $region18: #{basic_block_forward.5} parent=11 // pred_check_branch
        %190 = sbr.rel (%p188) target = $region20
      $region19: #{basic_block_forward.5} parent=11 // pred_region
        _
      $region20: #{basic_block_forward.5} parent=11 // pred_fallthru
        _
      // Predicated region
      $region21: #{basic_block_forward.5} parent=11 // pred_check
        %p191 = pneg %p142
      $region22: #{basic_block_forward.5} parent=11 // pred_check_branch
        %193 = sbr.rel (%p191) target = $region24
      $region23: #{basic_block_forward.5} parent=11 // pred_region
        _
      $region24: #{basic_block_forward.5} parent=11 // pred_fallthru
        _
    $region12: #{basic_block_forward.5} parent=5 // pred_fallthru
      _
    %p194 = scmp.lt.s32.totalorder %s11, 4
    // Predicated region
    $region25: #{basic_block_forward.5} parent=5 // pred_check
      %p195 = pneg %p194
    $region26: #{basic_block_forward.5} parent=5 // pred_check_branch
      %197 = sbr.rel (%p195) target = $region28
    $region27: #{basic_block_forward.5} parent=5 // pred_region
      // Predicated region
      $region29: #{basic_block_forward.5} parent=27 // pred_check
        %p198 = pneg %p45
      $region30: #{basic_block_forward.5} parent=27 // pred_check_branch
        %200 = sbr.rel (%p198) target = $region32
      $region31: #{basic_block_forward.5} parent=27 // pred_region
        %p201 = scmp.lt.s32.totalorder %s18, 1
        %s202 = scalar_select %p201, %s18, 1
        %p203 = scmp.lt.s32.totalorder %s19, 1
        %s204 = scalar_select %p203, %s19, 1
        %s205 = smul.addr %s204, 16
        %s206 = smul.addr %s202, 32
        %s207 = sadd.s32 %s205, %s206
        %s208 = smul.addr %s207, 8
        %s209 = scalar_lea.vmem %s0, %s208
      $region32: #{basic_block_forward.5} parent=27 // pred_fallthru
        _
      // Predicated region
      $region33: #{basic_block_forward.5} parent=27 // pred_check
        %p210 = pneg %p115
      $region34: #{basic_block_forward.5} parent=27 // pred_check_branch
        %212 = sbr.rel (%p210) target = $region36
      $region35: #{basic_block_forward.5} parent=27 // pred_region
        %p213 = scmp.lt.s32.totalorder %s18, 1
        %s214 = scalar_select %p213, %s18, 1
        %p215 = scmp.lt.s32.totalorder %s19, 1
        %s216 = scalar_select %p215, %s19, 1
        %s217 = smul.addr %s216, 16
        %s218 = smul.addr %s214, 32
        %s219 = sadd.s32 %s217, %s218
        %s220 = smul.addr %s219, 8
        %s221 = scalar_lea.vmem %s3, %s220
      $region36: #{basic_block_forward.5} parent=27 // pred_fallthru
        _
    $region28: #{basic_block_forward.5} parent=5 // pred_fallthru
      _
    %p222 = scmp.le.s32.totalorder 1, %s11
    %p223 = scmp.lt.s32.totalorder %s11, 5
    %p224 = pnand %p222, %p223
    %p225 = pneg %p224
    // Predicated region
    $region37: #{basic_block_forward.5} parent=5 // pred_check
      _
    $region38: #{basic_block_forward.5} parent=5 // pred_check_branch
      %227 = sbr.rel (%p224) target = $region40
    $region39: #{basic_block_forward.5} parent=5 // pred_region
      %s228 = ssub.s32 %s11, 1
      %p229 = scmp.lt.s32.totalorder %s20, 1
      %s230 = scalar_select %p229, %s20, 1
      %p231 = scmp.lt.s32.totalorder %s21, 1
      %s232 = scalar_select %p231, %s21, 1
      %s233 = smul.addr %s232, 16
      %s234 = smul.addr %s230, 32
      %s235 = sadd.s32 %s233, %s234
      %s236 = smul.addr %s235, 8
      %s237 = scalar_lea.vmem %s0, %s236
      %p238 = pneg %p51
      %p239 = pneg %p48
      %p240 = pneg %p72
      %p241 = pneg %p69
      %p242 = pneg %p93
      %p243 = pneg %p90
      %p244 = scmp.lt.s32.totalorder %s20, 1
      %s245 = scalar_select %p244, %s20, 1
      %p246 = scmp.lt.s32.totalorder %s21, 1
      %s247 = scalar_select %p246, %s21, 1
      %s248 = smul.addr %s247, 16
      %s249 = smul.addr %s245, 32
      %s250 = sadd.s32 %s248, %s249
      %s251 = smul.addr %s250, 8
      %s252 = scalar_lea.vmem %s3, %s251
      %p253 = pneg %p121
      %p254 = pneg %p118
      %p255 = pneg %p142
      %p256 = pneg %p139
      %p257 = pneg %p170
      %p258 = pneg %p167
      %p259 = scmp.lt.s32.totalorder %s20, 1
      %s260 = scalar_select %p259, %s20, 1
      %p261 = scmp.lt.s32.totalorder %s21, 1
      %s262 = scalar_select %p261, %s21, 1
      %s263 = smul.addr %s262, 16
      %s264 = smul.addr %s260, 32
      %s265 = sadd.s32 %s263, %s264
      %s266 = smul.addr %s265, 8
      %s267 = scalar_lea.vmem %s5, %s266
      %p268 = scmp.lt.s32.totalorder %s20, 1
      %s269 = scalar_select %p268, %s20, 1
      %p270 = scmp.lt.s32.totalorder %s21, 1
      %s271 = scalar_select %p270, %s21, 1
      %s272 = smul.addr %s271, 16
      %s273 = smul.addr %s269, 32
      %s274 = sadd.s32 %s272, %s273
      %s275 = smul.addr %s274, 8
      %s276 = scalar_lea.vmem %s0, %s275
      %p277 = scmp.lt.s32.totalorder %s20, 1
      %s278 = scalar_select %p277, %s20, 1
      %p279 = scmp.lt.s32.totalorder %s21, 1
      %s280 = scalar_select %p279, %s21, 1
      %s281 = smul.addr %s280, 16
      %s282 = smul.addr %s278, 32
      %s283 = sadd.s32 %s281, %s282
      %s284 = smul.addr %s283, 8
      %s285 = scalar_lea.vmem %s3, %s284
      %p286 = scmp.lt.s32.totalorder %s20, 1
      %s287 = scalar_select %p286, %s20, 1
      %p288 = scmp.lt.s32.totalorder %s21, 1
      %s289 = scalar_select %p288, %s21, 1
      %s290 = smul.addr %s289, 16
      %s291 = smul.addr %s287, 32
      %s292 = sadd.s32 %s290, %s291
      %s293 = smul.addr %s292, 8
      %s294 = scalar_lea.vmem %s5, %s293
      %v295 = vld [vmem:[%s1] sm:$0x1]
      %v296 = vld [vmem:[%s2] sm:$0x1]
      %v297 = vld [vmem:[%s276] sm:$0xff]
      %v298 = vld [vmem:[%s276 + $0x8] sm:$0xff]
      %v299 = vld [vmem:[%s276 + $0x10] sm:$0xff]
      %v300 = vld [vmem:[%s276 + $0x18] sm:$0xff]
      %v301 = vld [vmem:[%s276 + $0x20] sm:$0xff]
      %v302 = vld [vmem:[%s276 + $0x28] sm:$0xff]
      %v303 = vld [vmem:[%s276 + $0x30] sm:$0xff]
      %v304 = vld [vmem:[%s276 + $0x38] sm:$0xff]
      %v305 = vld [vmem:[%s276 + $0x40] sm:$0xff]
      %v306 = vld [vmem:[%s276 + $0x48] sm:$0xff]
      %v307 = vld [vmem:[%s276 + $0x50] sm:$0xff]
      %v308 = vld [vmem:[%s276 + $0x58] sm:$0xff]
      %v309 = vld [vmem:[%s276 + $0x60] sm:$0xff]
      %v310 = vld [vmem:[%s276 + $0x68] sm:$0xff]
      %v311 = vld [vmem:[%s276 + $0x70] sm:$0xff]
      %v312 = vld [vmem:[%s276 + $0x78] sm:$0xff]
      %v314 = vperm.slane %v295, 0
      %v316 = vmul.f32 %v297, %v314
      %v317 = vmul.f32 %v298, %v314
      %v318 = vmul.f32 %v299, %v314
      %v319 = vmul.f32 %v300, %v314
      %v320 = vmul.f32 %v301, %v314
      %v321 = vmul.f32 %v302, %v314
      %v322 = vmul.f32 %v303, %v314
      %v323 = vmul.f32 %v304, %v314
      %v324 = vmul.f32 %v305, %v314
      %v325 = vmul.f32 %v306, %v314
      %v326 = vmul.f32 %v307, %v314
      %v327 = vmul.f32 %v308, %v314
      %v328 = vmul.f32 %v309, %v314
      %v329 = vmul.f32 %v310, %v314
      %v330 = vmul.f32 %v311, %v314
      %v331 = vmul.f32 %v312, %v314
      %v333 = vperm.slane %v296, 0
      %v335 = vadd.f32 %v316, %v333
      %v336 = vadd.f32 %v317, %v333
      %v337 = vadd.f32 %v318, %v333
      %v338 = vadd.f32 %v319, %v333
      %v339 = vadd.f32 %v320, %v333
      %v340 = vadd.f32 %v321, %v333
      %v341 = vadd.f32 %v322, %v333
      %v342 = vadd.f32 %v323, %v333
      %v343 = vadd.f32 %v324, %v333
      %v344 = vadd.f32 %v325, %v333
      %v345 = vadd.f32 %v326, %v333
      %v346 = vadd.f32 %v327, %v333
      %v347 = vadd.f32 %v328, %v333
      %v348 = vadd.f32 %v329, %v333
      %v349 = vadd.f32 %v330, %v333
      %v350 = vadd.f32 %v331, %v333
      %v351 = vld [vmem:[%s285] sm:$0xff]
      %v352 = vld [vmem:[%s285 + $0x8] sm:$0xff]
      %v353 = vld [vmem:[%s285 + $0x10] sm:$0xff]
      %v354 = vld [vmem:[%s285 + $0x18] sm:$0xff]
      %v355 = vld [vmem:[%s285 + $0x20] sm:$0xff]
      %v356 = vld [vmem:[%s285 + $0x28] sm:$0xff]
      %v357 = vld [vmem:[%s285 + $0x30] sm:$0xff]
      %v358 = vld [vmem:[%s285 + $0x38] sm:$0xff]
      %v359 = vld [vmem:[%s285 + $0x40] sm:$0xff]
      %v360 = vld [vmem:[%s285 + $0x48] sm:$0xff]
      %v361 = vld [vmem:[%s285 + $0x50] sm:$0xff]
      %v362 = vld [vmem:[%s285 + $0x58] sm:$0xff]
      %v363 = vld [vmem:[%s285 + $0x60] sm:$0xff]
      %v364 = vld [vmem:[%s285 + $0x68] sm:$0xff]
      %v365 = vld [vmem:[%s285 + $0x70] sm:$0xff]
      %v366 = vld [vmem:[%s285 + $0x78] sm:$0xff]
      %v367 = vld [vmem:[%s4] sm:$0xff]
      %v368 = vld [vmem:[%s4 + $0x8] sm:$0xff]
      %v369 = vld [vmem:[%s4 + $0x10] sm:$0xff]
      %v370 = vld [vmem:[%s4 + $0x18] sm:$0xff]
      %v371 = vld [vmem:[%s4 + $0x20] sm:$0xff]
      %v372 = vld [vmem:[%s4 + $0x28] sm:$0xff]
      %v373 = vld [vmem:[%s4 + $0x30] sm:$0xff]
      %v374 = vld [vmem:[%s4 + $0x38] sm:$0xff]
      %v375 = vld [vmem:[%s4 + $0x40] sm:$0xff]
      %v376 = vld [vmem:[%s4 + $0x48] sm:$0xff]
      %v377 = vld [vmem:[%s4 + $0x50] sm:$0xff]
      %v378 = vld [vmem:[%s4 + $0x58] sm:$0xff]
      %v379 = vld [vmem:[%s4 + $0x60] sm:$0xff]
      %v380 = vld [vmem:[%s4 + $0x68] sm:$0xff]
      %v381 = vld [vmem:[%s4 + $0x70] sm:$0xff]
      %v382 = vld [vmem:[%s4 + $0x78] sm:$0xff]
      %383 = vmatpush.msra.mxu0 %v382
      %384 = vmatpush.msra.mxu0 %v381
      %385 = vmatpush.msra.mxu0 %v380
      %386 = vmatpush.msra.mxu0 %v379
      %387 = vmatpush.msra.mxu0 %v378
      %388 = vmatpush.msra.mxu0 %v377
      %389 = vmatpush.msra.mxu0 %v376
      %390 = vmatpush.msra.mxu0 %v375
      %391 = vmatpush.msra.mxu0 %v374
      %392 = vmatpush.msra.mxu0 %v373
      %393 = vmatpush.msra.mxu0 %v372
      %394 = vmatpush.msra.mxu0 %v371
      %395 = vmatpush.msra.mxu0 %v370
      %396 = vmatpush.msra.mxu0 %v369
      %397 = vmatpush.msra.mxu0 %v368
      %398 = vmatpush.msra.mxu0 %v367
      %399 = vmatmul.f32.gmra.mxu0 %v351
      %v400 = vpop.f32.mrf.mxu0
      %v401 = vadd.f32 0.0, %v400
      %402 = vmatmul.f32.gmra.mxu0 %v352
      %v403 = vpop.f32.mrf.mxu0
      %v404 = vadd.f32 0.0, %v403
      %405 = vmatmul.f32.gmra.mxu0 %v353
      %v406 = vpop.f32.mrf.mxu0
      %v407 = vadd.f32 0.0, %v406
      %408 = vmatmul.f32.gmra.mxu0 %v354
      %v409 = vpop.f32.mrf.mxu0
      %v410 = vadd.f32 0.0, %v409
      %411 = vmatmul.f32.gmra.mxu0 %v355
      %v412 = vpop.f32.mrf.mxu0
      %v413 = vadd.f32 0.0, %v412
      %414 = vmatmul.f32.gmra.mxu0 %v356
      %v415 = vpop.f32.mrf.mxu0
      %v416 = vadd.f32 0.0, %v415
      %417 = vmatmul.f32.gmra.mxu0 %v357
      %v418 = vpop.f32.mrf.mxu0
      %v419 = vadd.f32 0.0, %v418
      %420 = vmatmul.f32.gmra.mxu0 %v358
      %v421 = vpop.f32.mrf.mxu0
      %v422 = vadd.f32 0.0, %v421
      %423 = vmatmul.f32.gmra.mxu0 %v359
      %v424 = vpop.f32.mrf.mxu0
      %v425 = vadd.f32 0.0, %v424
      %426 = vmatmul.f32.gmra.mxu0 %v360
      %v427 = vpop.f32.mrf.mxu0
      %v428 = vadd.f32 0.0, %v427
      %429 = vmatmul.f32.gmra.mxu0 %v361
      %v430 = vpop.f32.mrf.mxu0
      %v431 = vadd.f32 0.0, %v430
      %432 = vmatmul.f32.gmra.mxu0 %v362
      %v433 = vpop.f32.mrf.mxu0
      %v434 = vadd.f32 0.0, %v433
      %435 = vmatmul.f32.gmra.mxu0 %v363
      %v436 = vpop.f32.mrf.mxu0
      %v437 = vadd.f32 0.0, %v436
      %438 = vmatmul.f32.gmra.mxu0 %v364
      %v439 = vpop.f32.mrf.mxu0
      %v440 = vadd.f32 0.0, %v439
      %441 = vmatmul.f32.gmra.mxu0 %v365
      %v442 = vpop.f32.mrf.mxu0
      %v443 = vadd.f32 0.0, %v442
      %444 = vmatmul.f32.gmra.mxu0 %v366
      %v445 = vpop.f32.mrf.mxu0
      %v446 = vadd.f32 0.0, %v445
      %447 = vdwg.mxu0
      %v448 = vadd.f32 %v335, %v401
      %v449 = vadd.f32 %v336, %v404
      %v450 = vadd.f32 %v337, %v407
      %v451 = vadd.f32 %v338, %v410
      %v452 = vadd.f32 %v339, %v413
      %v453 = vadd.f32 %v340, %v416
      %v454 = vadd.f32 %v341, %v419
      %v455 = vadd.f32 %v342, %v422
      %v456 = vadd.f32 %v343, %v425
      %v457 = vadd.f32 %v344, %v428
      %v458 = vadd.f32 %v345, %v431
      %v459 = vadd.f32 %v346, %v434
      %v460 = vadd.f32 %v347, %v437
      %v461 = vadd.f32 %v348, %v440
      %v462 = vadd.f32 %v349, %v443
      %v463 = vadd.f32 %v350, %v446
      %v464 = vmax.f32 %v448, 0.0
      %v465 = vmax.f32 %v449, 0.0
      %v466 = vmax.f32 %v450, 0.0
      %v467 = vmax.f32 %v451, 0.0
      %v468 = vmax.f32 %v452, 0.0
      %v469 = vmax.f32 %v453, 0.0
      %v470 = vmax.f32 %v454, 0.0
      %v471 = vmax.f32 %v455, 0.0
      %v472 = vmax.f32 %v456, 0.0
      %v473 = vmax.f32 %v457, 0.0
      %v474 = vmax.f32 %v458, 0.0
      %v475 = vmax.f32 %v459, 0.0
      %v476 = vmax.f32 %v460, 0.0
      %v477 = vmax.f32 %v461, 0.0
      %v478 = vmax.f32 %v462, 0.0
      %v479 = vmax.f32 %v463, 0.0
      %480 = vst [vmem:[%s294] sm:$0xff] %v464
      %481 = vst [vmem:[%s294 + $0x8] sm:$0xff] %v465
      %482 = vst [vmem:[%s294 + $0x10] sm:$0xff] %v466
      %483 = vst [vmem:[%s294 + $0x18] sm:$0xff] %v467
      %484 = vst [vmem:[%s294 + $0x20] sm:$0xff] %v468
      %485 = vst [vmem:[%s294 + $0x28] sm:$0xff] %v469
      %486 = vst [vmem:[%s294 + $0x30] sm:$0xff] %v470
      %487 = vst [vmem:[%s294 + $0x38] sm:$0xff] %v471
      %488 = vst [vmem:[%s294 + $0x40] sm:$0xff] %v472
      %489 = vst [vmem:[%s294 + $0x48] sm:$0xff] %v473
      %490 = vst [vmem:[%s294 + $0x50] sm:$0xff] %v474
      %491 = vst [vmem:[%s294 + $0x58] sm:$0xff] %v475
      %492 = vst [vmem:[%s294 + $0x60] sm:$0xff] %v476
      %493 = vst [vmem:[%s294 + $0x68] sm:$0xff] %v477
      %494 = vst [vmem:[%s294 + $0x70] sm:$0xff] %v478
      %495 = vst [vmem:[%s294 + $0x78] sm:$0xff] %v479
      %p496 = scmp.lt.s32.totalorder %s20, 1
      %s497 = scalar_select %p496, %s20, 1
      %p498 = scmp.lt.s32.totalorder %s21, 1
      %s499 = scalar_select %p498, %s21, 1
      %s500 = smul.addr %s499, 16
      %s501 = smul.addr %s497, 32
      %s502 = sadd.s32 %s500, %s501
      %s503 = smul.addr %s502, 8
      %s504 = scalar_lea.vmem %s5, %s503
      // Predicated region
      $region41: #{basic_block_forward.5} parent=39 // pred_check
        %p505 = pneg %p167
      $region42: #{basic_block_forward.5} parent=39 // pred_check_branch
        %507 = sbr.rel (%p505) target = $region44
      $region43: #{basic_block_forward.5} parent=39 // pred_region
        _
      $region44: #{basic_block_forward.5} parent=39 // pred_fallthru
        _
    $region40: #{basic_block_forward.5} parent=5 // pred_fallthru
      _
    %p508 = scmp.le.s32.totalorder 2, %s11
    // Predicated region
    $region45: #{basic_block_forward.5} parent=5 // pred_check
      %p509 = pneg %p508
    $region46: #{basic_block_forward.5} parent=5 // pred_check_branch
      %511 = sbr.rel (%p509) target = $region48
    $region47: #{basic_block_forward.5} parent=5 // pred_region
      %s512 = ssub.s32 %s11, 2
      // Predicated region
      $region49: #{basic_block_forward.5} parent=47 // pred_check
        %p513 = pneg %p173
      $region50: #{basic_block_forward.5} parent=47 // pred_check_branch
        %515 = sbr.rel (%p513) target = $region52
      $region51: #{basic_block_forward.5} parent=47 // pred_region
        %p516 = scmp.lt.s32.totalorder %s22, 1
        %s517 = scalar_select %p516, %s22, 1
        %p518 = scmp.lt.s32.totalorder %s23, 1
        %s519 = scalar_select %p518, %s23, 1
        %s520 = smul.addr %s519, 16
        %s521 = smul.addr %s517, 32
        %s522 = sadd.s32 %s520, %s521
        %s523 = smul.addr %s522, 8
        %s524 = scalar_lea.vmem %s5, %s523
      $region52: #{basic_block_forward.5} parent=47 // pred_fallthru
        _
    $region48: #{basic_block_forward.5} parent=5 // pred_fallthru
      _
  $region6: #{basic_block_forward.5} parent=0 // loop_footer
    %s15 = sadd.s32 1, %s11
  $region7: #{basic_block_forward.5} parent=0 // loop_footer_branch
    %10 = sbr.rel target = $region3
  $region8: #{basic_block_forward.5} parent=0 // loop_exit
    _

// kernel: basic_block_forward.3
$region0: #{basic_block_forward.3}
  #allocation0 [shape = 'u32[]', space=smem, size = 0x4, offset = 0x4, fixed_abs, tag = 'smem constant byte address 0x4 - core index']
  #allocation1 [shape = 'u32[72,128]{1,0:T(1,128)}', space=vmem, size = 0x9000, scoped, tag = 'internal scratch']
  %s0 = inlined_call_operand.vmem [shape: f32[2,2,12,18,128], index: 0, kind: input, shape index: {}]
  %s1 = inlined_call_operand.vmem [shape: f32[1152,128], index: 1, kind: input, shape index: {}]
  %s2 = inlined_call_operand.vmem [shape: f32[2,2,10,16,128], index: 2, kind: output, shape index: {0}]
  %s3 = inlined_call_operand.vmem [shape: f32[2,2,2,128], index: 3, kind: output, shape index: {1}]
  %4 = xla_tuple %s2, %s3
  %s5 = sld [smem:[#allocation0]]
  $region49: #{basic_block_forward.3} parent=0
    _
  %s7 = ssub.s32 1, %s5
  %s8 = scalar_select 0, %s7, %s5
  loop: start=0, step=1, limit=6
  $region2: #{basic_block_forward.3} parent=0 // loop_pre_header
    _
  $region3: #{basic_block_forward.3} parent=0 // loop_header
    %s10 = sphi 0, %s14
    %p11 = scmp.ge.s32.totalorder %s10, 6
    %s17 = sphi 0, %s29
    %s18 = sphi 0, %s25
    %s19 = sphi 0, %s17
    %s20 = sphi 0, %s18
    %s21 = sphi 0, %s19
    %s22 = sphi 0, %s20
    %s34 = sphi 0, %s36
    %s37 = sphi 0, %s34
    %s38 = sphi 0, %s37
    %s54 = sphi 0, %s38
    %s58 = sphi 0, %s58
    %s60 = sphi 0, %s58
    %s61 = sphi 0, %s60
    %s75 = sphi 0, %s61
    %s83 = sphi 0, %s85
    %s86 = sphi 0, %s83
    %s87 = sphi 0, %s86
    %s103 = sphi 0, %s87
    %s111 = sphi 0, %s113
    %s114 = sphi 0, %s111
    %s115 = sphi 0, %s114
    %s131 = sphi 0, %s115
  $region4: #{basic_block_forward.3} parent=0 // loop_header_branch
    %13 = sbr.rel (%p11) target = $region8
  $region5: #{basic_block_forward.3} parent=0 // loop_body
    %s15 = ssub.s32 %s10, 1
    %s16 = ssub.s32 %s10, 2
    %s23 = sadd.s32 1, %s18
    %p24 = scmp.ge.s32.totalorder %s23, 2
    %s25 = scalar_select %p24, 0, %s23
    %s26 = sadd.s32 1, %s17
    %s27 = scalar_select %p24, %s26, %s17
    %p28 = scmp.ge.s32.totalorder %s27, 2
    %s29 = scalar_select %p28, 0, %s27
    %s30 = ssub.s32 %s17, %s29
    %s31 = ssub.s32 %s18, %s25
    %s32 = sor.u32 %s30, %s31
    %p33 = scmp.eq.s32.totalorder %s32, 0
    %s35 = sadd.s32 %s34, 1
    %s36 = scalar_select %p33, %s34, %s35
    %p39 = pneg %p33
    %p40 = scmp.eq.s32.totalorder %s10, 3
    %p41 = por %p39, %p40
    %p42 = scmp.ne.s32.totalorder %s34, %s37
    %p43 = scmp.eq.s32.totalorder %s10, 0
    %p44 = por %p42, %p43
    %p45 = scmp.ne.s32.totalorder %s34, %s37
    %p46 = scmp.eq.s32.totalorder %s15, 3
    %p47 = por %p45, %p46
    %p48 = scmp.ne.s32.totalorder %s37, %s38
    %p49 = scmp.eq.s32.totalorder %s15, 0
    %p50 = por %p48, %p49
    %p51 = scmp.ne.s32.totalorder %s37, %s38
    %p52 = scmp.eq.s32.totalorder %s16, 3
    %p53 = por %p51, %p52
    %p55 = scmp.ne.s32.totalorder %s38, %s54
    %p56 = scmp.eq.s32.totalorder %s16, 0
    %p57 = por %p55, %p56
    %s59 = sadd.s32 %s58, 1
    %p62 = scmp.eq.s32.totalorder %s10, 3
    %p63 = scmp.ne.s32.totalorder %s58, %s60
    %p64 = scmp.eq.s32.totalorder %s10, 0
    %p65 = por %p63, %p64
    %p66 = scmp.ne.s32.totalorder %s58, %s60
    %p67 = scmp.eq.s32.totalorder %s15, 3
    %p68 = por %p66, %p67
    %p69 = scmp.ne.s32.totalorder %s60, %s61
    %p70 = scmp.eq.s32.totalorder %s15, 0
    %p71 = por %p69, %p70
    %p72 = scmp.ne.s32.totalorder %s60, %s61
    %p73 = scmp.eq.s32.totalorder %s16, 3
    %p74 = por %p72, %p73
    %p76 = scmp.ne.s32.totalorder %s61, %s75
    %p77 = scmp.eq.s32.totalorder %s16, 0
    %p78 = por %p76, %p77
    %s79 = ssub.s32 %s17, %s29
    %s80 = ssub.s32 %s18, %s25
    %s81 = sor.u32 %s79, %s80
    %p82 = scmp.eq.s32.totalorder %s81, 0
    %s84 = sadd.s32 %s83, 1
    %s85 = scalar_select %p82, %s83, %s84
    %p88 = pneg %p82
    %p89 = scmp.eq.s32.totalorder %s10, 3
    %p90 = por %p88, %p89
    %p91 = scmp.ne.s32.totalorder %s83, %s86
    %p92 = scmp.eq.s32.totalorder %s10, 0
    %p93 = por %p91, %p92
    %p94 = scmp.ne.s32.totalorder %s83, %s86
    %p95 = scmp.eq.s32.totalorder %s15, 3
    %p96 = por %p94, %p95
    %p97 = scmp.ne.s32.totalorder %s86, %s87
    %p98 = scmp.eq.s32.totalorder %s15, 0
    %p99 = por %p97, %p98
    %p100 = scmp.ne.s32.totalorder %s86, %s87
    %p101 = scmp.eq.s32.totalorder %s16, 3
    %p102 = por %p100, %p101
    %p104 = scmp.ne.s32.totalorder %s87, %s103
    %p105 = scmp.eq.s32.totalorder %s16, 0
    %p106 = por %p104, %p105
    %s107 = ssub.s32 %s17, %s29
    %s108 = ssub.s32 %s18, %s25
    %s109 = sor.u32 %s107, %s108
    %p110 = scmp.eq.s32.totalorder %s109, 0
    %s112 = sadd.s32 %s111, 1
    %s113 = scalar_select %p110, %s111, %s112
    %p116 = pneg %p110
    %p117 = scmp.eq.s32.totalorder %s10, 3
    %p118 = por %p116, %p117
    %p119 = scmp.ne.s32.totalorder %s111, %s114
    %p120 = scmp.eq.s32.totalorder %s10, 0
    %p121 = por %p119, %p120
    %p122 = scmp.ne.s32.totalorder %s111, %s114
    %p123 = scmp.eq.s32.totalorder %s15, 3
    %p124 = por %p122, %p123
    %p125 = scmp.ne.s32.totalorder %s114, %s115
    %p126 = scmp.eq.s32.totalorder %s15, 0
    %p127 = por %p125, %p126
    %p128 = scmp.ne.s32.totalorder %s114, %s115
    %p129 = scmp.eq.s32.totalorder %s16, 3
    %p130 = por %p128, %p129
    %p132 = scmp.ne.s32.totalorder %s115, %s131
    %p133 = scmp.eq.s32.totalorder %s16, 0
    %p134 = por %p132, %p133
    %p135 = scmp.le.s32.totalorder 1, %s10
    %p136 = scmp.lt.s32.totalorder %s10, 5
    %p137 = pnand %p135, %p136
    %p138 = pneg %p137
    // Predicated region
    $region9: #{basic_block_forward.3} parent=5 // pred_check
      _
    $region10: #{basic_block_forward.3} parent=5 // pred_check_branch
      %140 = sbr.rel (%p137) target = $region12
    $region11: #{basic_block_forward.3} parent=5 // pred_region
      %s141 = ssub.s32 %s10, 1
      // Predicated region
      $region13: #{basic_block_forward.3} parent=11 // pred_check
        %p142 = pneg %p71
      $region14: #{basic_block_forward.3} parent=11 // pred_check_branch
        %144 = sbr.rel (%p142) target = $region16
      $region15: #{basic_block_forward.3} parent=11 // pred_region
        _
      $region16: #{basic_block_forward.3} parent=11 // pred_fallthru
        _
    $region12: #{basic_block_forward.3} parent=5 // pred_fallthru
      _
    %p145 = scmp.lt.s32.totalorder %s10, 4
    // Predicated region
    $region17: #{basic_block_forward.3} parent=5 // pred_check
      %p146 = pneg %p145
    $region18: #{basic_block_forward.3} parent=5 // pred_check_branch
      %148 = sbr.rel (%p146) target = $region20
    $region19: #{basic_block_forward.3} parent=5 // pred_region
      // Predicated region
      $region21: #{basic_block_forward.3} parent=19 // pred_check
        %p149 = pneg %p44
      $region22: #{basic_block_forward.3} parent=19 // pred_check_branch
        %151 = sbr.rel (%p149) target = $region24
      $region23: #{basic_block_forward.3} parent=19 // pred_region
        %p152 = scmp.lt.s32.totalorder %s17, 1
        %s153 = scalar_select %p152, %s17, 1
        %p154 = scmp.lt.s32.totalorder %s18, 1
        %s155 = scalar_select %p154, %s18, 1
        %s156 = smul.addr %s155, 36
        %s157 = smul.addr %s153, 72
        %s158 = sadd.s32 %s156, %s157
        %s159 = smul.addr %s158, 8
        %s160 = scalar_lea.vmem %s0, %s159
      $region24: #{basic_block_forward.3} parent=19 // pred_fallthru
        _
    $region20: #{basic_block_forward.3} parent=5 // pred_fallthru
      _
    %p161 = scmp.le.s32.totalorder 1, %s10
    %p162 = scmp.lt.s32.totalorder %s10, 5
    %p163 = pnand %p161, %p162
    %p164 = pneg %p163
    // Predicated region
    $region25: #{basic_block_forward.3} parent=5 // pred_check
      _
    $region26: #{basic_block_forward.3} parent=5 // pred_check_branch
      %166 = sbr.rel (%p163) target = $region28
    $region27: #{basic_block_forward.3} parent=5 // pred_region
      %s167 = ssub.s32 %s10, 1
      %p168 = scmp.lt.s32.totalorder %s19, 1
      %s169 = scalar_select %p168, %s19, 1
      %p170 = scmp.lt.s32.totalorder %s20, 1
      %s171 = scalar_select %p170, %s20, 1
      %s172 = smul.addr %s171, 36
      %s173 = smul.addr %s169, 72
      %s174 = sadd.s32 %s172, %s173
      %s175 = smul.addr %s174, 8
      %s176 = scalar_lea.vmem %s0, %s175
      %p177 = pneg %p50
      %p178 = pneg %p47
      %p179 = pneg %p71
      %p180 = pneg %p68
      %p181 = pneg %p99
      %p182 = pneg %p96
      %p183 = scmp.lt.s32.totalorder %s19, 1
      %s184 = scalar_select %p183, %s19, 1
      %p185 = scmp.lt.s32.totalorder %s20, 1
      %s186 = scalar_select %p185, %s20, 1
      %s187 = smul.addr %s186, 20
      %s188 = smul.addr %s184, 40
      %s189 = sadd.s32 %s187, %s188
      %s190 = smul.addr %s189, 8
      %s191 = scalar_lea.vmem %s2, %s190
      %p192 = pneg %p127
      %p193 = pneg %p124
      %p194 = scmp.lt.s32.totalorder %s19, 1
      %s195 = scalar_select %p194, %s19, 1
      %p196 = scmp.lt.s32.totalorder %s20, 1
      %s197 = scalar_select %p196, %s20, 1
      %s198 = smul.addr %s195, 2
      %s199 = sadd.s32 %s197, %s198
      %s200 = smul.addr %s199, 2
      %s201 = scalar_lea.vmem %s3, %s200
      %p202 = scmp.lt.s32.totalorder %s19, 1
      %s203 = scalar_select %p202, %s19, 1
      %p204 = scmp.lt.s32.totalorder %s20, 1
      %s205 = scalar_select %p204, %s20, 1
      %s206 = smul.addr %s205, 36
      %s207 = smul.addr %s203, 72
      %s208 = sadd.s32 %s206, %s207
      %s209 = smul.addr %s208, 8
      %s210 = scalar_lea.vmem %s0, %s209
      %p211 = scmp.lt.s32.totalorder %s19, 1
      %s212 = scalar_select %p211, %s19, 1
      %p213 = scmp.lt.s32.totalorder %s20, 1
      %s214 = scalar_select %p213, %s20, 1
      %s215 = smul.addr %s214, 20
      %s216 = smul.addr %s212, 40
      %s217 = sadd.s32 %s215, %s216
      %s218 = smul.addr %s217, 8
      %s219 = scalar_lea.vmem %s2, %s218
      %p220 = scmp.lt.s32.totalorder %s19, 1
      %s221 = scalar_select %p220, %s19, 1
      %p222 = scmp.lt.s32.totalorder %s20, 1
      %s223 = scalar_select %p222, %s20, 1
      %s224 = smul.addr %s221, 2
      %s225 = sadd.s32 %s223, %s224
      %s226 = smul.addr %s225, 2
      %s227 = scalar_lea.vmem %s3, %s226
      %v228 = vld [vmem:[%s210] sm:$0xff]
      %v229 = vld [vmem:[%s210 + $0x8] sm:$0xff]
      %v230 = vld [vmem:[%s210 + $0x10] sm:$0x3]
      %v231 = vld [vmem:[%s210 + $0x18] sm:$0xff]
      %v232 = vld [vmem:[%s210 + $0x20] sm:$0xff]
      %v233 = vld [vmem:[%s210 + $0x28] sm:$0x3]
      %v234 = vld [vmem:[%s210 + $0x30] sm:$0xff]
      %v235 = vld [vmem:[%s210 + $0x38] sm:$0xff]
      %v236 = vld [vmem:[%s210 + $0x40] sm:$0x3]
      %v237 = vld [vmem:[%s210 + $0x48] sm:$0xff]
      %v238 = vld [vmem:[%s210 + $0x50] sm:$0xff]
      %v239 = vld [vmem:[%s210 + $0x58] sm:$0x3]
      %v240 = vld [vmem:[%s210 + $0x60] sm:$0xff]
      %v241 = vld [vmem:[%s210 + $0x68] sm:$0xff]
      %v242 = vld [vmem:[%s210 + $0x70] sm:$0x3]
      %v243 = vld [vmem:[%s210 + $0x78] sm:$0xff]
      %v244 = vld [vmem:[%s210 + $0x80] sm:$0xff]
      %v245 = vld [vmem:[%s210 + $0x88] sm:$0x3]
      %v246 = vld [vmem:[%s210 + $0x90] sm:$0xff]
      %v247 = vld [vmem:[%s210 + $0x98] sm:$0xff]
      %v248 = vld [vmem:[%s210 + $0xa0] sm:$0x3]
      %v249 = vld [vmem:[%s210 + $0xa8] sm:$0xff]
      %v250 = vld [vmem:[%s210 + $0xb0] sm:$0xff]
      %v251 = vld [vmem:[%s210 + $0xb8] sm:$0x3]
      %v252 = vld [vmem:[%s210 + $0xc0] sm:$0xff]
      %v253 = vld [vmem:[%s210 + $0xc8] sm:$0xff]
      %v254 = vld [vmem:[%s210 + $0xd0] sm:$0x3]
      %v255 = vld [vmem:[%s210 + $0xd8] sm:$0xff]
      %v256 = vld [vmem:[%s210 + $0xe0] sm:$0xff]
      %v257 = vld [vmem:[%s210 + $0xe8] sm:$0x3]
      %v258 = vld [vmem:[%s210 + $0xf0] sm:$0xff]
      %v259 = vld [vmem:[%s210 + $0xf8] sm:$0xff]
      %v260 = vld [vmem:[%s210 + $0x100] sm:$0x3]
      %v261 = vld [vmem:[%s210 + $0x108] sm:$0xff]
      %v262 = vld [vmem:[%s210 + $0x110] sm:$0xff]
      %v263 = vld [vmem:[%s210 + $0x118] sm:$0x3]
      %vm294 = vcmask 1046528
      %v295 = vrot.slane %v228, 1
      %v296 = vrot.slane %v229, 1
      %v297 = vsel %vm294, %v295, %v296
      %v298 = vrot.slane %v230, 1
      %v299 = vsel %vm294, %v296, %v298
      %v300 = vrot.slane %v231, 1
      %v301 = vrot.slane %v232, 1
      %v302 = vsel %vm294, %v300, %v301
      %v303 = vrot.slane %v233, 1
      %v304 = vsel %vm294, %v301, %v303
      %v305 = vrot.slane %v234, 1
      %v306 = vrot.slane %v235, 1
      %v307 = vsel %vm294, %v305, %v306
      %v308 = vrot.slane %v236, 1
      %v309 = vsel %vm294, %v306, %v308
      %v310 = vrot.slane %v237, 1
      %v311 = vrot.slane %v238, 1
      %v312 = vsel %vm294, %v310, %v311
      %v313 = vrot.slane %v239, 1
      %v314 = vsel %vm294, %v311, %v313
      %v315 = vrot.slane %v240, 1
      %v316 = vrot.slane %v241, 1
      %v317 = vsel %vm294, %v315, %v316
      %v318 = vrot.slane %v242, 1
      %v319 = vsel %vm294, %v316, %v318
      %v320 = vrot.slane %v243, 1
      %v321 = vrot.slane %v244, 1
      %v322 = vsel %vm294, %v320, %v321
      %v323 = vrot.slane %v245, 1
      %v324 = vsel %vm294, %v321, %v323
      %v325 = vrot.slane %v246, 1
      %v326 = vrot.slane %v247, 1
      %v327 = vsel %vm294, %v325, %v326
      %v328 = vrot.slane %v248, 1
      %v329 = vsel %vm294, %v326, %v328
      %v330 = vrot.slane %v249, 1
      %v331 = vrot.slane %v250, 1
      %v332 = vsel %vm294, %v330, %v331
      %v333 = vrot.slane %v251, 1
      %v334 = vsel %vm294, %v331, %v333
      %v335 = vrot.slane %v252, 1
      %v336 = vrot.slane %v253, 1
      %v337 = vsel %vm294, %v335, %v336
      %v338 = vrot.slane %v254, 1
      %v339 = vsel %vm294, %v336, %v338
      %v340 = vrot.slane %v255, 1
      %v341 = vrot.slane %v256, 1
      %v342 = vsel %vm294, %v340, %v341
      %v343 = vrot.slane %v257, 1
      %v344 = vsel %vm294, %v341, %v343
      %v365 = vld [vmem:[%s1] sm:$0xff]
      %v366 = vld [vmem:[%s1 + $0x8] sm:$0xff]
      %v367 = vld [vmem:[%s1 + $0x10] sm:$0xff]
      %v368 = vld [vmem:[%s1 + $0x18] sm:$0xff]
      %v369 = vld [vmem:[%s1 + $0x20] sm:$0xff]
      %v370 = vld [vmem:[%s1 + $0x28] sm:$0xff]
      %v371 = vld [vmem:[%s1 + $0x30] sm:$0xff]
      %v372 = vld [vmem:[%s1 + $0x38] sm:$0xff]
      %v373 = vld [vmem:[%s1 + $0x40] sm:$0xff]
      %v374 = vld [vmem:[%s1 + $0x48] sm:$0xff]
      %v375 = vld [vmem:[%s1 + $0x50] sm:$0xff]
      %v376 = vld [vmem:[%s1 + $0x58] sm:$0xff]
      %v377 = vld [vmem:[%s1 + $0x60] sm:$0xff]
      %v378 = vld [vmem:[%s1 + $0x68] sm:$0xff]
      %v379 = vld [vmem:[%s1 + $0x70] sm:$0xff]
      %v380 = vld [vmem:[%s1 + $0x78] sm:$0xff]
      %v381 = vld [vmem:[%s1 + $0x80] sm:$0xff]
      %v382 = vld [vmem:[%s1 + $0x88] sm:$0xff]
      %v383 = vld [vmem:[%s1 + $0x90] sm:$0xff]
      %v384 = vld [vmem:[%s1 + $0x98] sm:$0xff]
      %v385 = vld [vmem:[%s1 + $0xa0] sm:$0xff]
      %v386 = vld [vmem:[%s1 + $0xa8] sm:$0xff]
      %v387 = vld [vmem:[%s1 + $0xb0] sm:$0xff]
      %v388 = vld [vmem:[%s1 + $0xb8] sm:$0xff]
      %v389 = vld [vmem:[%s1 + $0xc0] sm:$0xff]
      %v390 = vld [vmem:[%s1 + $0xc8] sm:$0xff]
      %v391 = vld [vmem:[%s1 + $0xd0] sm:$0xff]
      %v392 = vld [vmem:[%s1 + $0xd8] sm:$0xff]
      %v393 = vld [vmem:[%s1 + $0xe0] sm:$0xff]
      %v394 = vld [vmem:[%s1 + $0xe8] sm:$0xff]
      %v395 = vld [vmem:[%s1 + $0xf0] sm:$0xff]
      %v396 = vld [vmem:[%s1 + $0xf8] sm:$0xff]
      %vm399 = vcmask 1041408
      %v400 = vrot.slane %v231, 6
      %v401 = vrot.slane %v232, 6
      %v402 = vsel %vm399, %v400, %v401
      %v403 = vrot.slane %v234, 6
      %v404 = vrot.slane %v235, 6
      %v405 = vsel %vm399, %v403, %v404
      %v406 = vrot.slane %v237, 6
      %v407 = vrot.slane %v238, 6
      %v408 = vsel %vm399, %v406, %v407
      %v409 = vrot.slane %v240, 6
      %v410 = vrot.slane %v241, 6
      %v411 = vsel %vm399, %v409, %v410
      %v412 = vrot.slane %v243, 6
      %v413 = vrot.slane %v244, 6
      %v414 = vsel %vm399, %v412, %v413
      %v415 = vrot.slane %v246, 6
      %v416 = vrot.slane %v247, 6
      %v417 = vsel %vm399, %v415, %v416
      %v418 = vrot.slane %v249, 6
      %v419 = vrot.slane %v250, 6
      %v420 = vsel %vm399, %v418, %v419
      %v421 = vrot.slane %v252, 6
      %v422 = vrot.slane %v253, 6
      %v423 = vsel %vm399, %v421, %v422
      %v424 = vrot.slane %v255, 6
      %v425 = vrot.slane %v256, 6
      %v426 = vsel %vm399, %v424, %v425
      %v427 = vrot.slane %v258, 6
      %v428 = vrot.slane %v259, 6
      %v429 = vsel %vm399, %v427, %v428
      %vm430 = vcmask 1045504
      %v431 = vrot.slane %v228, 2
      %v432 = vrot.slane %v229, 2
      %v433 = vsel %vm430, %v431, %v432
      %v434 = vrot.slane %v400, 2
      %v435 = vrot.slane %v402, 2
      %v436 = vsel %vm430, %v434, %v435
      %v437 = vrot.slane %v230, 2
      %v438 = vsel %vm430, %v432, %v437
      %v439 = vrot.slane %v401, 2
      %v440 = vsel %vm430, %v435, %v439
      %v441 = vrot.slane %v231, 2
      %v442 = vrot.slane %v232, 2
      %v443 = vsel %vm430, %v441, %v442
      %v444 = vrot.slane %v403, 2
      %v445 = vrot.slane %v405, 2
      %v446 = vsel %vm430, %v444, %v445
      %v447 = vrot.slane %v233, 2
      %v448 = vsel %vm430, %v442, %v447
      %v449 = vrot.slane %v404, 2
      %v450 = vsel %vm430, %v445, %v449
      %v451 = vrot.slane %v234, 2
      %v452 = vrot.slane %v235, 2
      %v453 = vsel %vm430, %v451, %v452
      %v454 = vrot.slane %v406, 2
      %v455 = vrot.slane %v408, 2
      %v456 = vsel %vm430, %v454, %v455
      %v457 = vrot.slane %v236, 2
      %v458 = vsel %vm430, %v452, %v457
      %v459 = vrot.slane %v407, 2
      %v460 = vsel %vm430, %v455, %v459
      %v461 = vrot.slane %v237, 2
      %v462 = vrot.slane %v238, 2
      %v463 = vsel %vm430, %v461, %v462
      %v464 = vrot.slane %v409, 2
      %v465 = vrot.slane %v411, 2
      %v466 = vsel %vm430, %v464, %v465
      %v467 = vrot.slane %v239, 2
      %v468 = vsel %vm430, %v462, %v467
      %v469 = vrot.slane %v410, 2
      %v470 = vsel %vm430, %v465, %v469
      %v471 = vrot.slane %v240, 2
      %v472 = vrot.slane %v241, 2
      %v473 = vsel %vm430, %v471, %v472
      %v474 = vrot.slane %v412, 2
      %v475 = vrot.slane %v414, 2
      %v476 = vsel %vm430, %v474, %v475
      %v477 = vrot.slane %v242, 2
      %v478 = vsel %vm430, %v472, %v477
      %v479 = vrot.slane %v413, 2
      %v480 = vsel %vm430, %v475, %v479
      %v481 = vrot.slane %v243, 2
      %v482 = vrot.slane %v244, 2
      %v483 = vsel %vm430, %v481, %v482
      %v484 = vrot.slane %v415, 2
      %v485 = vrot.slane %v417, 2
      %v486 = vsel %vm430, %v484, %v485
      %v487 = vrot.slane %v245, 2
      %v488 = vsel %vm430, %v482, %v487
      %v489 = vrot.slane %v416, 2
      %v490 = vsel %vm430, %v485, %v489
      %v491 = vrot.slane %v246, 2
      %v492 = vrot.slane %v247, 2
      %v493 = vsel %vm430, %v491, %v492
      %v494 = vrot.slane %v418, 2
      %v495 = vrot.slane %v420, 2
      %v496 = vsel %vm430, %v494, %v495
      %v497 = vrot.slane %v248, 2
      %v498 = vsel %vm430, %v492, %v497
      %v499 = vrot.slane %v419, 2
      %v500 = vsel %vm430, %v495, %v499
      %v501 = vrot.slane %v249, 2
      %v502 = vrot.slane %v250, 2
      %v503 = vsel %vm430, %v501, %v502
      %v504 = vrot.slane %v421, 2
      %v505 = vrot.slane %v423, 2
      %v506 = vsel %vm430, %v504, %v505
      %v507 = vrot.slane %v251, 2
      %v508 = vsel %vm430, %v502, %v507
      %v509 = vrot.slane %v422, 2
      %v510 = vsel %vm430, %v505, %v509
      %v511 = vrot.slane %v252, 2
      %v512 = vrot.slane %v253, 2
      %v513 = vsel %vm430, %v511, %v512
      %v514 = vrot.slane %v424, 2
      %v515 = vrot.slane %v426, 2
      %v516 = vsel %vm430, %v514, %v515
      %v517 = vrot.slane %v254, 2
      %v518 = vsel %vm430, %v512, %v517
      %v519 = vrot.slane %v425, 2
      %v520 = vsel %vm430, %v515, %v519
      %v521 = vrot.slane %v255, 2
      %v522 = vrot.slane %v256, 2
      %v523 = vsel %vm430, %v521, %v522
      %v524 = vrot.slane %v427, 2
      %v525 = vrot.slane %v429, 2
      %v526 = vsel %vm430, %v524, %v525
      %v527 = vrot.slane %v257, 2
      %v528 = vsel %vm430, %v522, %v527
      %v529 = vrot.slane %v428, 2
      %v530 = vsel %vm430, %v525, %v529
      %v571 = vld [vmem:[%s1 + $0x100] sm:$0xff]
      %v572 = vld [vmem:[%s1 + $0x108] sm:$0xff]
      %v573 = vld [vmem:[%s1 + $0x110] sm:$0xff]
      %v574 = vld [vmem:[%s1 + $0x118] sm:$0xff]
      %v575 = vld [vmem:[%s1 + $0x120] sm:$0xff]
      %v576 = vld [vmem:[%s1 + $0x128] sm:$0xff]
      %v577 = vld [vmem:[%s1 + $0x130] sm:$0xff]
      %v578 = vld [vmem:[%s1 + $0x138] sm:$0xff]
      %v579 = vld [vmem:[%s1 + $0x140] sm:$0xff]
      %v580 = vld [vmem:[%s1 + $0x148] sm:$0xff]
      %v581 = vld [vmem:[%s1 + $0x150] sm:$0xff]
      %v582 = vld [vmem:[%s1 + $0x158] sm:$0xff]
      %v583 = vld [vmem:[%s1 + $0x160] sm:$0xff]
      %v584 = vld [vmem:[%s1 + $0x168] sm:$0xff]
      %v585 = vld [vmem:[%s1 + $0x170] sm:$0xff]
      %v586 = vld [vmem:[%s1 + $0x178] sm:$0xff]
      %v587 = vld [vmem:[%s1 + $0x180] sm:$0xff]
      %v588 = vld [vmem:[%s1 + $0x188] sm:$0xff]
      %v589 = vld [vmem:[%s1 + $0x190] sm:$0xff]
      %v590 = vld [vmem:[%s1 + $0x198] sm:$0xff]
      %v591 = vld [vmem:[%s1 + $0x1a0] sm:$0xff]
      %v592 = vld [vmem:[%s1 + $0x1a8] sm:$0xff]
      %v593 = vld [vmem:[%s1 + $0x1b0] sm:$0xff]
      %v594 = vld [vmem:[%s1 + $0x1b8] sm:$0xff]
      %v595 = vld [vmem:[%s1 + $0x1c0] sm:$0xff]
      %v596 = vld [vmem:[%s1 + $0x1c8] sm:$0xff]
      %v597 = vld [vmem:[%s1 + $0x1d0] sm:$0xff]
      %v598 = vld [vmem:[%s1 + $0x1d8] sm:$0xff]
      %v599 = vld [vmem:[%s1 + $0x1e0] sm:$0xff]
      %v600 = vld [vmem:[%s1 + $0x1e8] sm:$0xff]
      %v601 = vld [vmem:[%s1 + $0x1f0] sm:$0xff]
      %v602 = vld [vmem:[%s1 + $0x1f8] sm:$0xff]
      %603 = vmatpush.msra.mxu0 %v586
      %604 = vmatpush.msra.mxu0 %v585
      %605 = vmatpush.msra.mxu0 %v584
      %606 = vmatpush.msra.mxu0 %v583
      %607 = vmatpush.msra.mxu0 %v582
      %608 = vmatpush.msra.mxu0 %v581
      %609 = vmatpush.msra.mxu0 %v580
      %610 = vmatpush.msra.mxu0 %v579
      %611 = vmatpush.msra.mxu0 %v578
      %612 = vmatpush.msra.mxu0 %v577
      %613 = vmatpush.msra.mxu0 %v576
      %614 = vmatpush.msra.mxu0 %v575
      %615 = vmatpush.msra.mxu0 %v574
      %616 = vmatpush.msra.mxu0 %v573
      %617 = vmatpush.msra.mxu0 %v572
      %618 = vmatpush.msra.mxu0 %v571
      %619 = vmatmul.f32.gmra.mxu0 %v433
      %v620 = vpop.f32.mrf.mxu0
      %v621 = vadd.f32 0.0, %v620
      %622 = vmatmul.f32.gmra.mxu0 %v438
      %v623 = vpop.f32.mrf.mxu0
      %v624 = vadd.f32 0.0, %v623
      %625 = vmatmul.f32.gmra.mxu0 %v443
      %v626 = vpop.f32.mrf.mxu0
      %v627 = vadd.f32 0.0, %v626
      %628 = vmatmul.f32.gmra.mxu0 %v448
      %v629 = vpop.f32.mrf.mxu0
      %v630 = vadd.f32 0.0, %v629
      %631 = vmatmul.f32.gmra.mxu0 %v453
      %v632 = vpop.f32.mrf.mxu0
      %v633 = vadd.f32 0.0, %v632
      %634 = vmatmul.f32.gmra.mxu0 %v458
      %v635 = vpop.f32.mrf.mxu0
      %v636 = vadd.f32 0.0, %v635
      %637 = vmatmul.f32.gmra.mxu0 %v463
      %v638 = vpop.f32.mrf.mxu0
      %v639 = vadd.f32 0.0, %v638
      %640 = vmatmul.f32.gmra.mxu0 %v468
      %v641 = vpop.f32.mrf.mxu0
      %v642 = vadd.f32 0.0, %v641
      %643 = vmatmul.f32.gmra.mxu0 %v473
      %v644 = vpop.f32.mrf.mxu0
      %v645 = vadd.f32 0.0, %v644
      %646 = vmatmul.f32.gmra.mxu0 %v478
      %v647 = vpop.f32.mrf.mxu0
      %v648 = vadd.f32 0.0, %v647
      %649 = vmatmul.f32.gmra.mxu0 %v483
      %v650 = vpop.f32.mrf.mxu0
      %v651 = vadd.f32 0.0, %v650
      %652 = vmatmul.f32.gmra.mxu0 %v488
      %v653 = vpop.f32.mrf.mxu0
      %v654 = vadd.f32 0.0, %v653
      %655 = vmatmul.f32.gmra.mxu0 %v493
      %v656 = vpop.f32.mrf.mxu0
      %v657 = vadd.f32 0.0, %v656
      %658 = vmatmul.f32.gmra.mxu0 %v498
      %v659 = vpop.f32.mrf.mxu0
      %v660 = vadd.f32 0.0, %v659
      %661 = vmatmul.f32.gmra.mxu0 %v503
      %v662 = vpop.f32.mrf.mxu0
      %v663 = vadd.f32 0.0, %v662
      %664 = vmatmul.f32.gmra.mxu0 %v508
      %v665 = vpop.f32.mrf.mxu0
      %v666 = vadd.f32 0.0, %v665
      %667 = vmatmul.f32.gmra.mxu0 %v513
      %v668 = vpop.f32.mrf.mxu0
      %v669 = vadd.f32 0.0, %v668
      %670 = vmatmul.f32.gmra.mxu0 %v518
      %v671 = vpop.f32.mrf.mxu0
      %v672 = vadd.f32 0.0, %v671
      %673 = vmatmul.f32.gmra.mxu0 %v523
      %v674 = vpop.f32.mrf.mxu0
      %v675 = vadd.f32 0.0, %v674
      %676 = vmatmul.f32.gmra.mxu0 %v528
      %v677 = vpop.f32.mrf.mxu0
      %v678 = vadd.f32 0.0, %v677
      %679 = vdwg.mxu0
      %680 = vmatpush.msra.mxu0 %v602
      %681 = vmatpush.msra.mxu0 %v601
      %682 = vmatpush.msra.mxu0 %v600
      %683 = vmatpush.msra.mxu0 %v599
      %684 = vmatpush.msra.mxu0 %v598
      %685 = vmatpush.msra.mxu0 %v597
      %686 = vmatpush.msra.mxu0 %v596
      %687 = vmatpush.msra.mxu0 %v595
      %688 = vmatpush.msra.mxu0 %v594
      %689 = vmatpush.msra.mxu0 %v593
      %690 = vmatpush.msra.mxu0 %v592
      %691 = vmatpush.msra.mxu0 %v591
      %692 = vmatpush.msra.mxu0 %v590
      %693 = vmatpush.msra.mxu0 %v589
      %694 = vmatpush.msra.mxu0 %v588
      %695 = vmatpush.msra.mxu0 %v587
      %696 = vmatmul.f32.gmra.mxu0 %v436
      %v697 = vpop.f32.mrf.mxu0
      %v698 = vadd.f32 %v621, %v697
      %699 = vmatmul.f32.gmra.mxu0 %v440
      %v700 = vpop.f32.mrf.mxu0
      %v701 = vadd.f32 %v624, %v700
      %702 = vmatmul.f32.gmra.mxu0 %v446
      %v703 = vpop.f32.mrf.mxu0
      %v704 = vadd.f32 %v627, %v703
      %705 = vmatmul.f32.gmra.mxu0 %v450
      %v706 = vpop.f32.mrf.mxu0
      %v707 = vadd.f32 %v630, %v706
      %708 = vmatmul.f32.gmra.mxu0 %v456
      %v709 = vpop.f32.mrf.mxu0
      %v710 = vadd.f32 %v633, %v709
      %711 = vmatmul.f32.gmra.mxu0 %v460
      %v712 = vpop.f32.mrf.mxu0
      %v713 = vadd.f32 %v636, %v712
      %714 = vmatmul.f32.gmra.mxu0 %v466
      %v715 = vpop.f32.mrf.mxu0
      %v716 = vadd.f32 %v639, %v715
      %717 = vmatmul.f32.gmra.mxu0 %v470
      %v718 = vpop.f32.mrf.mxu0
      %v719 = vadd.f32 %v642, %v718
      %720 = vmatmul.f32.gmra.mxu0 %v476
      %v721 = vpop.f32.mrf.mxu0
      %v722 = vadd.f32 %v645, %v721
      %723 = vmatmul.f32.gmra.mxu0 %v480
      %v724 = vpop.f32.mrf.mxu0
      %v725 = vadd.f32 %v648, %v724
      %726 = vmatmul.f32.gmra.mxu0 %v486
      %v727 = vpop.f32.mrf.mxu0
      %v728 = vadd.f32 %v651, %v727
      %729 = vmatmul.f32.gmra.mxu0 %v490
      %v730 = vpop.f32.mrf.mxu0
      %v731 = vadd.f32 %v654, %v730
      %732 = vmatmul.f32.gmra.mxu0 %v496
      %v733 = vpop.f32.mrf.mxu0
      %v734 = vadd.f32 %v657, %v733
      %735 = vmatmul.f32.gmra.mxu0 %v500
      %v736 = vpop.f32.mrf.mxu0
      %v737 = vadd.f32 %v660, %v736
      %738 = vmatmul.f32.gmra.mxu0 %v506
      %v739 = vpop.f32.mrf.mxu0
      %v740 = vadd.f32 %v663, %v739
      %741 = vmatmul.f32.gmra.mxu0 %v510
      %v742 = vpop.f32.mrf.mxu0
      %v743 = vadd.f32 %v666, %v742
      %744 = vmatmul.f32.gmra.mxu0 %v516
      %v745 = vpop.f32.mrf.mxu0
      %v746 = vadd.f32 %v669, %v745
      %747 = vmatmul.f32.gmra.mxu0 %v520
      %v748 = vpop.f32.mrf.mxu0
      %v749 = vadd.f32 %v672, %v748
      %750 = vmatmul.f32.gmra.mxu0 %v526
      %v751 = vpop.f32.mrf.mxu0
      %v752 = vadd.f32 %v675, %v751
      %753 = vmatmul.f32.gmra.mxu0 %v530
      %v754 = vpop.f32.mrf.mxu0
      %v755 = vadd.f32 %v678, %v754
      %756 = vdwg.mxu0
      %757 = vmatpush.msra.mxu0 %v380
      %758 = vmatpush.msra.mxu0 %v379
      %759 = vmatpush.msra.mxu0 %v378
      %760 = vmatpush.msra.mxu0 %v377
      %761 = vmatpush.msra.mxu0 %v376
      %762 = vmatpush.msra.mxu0 %v375
      %763 = vmatpush.msra.mxu0 %v374
      %764 = vmatpush.msra.mxu0 %v373
      %765 = vmatpush.msra.mxu0 %v372
      %766 = vmatpush.msra.mxu0 %v371
      %767 = vmatpush.msra.mxu0 %v370
      %768 = vmatpush.msra.mxu0 %v369
      %769 = vmatpush.msra.mxu0 %v368
      %770 = vmatpush.msra.mxu0 %v367
      %771 = vmatpush.msra.mxu0 %v366
      %772 = vmatpush.msra.mxu0 %v365
      %773 = vmatmul.f32.gmra.mxu0 %v228
      %v774 = vpop.f32.mrf.mxu0
      %v775 = vadd.f32 %v698, %v774
      %776 = vmatmul.f32.gmra.mxu0 %v229
      %v777 = vpop.f32.mrf.mxu0
      %v778 = vadd.f32 %v701, %v777
      %779 = vmatmul.f32.gmra.mxu0 %v231
      %v780 = vpop.f32.mrf.mxu0
      %v781 = vadd.f32 %v704, %v780
      %782 = vmatmul.f32.gmra.mxu0 %v232
      %v783 = vpop.f32.mrf.mxu0
      %v784 = vadd.f32 %v707, %v783
      %785 = vmatmul.f32.gmra.mxu0 %v234
      %v786 = vpop.f32.mrf.mxu0
      %v787 = vadd.f32 %v710, %v786
      %788 = vmatmul.f32.gmra.mxu0 %v235
      %v789 = vpop.f32.mrf.mxu0
      %v790 = vadd.f32 %v713, %v789
      %791 = vmatmul.f32.gmra.mxu0 %v237
      %v792 = vpop.f32.mrf.mxu0
      %v793 = vadd.f32 %v716, %v792
      %794 = vmatmul.f32.gmra.mxu0 %v238
      %v795 = vpop.f32.mrf.mxu0
      %v796 = vadd.f32 %v719, %v795
      %797 = vmatmul.f32.gmra.mxu0 %v240
      %v798 = vpop.f32.mrf.mxu0
      %v799 = vadd.f32 %v722, %v798
      %800 = vmatmul.f32.gmra.mxu0 %v241
      %v801 = vpop.f32.mrf.mxu0
      %v802 = vadd.f32 %v725, %v801
      %803 = vmatmul.f32.gmra.mxu0 %v243
      %v804 = vpop.f32.mrf.mxu0
      %v805 = vadd.f32 %v728, %v804
      %806 = vmatmul.f32.gmra.mxu0 %v244
      %v807 = vpop.f32.mrf.mxu0
      %v808 = vadd.f32 %v731, %v807
      %809 = vmatmul.f32.gmra.mxu0 %v246
      %v810 = vpop.f32.mrf.mxu0
      %v811 = vadd.f32 %v734, %v810
      %812 = vmatmul.f32.gmra.mxu0 %v247
      %v813 = vpop.f32.mrf.mxu0
      %v814 = vadd.f32 %v737, %v813
      %815 = vmatmul.f32.gmra.mxu0 %v249
      %v816 = vpop.f32.mrf.mxu0
      %v817 = vadd.f32 %v740, %v816
      %818 = vmatmul.f32.gmra.mxu0 %v250
      %v819 = vpop.f32.mrf.mxu0
      %v820 = vadd.f32 %v743, %v819
      %821 = vmatmul.f32.gmra.mxu0 %v252
      %v822 = vpop.f32.mrf.mxu0
      %v823 = vadd.f32 %v746, %v822
      %824 = vmatmul.f32.gmra.mxu0 %v253
      %v825 = vpop.f32.mrf.mxu0
      %v826 = vadd.f32 %v749, %v825
      %827 = vmatmul.f32.gmra.mxu0 %v255
      %v828 = vpop.f32.mrf.mxu0
      %v829 = vadd.f32 %v752, %v828
      %830 = vmatmul.f32.gmra.mxu0 %v256
      %v831 = vpop.f32.mrf.mxu0
      %v832 = vadd.f32 %v755, %v831
      %833 = vdwg.mxu0
      %834 = vmatpush.msra.mxu0 %v396
      %835 = vmatpush.msra.mxu0 %v395
      %836 = vmatpush.msra.mxu0 %v394
      %837 = vmatpush.msra.mxu0 %v393
      %838 = vmatpush.msra.mxu0 %v392
      %839 = vmatpush.msra.mxu0 %v391
      %840 = vmatpush.msra.mxu0 %v390
      %841 = vmatpush.msra.mxu0 %v389
      %842 = vmatpush.msra.mxu0 %v388
      %843 = vmatpush.msra.mxu0 %v387
      %844 = vmatpush.msra.mxu0 %v386
      %845 = vmatpush.msra.mxu0 %v385
      %846 = vmatpush.msra.mxu0 %v384
      %847 = vmatpush.msra.mxu0 %v383
      %848 = vmatpush.msra.mxu0 %v382
      %849 = vmatpush.msra.mxu0 %v381
      %850 = vmatmul.f32.gmra.mxu0 %v297
      %v851 = vpop.f32.mrf.mxu0
      %v852 = vadd.f32 %v775, %v851
      %853 = vmatmul.f32.gmra.mxu0 %v299
      %v854 = vpop.f32.mrf.mxu0
      %v855 = vadd.f32 %v778, %v854
      %856 = vmatmul.f32.gmra.mxu0 %v302
      %v857 = vpop.f32.mrf.mxu0
      %v858 = vadd.f32 %v781, %v857
      %859 = vmatmul.f32.gmra.mxu0 %v304
      %v860 = vpop.f32.mrf.mxu0
      %v861 = vadd.f32 %v784, %v860
      %862 = vmatmul.f32.gmra.mxu0 %v307
      %v863 = vpop.f32.mrf.mxu0
      %v864 = vadd.f32 %v787, %v863
      %865 = vmatmul.f32.gmra.mxu0 %v309
      %v866 = vpop.f32.mrf.mxu0
      %v867 = vadd.f32 %v790, %v866
      %868 = vmatmul.f32.gmra.mxu0 %v312
      %v869 = vpop.f32.mrf.mxu0
      %v870 = vadd.f32 %v793, %v869
      %871 = vmatmul.f32.gmra.mxu0 %v314
      %v872 = vpop.f32.mrf.mxu0
      %v873 = vadd.f32 %v796, %v872
      %874 = vmatmul.f32.gmra.mxu0 %v317
      %v875 = vpop.f32.mrf.mxu0
      %v876 = vadd.f32 %v799, %v875
      %877 = vmatmul.f32.gmra.mxu0 %v319
      %v878 = vpop.f32.mrf.mxu0
      %v879 = vadd.f32 %v802, %v878
      %880 = vmatmul.f32.gmra.mxu0 %v322
      %v881 = vpop.f32.mrf.mxu0
      %v882 = vadd.f32 %v805, %v881
      %883 = vmatmul.f32.gmra.mxu0 %v324
      %v884 = vpop.f32.mrf.mxu0
      %v885 = vadd.f32 %v808, %v884
      %886 = vmatmul.f32.gmra.mxu0 %v327
      %v887 = vpop.f32.mrf.mxu0
      %v888 = vadd.f32 %v811, %v887
      %889 = vmatmul.f32.gmra.mxu0 %v329
      %v890 = vpop.f32.mrf.mxu0
      %v891 = vadd.f32 %v814, %v890
      %892 = vmatmul.f32.gmra.mxu0 %v332
      %v893 = vpop.f32.mrf.mxu0
      %v894 = vadd.f32 %v817, %v893
      %895 = vmatmul.f32.gmra.mxu0 %v334
      %v896 = vpop.f32.mrf.mxu0
      %v897 = vadd.f32 %v820, %v896
      %898 = vmatmul.f32.gmra.mxu0 %v337
      %v899 = vpop.f32.mrf.mxu0
      %v900 = vadd.f32 %v823, %v899
      %901 = vmatmul.f32.gmra.mxu0 %v339
      %v902 = vpop.f32.mrf.mxu0
      %v903 = vadd.f32 %v826, %v902
      %904 = vmatmul.f32.gmra.mxu0 %v342
      %v905 = vpop.f32.mrf.mxu0
      %v906 = vadd.f32 %v829, %v905
      %907 = vmatmul.f32.gmra.mxu0 %v344
      %v908 = vpop.f32.mrf.mxu0
      %v909 = vadd.f32 %v832, %v908
      %910 = vdwg.mxu0
      %v912 = vrot.slane %v258, 1
      %v913 = vrot.slane %v259, 1
      %v914 = vsel %vm294, %v912, %v913
      %v915 = vrot.slane %v260, 1
      %v916 = vsel %vm294, %v913, %v915
      %v917 = vrot.slane %v302, 1
      %v918 = vrot.slane %v304, 1
      %v919 = vsel %vm294, %v917, %v918
      %v920 = vrot.slane %v303, 1
      %v921 = vsel %vm294, %v918, %v920
      %v922 = vrot.slane %v307, 1
      %v923 = vrot.slane %v309, 1
      %v924 = vsel %vm294, %v922, %v923
      %v925 = vrot.slane %v308, 1
      %v926 = vsel %vm294, %v923, %v925
      %v927 = vrot.slane %v312, 1
      %v928 = vrot.slane %v314, 1
      %v929 = vsel %vm294, %v927, %v928
      %v930 = vrot.slane %v313, 1
      %v931 = vsel %vm294, %v928, %v930
      %v932 = vrot.slane %v317, 1
      %v933 = vrot.slane %v319, 1
      %v934 = vsel %vm294, %v932, %v933
      %v935 = vrot.slane %v318, 1
      %v936 = vsel %vm294, %v933, %v935
      %v937 = vrot.slane %v322, 1
      %v938 = vrot.slane %v324, 1
      %v939 = vsel %vm294, %v937, %v938
      %v940 = vrot.slane %v323, 1
      %v941 = vsel %vm294, %v938, %v940
      %v942 = vrot.slane %v327, 1
      %v943 = vrot.slane %v329, 1
      %v944 = vsel %vm294, %v942, %v943
      %v945 = vrot.slane %v328, 1
      %v946 = vsel %vm294, %v943, %v945
      %v947 = vrot.slane %v332, 1
      %v948 = vrot.slane %v334, 1
      %v949 = vsel %vm294, %v947, %v948
      %v950 = vrot.slane %v333, 1
      %v951 = vsel %vm294, %v948, %v950
      %v952 = vrot.slane %v337, 1
      %v953 = vrot.slane %v339, 1
      %v954 = vsel %vm294, %v952, %v953
      %v955 = vrot.slane %v338, 1
      %v956 = vsel %vm294, %v953, %v955
      %v957 = vrot.slane %v342, 1
      %v958 = vrot.slane %v344, 1
      %v959 = vsel %vm294, %v957, %v958
      %v960 = vrot.slane %v343, 1
      %v961 = vsel %vm294, %v958, %v960
      %v962 = vrot.slane %v914, 1
      %v963 = vrot.slane %v916, 1
      %v964 = vsel %vm294, %v962, %v963
      %v965 = vrot.slane %v915, 1
      %v966 = vsel %vm294, %v963, %v965
      %v989 = vld [vmem:[%s1 + $0x200] sm:$0xff]
      %v990 = vld [vmem:[%s1 + $0x208] sm:$0xff]
      %v991 = vld [vmem:[%s1 + $0x210] sm:$0xff]
      %v992 = vld [vmem:[%s1 + $0x218] sm:$0xff]
      %v993 = vld [vmem:[%s1 + $0x220] sm:$0xff]
      %v994 = vld [vmem:[%s1 + $0x228] sm:$0xff]
      %v995 = vld [vmem:[%s1 + $0x230] sm:$0xff]
      %v996 = vld [vmem:[%s1 + $0x238] sm:$0xff]
      %v997 = vld [vmem:[%s1 + $0x240] sm:$0xff]
      %v998 = vld [vmem:[%s1 + $0x248] sm:$0xff]
      %v999 = vld [vmem:[%s1 + $0x250] sm:$0xff]
      %v1000 = vld [vmem:[%s1 + $0x258] sm:$0xff]
      %v1001 = vld [vmem:[%s1 + $0x260] sm:$0xff]
      %v1002 = vld [vmem:[%s1 + $0x268] sm:$0xff]
      %v1003 = vld [vmem:[%s1 + $0x270] sm:$0xff]
      %v1004 = vld [vmem:[%s1 + $0x278] sm:$0xff]
      %v1005 = vld [vmem:[%s1 + $0x280] sm:$0xff]
      %v1006 = vld [vmem:[%s1 + $0x288] sm:$0xff]
      %v1007 = vld [vmem:[%s1 + $0x290] sm:$0xff]
      %v1008 = vld [vmem:[%s1 + $0x298] sm:$0xff]
      %v1009 = vld [vmem:[%s1 + $0x2a0] sm:$0xff]
      %v1010 = vld [vmem:[%s1 + $0x2a8] sm:$0xff]
      %v1011 = vld [vmem:[%s1 + $0x2b0] sm:$0xff]
      %v1012 = vld [vmem:[%s1 + $0x2b8] sm:$0xff]
      %v1013 = vld [vmem:[%s1 + $0x2c0] sm:$0xff]
      %v1014 = vld [vmem:[%s1 + $0x2c8] sm:$0xff]
      %v1015 = vld [vmem:[%s1 + $0x2d0] sm:$0xff]
      %v1016 = vld [vmem:[%s1 + $0x2d8] sm:$0xff]
      %v1017 = vld [vmem:[%s1 + $0x2e0] sm:$0xff]
      %v1018 = vld [vmem:[%s1 + $0x2e8] sm:$0xff]
      %v1019 = vld [vmem:[%s1 + $0x2f0] sm:$0xff]
      %v1020 = vld [vmem:[%s1 + $0x2f8] sm:$0xff]
      %1021 = vmatpush.msra.mxu0 %v1004
      %1022 = vmatpush.msra.mxu0 %v1003
      %1023 = vmatpush.msra.mxu0 %v1002
      %1024 = vmatpush.msra.mxu0 %v1001
      %1025 = vmatpush.msra.mxu0 %v1000
      %1026 = vmatpush.msra.mxu0 %v999
      %1027 = vmatpush.msra.mxu0 %v998
      %1028 = vmatpush.msra.mxu0 %v997
      %1029 = vmatpush.msra.mxu0 %v996
      %1030 = vmatpush.msra.mxu0 %v995
      %1031 = vmatpush.msra.mxu0 %v994
      %1032 = vmatpush.msra.mxu0 %v993
      %1033 = vmatpush.msra.mxu0 %v992
      %1034 = vmatpush.msra.mxu0 %v991
      %1035 = vmatpush.msra.mxu0 %v990
      %1036 = vmatpush.msra.mxu0 %v989
      %1037 = vmatmul.f32.gmra.mxu0 %v302
      %v1038 = vpop.f32.mrf.mxu0
      %v1039 = vadd.f32 0.0, %v1038
      %1040 = vmatmul.f32.gmra.mxu0 %v304
      %v1041 = vpop.f32.mrf.mxu0
      %v1042 = vadd.f32 0.0, %v1041
      %1043 = vmatmul.f32.gmra.mxu0 %v307
      %v1044 = vpop.f32.mrf.mxu0
      %v1045 = vadd.f32 0.0, %v1044
      %1046 = vmatmul.f32.gmra.mxu0 %v309
      %v1047 = vpop.f32.mrf.mxu0
      %v1048 = vadd.f32 0.0, %v1047
      %1049 = vmatmul.f32.gmra.mxu0 %v312
      %v1050 = vpop.f32.mrf.mxu0
      %v1051 = vadd.f32 0.0, %v1050
      %1052 = vmatmul.f32.gmra.mxu0 %v314
      %v1053 = vpop.f32.mrf.mxu0
      %v1054 = vadd.f32 0.0, %v1053
      %1055 = vmatmul.f32.gmra.mxu0 %v317
      %v1056 = vpop.f32.mrf.mxu0
      %v1057 = vadd.f32 0.0, %v1056
      %1058 = vmatmul.f32.gmra.mxu0 %v319
      %v1059 = vpop.f32.mrf.mxu0
      %v1060 = vadd.f32 0.0, %v1059
      %1061 = vmatmul.f32.gmra.mxu0 %v322
      %v1062 = vpop.f32.mrf.mxu0
      %v1063 = vadd.f32 0.0, %v1062
      %1064 = vmatmul.f32.gmra.mxu0 %v324
      %v1065 = vpop.f32.mrf.mxu0
      %v1066 = vadd.f32 0.0, %v1065
      %1067 = vmatmul.f32.gmra.mxu0 %v327
      %v1068 = vpop.f32.mrf.mxu0
      %v1069 = vadd.f32 0.0, %v1068
      %1070 = vmatmul.f32.gmra.mxu0 %v329
      %v1071 = vpop.f32.mrf.mxu0
      %v1072 = vadd.f32 0.0, %v1071
      %1073 = vmatmul.f32.gmra.mxu0 %v332
      %v1074 = vpop.f32.mrf.mxu0
      %v1075 = vadd.f32 0.0, %v1074
      %1076 = vmatmul.f32.gmra.mxu0 %v334
      %v1077 = vpop.f32.mrf.mxu0
      %v1078 = vadd.f32 0.0, %v1077
      %1079 = vmatmul.f32.gmra.mxu0 %v337
      %v1080 = vpop.f32.mrf.mxu0
      %v1081 = vadd.f32 0.0, %v1080
      %1082 = vmatmul.f32.gmra.mxu0 %v339
      %v1083 = vpop.f32.mrf.mxu0
      %v1084 = vadd.f32 0.0, %v1083
      %1085 = vmatmul.f32.gmra.mxu0 %v342
      %v1086 = vpop.f32.mrf.mxu0
      %v1087 = vadd.f32 0.0, %v1086
      %1088 = vmatmul.f32.gmra.mxu0 %v344
      %v1089 = vpop.f32.mrf.mxu0
      %v1090 = vadd.f32 0.0, %v1089
      %1091 = vmatmul.f32.gmra.mxu0 %v914
      %v1092 = vpop.f32.mrf.mxu0
      %v1093 = vadd.f32 0.0, %v1092
      %1094 = vmatmul.f32.gmra.mxu0 %v916
      %v1095 = vpop.f32.mrf.mxu0
      %v1096 = vadd.f32 0.0, %v1095
      %1097 = vdwg.mxu0
      %1098 = vmatpush.msra.mxu0 %v1020
      %1099 = vmatpush.msra.mxu0 %v1019
      %1100 = vmatpush.msra.mxu0 %v1018
      %1101 = vmatpush.msra.mxu0 %v1017
      %1102 = vmatpush.msra.mxu0 %v1016
      %1103 = vmatpush.msra.mxu0 %v1015
      %1104 = vmatpush.msra.mxu0 %v1014
      %1105 = vmatpush.msra.mxu0 %v1013
      %1106 = vmatpush.msra.mxu0 %v1012
      %1107 = vmatpush.msra.mxu0 %v1011
      %1108 = vmatpush.msra.mxu0 %v1010
      %1109 = vmatpush.msra.mxu0 %v1009
      %1110 = vmatpush.msra.mxu0 %v1008
      %1111 = vmatpush.msra.mxu0 %v1007
      %1112 = vmatpush.msra.mxu0 %v1006
      %1113 = vmatpush.msra.mxu0 %v1005
      %1114 = vmatmul.f32.gmra.mxu0 %v919
      %v1115 = vpop.f32.mrf.mxu0
      %v1116 = vadd.f32 %v1039, %v1115
      %1117 = vmatmul.f32.gmra.mxu0 %v921
      %v1118 = vpop.f32.mrf.mxu0
      %v1119 = vadd.f32 %v1042, %v1118
      %1120 = vmatmul.f32.gmra.mxu0 %v924
      %v1121 = vpop.f32.mrf.mxu0
      %v1122 = vadd.f32 %v1045, %v1121
      %1123 = vmatmul.f32.gmra.mxu0 %v926
      %v1124 = vpop.f32.mrf.mxu0
      %v1125 = vadd.f32 %v1048, %v1124
      %1126 = vmatmul.f32.gmra.mxu0 %v929
      %v1127 = vpop.f32.mrf.mxu0
      %v1128 = vadd.f32 %v1051, %v1127
      %1129 = vmatmul.f32.gmra.mxu0 %v931
      %v1130 = vpop.f32.mrf.mxu0
      %v1131 = vadd.f32 %v1054, %v1130
      %1132 = vmatmul.f32.gmra.mxu0 %v934
      %v1133 = vpop.f32.mrf.mxu0
      %v1134 = vadd.f32 %v1057, %v1133
      %1135 = vmatmul.f32.gmra.mxu0 %v936
      %v1136 = vpop.f32.mrf.mxu0
      %v1137 = vadd.f32 %v1060, %v1136
      %1138 = vmatmul.f32.gmra.mxu0 %v939
      %v1139 = vpop.f32.mrf.mxu0
      %v1140 = vadd.f32 %v1063, %v1139
      %1141 = vmatmul.f32.gmra.mxu0 %v941
      %v1142 = vpop.f32.mrf.mxu0
      %v1143 = vadd.f32 %v1066, %v1142
      %1144 = vmatmul.f32.gmra.mxu0 %v944
      %v1145 = vpop.f32.mrf.mxu0
      %v1146 = vadd.f32 %v1069, %v1145
      %1147 = vmatmul.f32.gmra.mxu0 %v946
      %v1148 = vpop.f32.mrf.mxu0
      %v1149 = vadd.f32 %v1072, %v1148
      %1150 = vmatmul.f32.gmra.mxu0 %v949
      %v1151 = vpop.f32.mrf.mxu0
      %v1152 = vadd.f32 %v1075, %v1151
      %1153 = vmatmul.f32.gmra.mxu0 %v951
      %v1154 = vpop.f32.mrf.mxu0
      %v1155 = vadd.f32 %v1078, %v1154
      %1156 = vmatmul.f32.gmra.mxu0 %v954
      %v1157 = vpop.f32.mrf.mxu0
      %v1158 = vadd.f32 %v1081, %v1157
      %1159 = vmatmul.f32.gmra.mxu0 %v956
      %v1160 = vpop.f32.mrf.mxu0
      %v1161 = vadd.f32 %v1084, %v1160
      %1162 = vmatmul.f32.gmra.mxu0 %v959
      %v1163 = vpop.f32.mrf.mxu0
      %v1164 = vadd.f32 %v1087, %v1163
      %1165 = vmatmul.f32.gmra.mxu0 %v961
      %v1166 = vpop.f32.mrf.mxu0
      %v1167 = vadd.f32 %v1090, %v1166
      %1168 = vmatmul.f32.gmra.mxu0 %v964
      %v1169 = vpop.f32.mrf.mxu0
      %v1170 = vadd.f32 %v1093, %v1169
      %1171 = vmatmul.f32.gmra.mxu0 %v966
      %v1172 = vpop.f32.mrf.mxu0
      %v1173 = vadd.f32 %v1096, %v1172
      %1174 = vdwg.mxu0
      %v1175 = vadd.f32 %v852, %v1116
      %v1176 = vadd.f32 %v855, %v1119
      %v1177 = vadd.f32 %v858, %v1122
      %v1178 = vadd.f32 %v861, %v1125
      %v1179 = vadd.f32 %v864, %v1128
      %v1180 = vadd.f32 %v867, %v1131
      %v1181 = vadd.f32 %v870, %v1134
      %v1182 = vadd.f32 %v873, %v1137
      %v1183 = vadd.f32 %v876, %v1140
      %v1184 = vadd.f32 %v879, %v1143
      %v1185 = vadd.f32 %v882, %v1146
      %v1186 = vadd.f32 %v885, %v1149
      %v1187 = vadd.f32 %v888, %v1152
      %v1188 = vadd.f32 %v891, %v1155
      %v1189 = vadd.f32 %v894, %v1158
      %v1190 = vadd.f32 %v897, %v1161
      %v1191 = vadd.f32 %v900, %v1164
      %v1192 = vadd.f32 %v903, %v1167
      %v1193 = vadd.f32 %v906, %v1170
      %v1194 = vadd.f32 %v909, %v1173
      %v1198 = vrot.slane %v261, 1
      %v1199 = vrot.slane %v262, 1
      %v1200 = vsel %vm294, %v1198, %v1199
      %v1201 = vrot.slane %v263, 1
      %v1202 = vsel %vm294, %v1199, %v1201
      %v1205 = vld [vmem:[%s1 + $0x300] sm:$0xff]
      %v1206 = vld [vmem:[%s1 + $0x308] sm:$0xff]
      %v1207 = vld [vmem:[%s1 + $0x310] sm:$0xff]
      %v1208 = vld [vmem:[%s1 + $0x318] sm:$0xff]
      %v1209 = vld [vmem:[%s1 + $0x320] sm:$0xff]
      %v1210 = vld [vmem:[%s1 + $0x328] sm:$0xff]
      %v1211 = vld [vmem:[%s1 + $0x330] sm:$0xff]
      %v1212 = vld [vmem:[%s1 + $0x338] sm:$0xff]
      %v1213 = vld [vmem:[%s1 + $0x340] sm:$0xff]
      %v1214 = vld [vmem:[%s1 + $0x348] sm:$0xff]
      %v1215 = vld [vmem:[%s1 + $0x350] sm:$0xff]
      %v1216 = vld [vmem:[%s1 + $0x358] sm:$0xff]
      %v1217 = vld [vmem:[%s1 + $0x360] sm:$0xff]
      %v1218 = vld [vmem:[%s1 + $0x368] sm:$0xff]
      %v1219 = vld [vmem:[%s1 + $0x370] sm:$0xff]
      %v1220 = vld [vmem:[%s1 + $0x378] sm:$0xff]
      %v1221 = vld [vmem:[%s1 + $0x380] sm:$0xff]
      %v1222 = vld [vmem:[%s1 + $0x388] sm:$0xff]
      %v1223 = vld [vmem:[%s1 + $0x390] sm:$0xff]
      %v1224 = vld [vmem:[%s1 + $0x398] sm:$0xff]
      %v1225 = vld [vmem:[%s1 + $0x3a0] sm:$0xff]
      %v1226 = vld [vmem:[%s1 + $0x3a8] sm:$0xff]
      %v1227 = vld [vmem:[%s1 + $0x3b0] sm:$0xff]
      %v1228 = vld [vmem:[%s1 + $0x3b8] sm:$0xff]
      %v1229 = vld [vmem:[%s1 + $0x3c0] sm:$0xff]
      %v1230 = vld [vmem:[%s1 + $0x3c8] sm:$0xff]
      %v1231 = vld [vmem:[%s1 + $0x3d0] sm:$0xff]
      %v1232 = vld [vmem:[%s1 + $0x3d8] sm:$0xff]
      %v1233 = vld [vmem:[%s1 + $0x3e0] sm:$0xff]
      %v1234 = vld [vmem:[%s1 + $0x3e8] sm:$0xff]
      %v1235 = vld [vmem:[%s1 + $0x3f0] sm:$0xff]
      %v1236 = vld [vmem:[%s1 + $0x3f8] sm:$0xff]
      %1237 = vmatpush.msra.mxu0 %v1220
      %1238 = vmatpush.msra.mxu0 %v1219
      %1239 = vmatpush.msra.mxu0 %v1218
      %1240 = vmatpush.msra.mxu0 %v1217
      %1241 = vmatpush.msra.mxu0 %v1216
      %1242 = vmatpush.msra.mxu0 %v1215
      %1243 = vmatpush.msra.mxu0 %v1214
      %1244 = vmatpush.msra.mxu0 %v1213
      %1245 = vmatpush.msra.mxu0 %v1212
      %1246 = vmatpush.msra.mxu0 %v1211
      %1247 = vmatpush.msra.mxu0 %v1210
      %1248 = vmatpush.msra.mxu0 %v1209
      %1249 = vmatpush.msra.mxu0 %v1208
      %1250 = vmatpush.msra.mxu0 %v1207
      %1251 = vmatpush.msra.mxu0 %v1206
      %1252 = vmatpush.msra.mxu0 %v1205
      %1253 = vmatmul.f32.gmra.mxu0 %v234
      %v1254 = vpop.f32.mrf.mxu0
      %v1255 = vadd.f32 0.0, %v1254
      %1256 = vmatmul.f32.gmra.mxu0 %v235
      %v1257 = vpop.f32.mrf.mxu0
      %v1258 = vadd.f32 0.0, %v1257
      %1259 = vmatmul.f32.gmra.mxu0 %v237
      %v1260 = vpop.f32.mrf.mxu0
      %v1261 = vadd.f32 0.0, %v1260
      %1262 = vmatmul.f32.gmra.mxu0 %v238
      %v1263 = vpop.f32.mrf.mxu0
      %v1264 = vadd.f32 0.0, %v1263
      %1265 = vmatmul.f32.gmra.mxu0 %v240
      %v1266 = vpop.f32.mrf.mxu0
      %v1267 = vadd.f32 0.0, %v1266
      %1268 = vmatmul.f32.gmra.mxu0 %v241
      %v1269 = vpop.f32.mrf.mxu0
      %v1270 = vadd.f32 0.0, %v1269
      %1271 = vmatmul.f32.gmra.mxu0 %v243
      %v1272 = vpop.f32.mrf.mxu0
      %v1273 = vadd.f32 0.0, %v1272
      %1274 = vmatmul.f32.gmra.mxu0 %v244
      %v1275 = vpop.f32.mrf.mxu0
      %v1276 = vadd.f32 0.0, %v1275
      %1277 = vmatmul.f32.gmra.mxu0 %v246
      %v1278 = vpop.f32.mrf.mxu0
      %v1279 = vadd.f32 0.0, %v1278
      %1280 = vmatmul.f32.gmra.mxu0 %v247
      %v1281 = vpop.f32.mrf.mxu0
      %v1282 = vadd.f32 0.0, %v1281
      %1283 = vmatmul.f32.gmra.mxu0 %v249
      %v1284 = vpop.f32.mrf.mxu0
      %v1285 = vadd.f32 0.0, %v1284
      %1286 = vmatmul.f32.gmra.mxu0 %v250
      %v1287 = vpop.f32.mrf.mxu0
      %v1288 = vadd.f32 0.0, %v1287
      %1289 = vmatmul.f32.gmra.mxu0 %v252
      %v1290 = vpop.f32.mrf.mxu0
      %v1291 = vadd.f32 0.0, %v1290
      %1292 = vmatmul.f32.gmra.mxu0 %v253
      %v1293 = vpop.f32.mrf.mxu0
      %v1294 = vadd.f32 0.0, %v1293
      %1295 = vmatmul.f32.gmra.mxu0 %v255
      %v1296 = vpop.f32.mrf.mxu0
      %v1297 = vadd.f32 0.0, %v1296
      %1298 = vmatmul.f32.gmra.mxu0 %v256
      %v1299 = vpop.f32.mrf.mxu0
      %v1300 = vadd.f32 0.0, %v1299
      %1301 = vmatmul.f32.gmra.mxu0 %v258
      %v1302 = vpop.f32.mrf.mxu0
      %v1303 = vadd.f32 0.0, %v1302
      %1304 = vmatmul.f32.gmra.mxu0 %v259
      %v1305 = vpop.f32.mrf.mxu0
      %v1306 = vadd.f32 0.0, %v1305
      %1307 = vmatmul.f32.gmra.mxu0 %v261
      %v1308 = vpop.f32.mrf.mxu0
      %v1309 = vadd.f32 0.0, %v1308
      %1310 = vmatmul.f32.gmra.mxu0 %v262
      %v1311 = vpop.f32.mrf.mxu0
      %v1312 = vadd.f32 0.0, %v1311
      %1313 = vdwg.mxu0
      %1314 = vmatpush.msra.mxu0 %v1236
      %1315 = vmatpush.msra.mxu0 %v1235
      %1316 = vmatpush.msra.mxu0 %v1234
      %1317 = vmatpush.msra.mxu0 %v1233
      %1318 = vmatpush.msra.mxu0 %v1232
      %1319 = vmatpush.msra.mxu0 %v1231
      %1320 = vmatpush.msra.mxu0 %v1230
      %1321 = vmatpush.msra.mxu0 %v1229
      %1322 = vmatpush.msra.mxu0 %v1228
      %1323 = vmatpush.msra.mxu0 %v1227
      %1324 = vmatpush.msra.mxu0 %v1226
      %1325 = vmatpush.msra.mxu0 %v1225
      %1326 = vmatpush.msra.mxu0 %v1224
      %1327 = vmatpush.msra.mxu0 %v1223
      %1328 = vmatpush.msra.mxu0 %v1222
      %1329 = vmatpush.msra.mxu0 %v1221
      %1330 = vmatmul.f32.gmra.mxu0 %v307
      %v1331 = vpop.f32.mrf.mxu0
      %v1332 = vadd.f32 %v1255, %v1331
      %1333 = vmatmul.f32.gmra.mxu0 %v309
      %v1334 = vpop.f32.mrf.mxu0
      %v1335 = vadd.f32 %v1258, %v1334
      %1336 = vmatmul.f32.gmra.mxu0 %v312
      %v1337 = vpop.f32.mrf.mxu0
      %v1338 = vadd.f32 %v1261, %v1337
      %1339 = vmatmul.f32.gmra.mxu0 %v314
      %v1340 = vpop.f32.mrf.mxu0
      %v1341 = vadd.f32 %v1264, %v1340
      %1342 = vmatmul.f32.gmra.mxu0 %v317
      %v1343 = vpop.f32.mrf.mxu0
      %v1344 = vadd.f32 %v1267, %v1343
      %1345 = vmatmul.f32.gmra.mxu0 %v319
      %v1346 = vpop.f32.mrf.mxu0
      %v1347 = vadd.f32 %v1270, %v1346
      %1348 = vmatmul.f32.gmra.mxu0 %v322
      %v1349 = vpop.f32.mrf.mxu0
      %v1350 = vadd.f32 %v1273, %v1349
      %1351 = vmatmul.f32.gmra.mxu0 %v324
      %v1352 = vpop.f32.mrf.mxu0
      %v1353 = vadd.f32 %v1276, %v1352
      %1354 = vmatmul.f32.gmra.mxu0 %v327
      %v1355 = vpop.f32.mrf.mxu0
      %v1356 = vadd.f32 %v1279, %v1355
      %1357 = vmatmul.f32.gmra.mxu0 %v329
      %v1358 = vpop.f32.mrf.mxu0
      %v1359 = vadd.f32 %v1282, %v1358
      %1360 = vmatmul.f32.gmra.mxu0 %v332
      %v1361 = vpop.f32.mrf.mxu0
      %v1362 = vadd.f32 %v1285, %v1361
      %1363 = vmatmul.f32.gmra.mxu0 %v334
      %v1364 = vpop.f32.mrf.mxu0
      %v1365 = vadd.f32 %v1288, %v1364
      %1366 = vmatmul.f32.gmra.mxu0 %v337
      %v1367 = vpop.f32.mrf.mxu0
      %v1368 = vadd.f32 %v1291, %v1367
      %1369 = vmatmul.f32.gmra.mxu0 %v339
      %v1370 = vpop.f32.mrf.mxu0
      %v1371 = vadd.f32 %v1294, %v1370
      %1372 = vmatmul.f32.gmra.mxu0 %v342
      %v1373 = vpop.f32.mrf.mxu0
      %v1374 = vadd.f32 %v1297, %v1373
      %1375 = vmatmul.f32.gmra.mxu0 %v344
      %v1376 = vpop.f32.mrf.mxu0
      %v1377 = vadd.f32 %v1300, %v1376
      %1378 = vmatmul.f32.gmra.mxu0 %v914
      %v1379 = vpop.f32.mrf.mxu0
      %v1380 = vadd.f32 %v1303, %v1379
      %1381 = vmatmul.f32.gmra.mxu0 %v916
      %v1382 = vpop.f32.mrf.mxu0
      %v1383 = vadd.f32 %v1306, %v1382
      %1384 = vmatmul.f32.gmra.mxu0 %v1200
      %v1385 = vpop.f32.mrf.mxu0
      %v1386 = vadd.f32 %v1309, %v1385
      %1387 = vmatmul.f32.gmra.mxu0 %v1202
      %v1388 = vpop.f32.mrf.mxu0
      %v1389 = vadd.f32 %v1312, %v1388
      %1390 = vdwg.mxu0
      %v1391 = vadd.f32 %v1175, %v1332
      %v1392 = vadd.f32 %v1176, %v1335
      %v1393 = vadd.f32 %v1177, %v1338
      %v1394 = vadd.f32 %v1178, %v1341
      %v1395 = vadd.f32 %v1179, %v1344
      %v1396 = vadd.f32 %v1180, %v1347
      %v1397 = vadd.f32 %v1181, %v1350
      %v1398 = vadd.f32 %v1182, %v1353
      %v1399 = vadd.f32 %v1183, %v1356
      %v1400 = vadd.f32 %v1184, %v1359
      %v1401 = vadd.f32 %v1185, %v1362
      %v1402 = vadd.f32 %v1186, %v1365
      %v1403 = vadd.f32 %v1187, %v1368
      %v1404 = vadd.f32 %v1188, %v1371
      %v1405 = vadd.f32 %v1189, %v1374
      %v1406 = vadd.f32 %v1190, %v1377
      %v1407 = vadd.f32 %v1191, %v1380
      %v1408 = vadd.f32 %v1192, %v1383
      %v1409 = vadd.f32 %v1193, %v1386
      %v1410 = vadd.f32 %v1194, %v1389
      %v1411 = vrot.slane %v258, 2
      %v1412 = vrot.slane %v259, 2
      %v1413 = vsel %vm430, %v1411, %v1412
      %v1414 = vrot.slane %v260, 2
      %v1415 = vsel %vm430, %v1412, %v1414
      %v1416 = vrot.slane %v261, 2
      %v1417 = vrot.slane %v262, 2
      %v1418 = vsel %vm430, %v1416, %v1417
      %v1419 = vrot.slane %v263, 2
      %v1420 = vsel %vm430, %v1417, %v1419
      %v1425 = vld [vmem:[%s1 + $0x400] sm:$0xff]
      %v1426 = vld [vmem:[%s1 + $0x408] sm:$0xff]
      %v1427 = vld [vmem:[%s1 + $0x410] sm:$0xff]
      %v1428 = vld [vmem:[%s1 + $0x418] sm:$0xff]
      %v1429 = vld [vmem:[%s1 + $0x420] sm:$0xff]
      %v1430 = vld [vmem:[%s1 + $0x428] sm:$0xff]
      %v1431 = vld [vmem:[%s1 + $0x430] sm:$0xff]
      %v1432 = vld [vmem:[%s1 + $0x438] sm:$0xff]
      %v1433 = vld [vmem:[%s1 + $0x440] sm:$0xff]
      %v1434 = vld [vmem:[%s1 + $0x448] sm:$0xff]
      %v1435 = vld [vmem:[%s1 + $0x450] sm:$0xff]
      %v1436 = vld [vmem:[%s1 + $0x458] sm:$0xff]
      %v1437 = vld [vmem:[%s1 + $0x460] sm:$0xff]
      %v1438 = vld [vmem:[%s1 + $0x468] sm:$0xff]
      %v1439 = vld [vmem:[%s1 + $0x470] sm:$0xff]
      %v1440 = vld [vmem:[%s1 + $0x478] sm:$0xff]
      %1441 = vmatpush.msra.mxu0 %v1440
      %1442 = vmatpush.msra.mxu0 %v1439
      %1443 = vmatpush.msra.mxu0 %v1438
      %1444 = vmatpush.msra.mxu0 %v1437
      %1445 = vmatpush.msra.mxu0 %v1436
      %1446 = vmatpush.msra.mxu0 %v1435
      %1447 = vmatpush.msra.mxu0 %v1434
      %1448 = vmatpush.msra.mxu0 %v1433
      %1449 = vmatpush.msra.mxu0 %v1432
      %1450 = vmatpush.msra.mxu0 %v1431
      %1451 = vmatpush.msra.mxu0 %v1430
      %1452 = vmatpush.msra.mxu0 %v1429
      %1453 = vmatpush.msra.mxu0 %v1428
      %1454 = vmatpush.msra.mxu0 %v1427
      %1455 = vmatpush.msra.mxu0 %v1426
      %1456 = vmatpush.msra.mxu0 %v1425
      %1457 = vmatmul.f32.gmra.mxu0 %v453
      %v1458 = vpop.f32.mrf.mxu0
      %v1459 = vadd.f32 0.0, %v1458
      %1460 = vmatmul.f32.gmra.mxu0 %v458
      %v1461 = vpop.f32.mrf.mxu0
      %v1462 = vadd.f32 0.0, %v1461
      %1463 = vmatmul.f32.gmra.mxu0 %v463
      %v1464 = vpop.f32.mrf.mxu0
      %v1465 = vadd.f32 0.0, %v1464
      %1466 = vmatmul.f32.gmra.mxu0 %v468
      %v1467 = vpop.f32.mrf.mxu0
      %v1468 = vadd.f32 0.0, %v1467
      %1469 = vmatmul.f32.gmra.mxu0 %v473
      %v1470 = vpop.f32.mrf.mxu0
      %v1471 = vadd.f32 0.0, %v1470
      %1472 = vmatmul.f32.gmra.mxu0 %v478
      %v1473 = vpop.f32.mrf.mxu0
      %v1474 = vadd.f32 0.0, %v1473
      %1475 = vmatmul.f32.gmra.mxu0 %v483
      %v1476 = vpop.f32.mrf.mxu0
      %v1477 = vadd.f32 0.0, %v1476
      %1478 = vmatmul.f32.gmra.mxu0 %v488
      %v1479 = vpop.f32.mrf.mxu0
      %v1480 = vadd.f32 0.0, %v1479
      %1481 = vmatmul.f32.gmra.mxu0 %v493
      %v1482 = vpop.f32.mrf.mxu0
      %v1483 = vadd.f32 0.0, %v1482
      %1484 = vmatmul.f32.gmra.mxu0 %v498
      %v1485 = vpop.f32.mrf.mxu0
      %v1486 = vadd.f32 0.0, %v1485
      %1487 = vmatmul.f32.gmra.mxu0 %v503
      %v1488 = vpop.f32.mrf.mxu0
      %v1489 = vadd.f32 0.0, %v1488
      %1490 = vmatmul.f32.gmra.mxu0 %v508
      %v1491 = vpop.f32.mrf.mxu0
      %v1492 = vadd.f32 0.0, %v1491
      %1493 = vmatmul.f32.gmra.mxu0 %v513
      %v1494 = vpop.f32.mrf.mxu0
      %v1495 = vadd.f32 0.0, %v1494
      %1496 = vmatmul.f32.gmra.mxu0 %v518
      %v1497 = vpop.f32.mrf.mxu0
      %v1498 = vadd.f32 0.0, %v1497
      %1499 = vmatmul.f32.gmra.mxu0 %v523
      %v1500 = vpop.f32.mrf.mxu0
      %v1501 = vadd.f32 0.0, %v1500
      %1502 = vmatmul.f32.gmra.mxu0 %v528
      %v1503 = vpop.f32.mrf.mxu0
      %v1504 = vadd.f32 0.0, %v1503
      %1505 = vmatmul.f32.gmra.mxu0 %v1413
      %v1506 = vpop.f32.mrf.mxu0
      %v1507 = vadd.f32 0.0, %v1506
      %1508 = vmatmul.f32.gmra.mxu0 %v1415
      %v1509 = vpop.f32.mrf.mxu0
      %v1510 = vadd.f32 0.0, %v1509
      %1511 = vmatmul.f32.gmra.mxu0 %v1418
      %v1512 = vpop.f32.mrf.mxu0
      %v1513 = vadd.f32 0.0, %v1512
      %1514 = vmatmul.f32.gmra.mxu0 %v1420
      %v1515 = vpop.f32.mrf.mxu0
      %v1516 = vadd.f32 0.0, %v1515
      %1517 = vdwg.mxu0
      %v1518 = vadd.f32 %v1391, %v1459
      %v1519 = vadd.f32 %v1392, %v1462
      %v1520 = vadd.f32 %v1393, %v1465
      %v1521 = vadd.f32 %v1394, %v1468
      %v1522 = vadd.f32 %v1395, %v1471
      %v1523 = vadd.f32 %v1396, %v1474
      %v1524 = vadd.f32 %v1397, %v1477
      %v1525 = vadd.f32 %v1398, %v1480
      %v1526 = vadd.f32 %v1399, %v1483
      %v1527 = vadd.f32 %v1400, %v1486
      %v1528 = vadd.f32 %v1401, %v1489
      %v1529 = vadd.f32 %v1402, %v1492
      %v1530 = vadd.f32 %v1403, %v1495
      %v1531 = vadd.f32 %v1404, %v1498
      %v1532 = vadd.f32 %v1405, %v1501
      %v1533 = vadd.f32 %v1406, %v1504
      %v1534 = vadd.f32 %v1407, %v1507
      %v1535 = vadd.f32 %v1408, %v1510
      %v1536 = vadd.f32 %v1409, %v1513
      %v1537 = vadd.f32 %v1410, %v1516
      %1538 = vst [vmem:[%s219] sm:$0xff] %v1518
      %1539 = vst [vmem:[%s219 + $0x8] sm:$0xff] %v1519
      %1540 = vst [vmem:[%s219 + $0x10] sm:$0xff] %v1520
      %1541 = vst [vmem:[%s219 + $0x18] sm:$0xff] %v1521
      %1542 = vst [vmem:[%s219 + $0x20] sm:$0xff] %v1522
      %1543 = vst [vmem:[%s219 + $0x28] sm:$0xff] %v1523
      %1544 = vst [vmem:[%s219 + $0x30] sm:$0xff] %v1524
      %1545 = vst [vmem:[%s219 + $0x38] sm:$0xff] %v1525
      %1546 = vst [vmem:[%s219 + $0x40] sm:$0xff] %v1526
      %1547 = vst [vmem:[%s219 + $0x48] sm:$0xff] %v1527
      %1548 = vst [vmem:[%s219 + $0x50] sm:$0xff] %v1528
      %1549 = vst [vmem:[%s219 + $0x58] sm:$0xff] %v1529
      %1550 = vst [vmem:[%s219 + $0x60] sm:$0xff] %v1530
      %1551 = vst [vmem:[%s219 + $0x68] sm:$0xff] %v1531
      %1552 = vst [vmem:[%s219 + $0x70] sm:$0xff] %v1532
      %1553 = vst [vmem:[%s219 + $0x78] sm:$0xff] %v1533
      %1554 = vst [vmem:[%s219 + $0x80] sm:$0xff] %v1534
      %1555 = vst [vmem:[%s219 + $0x88] sm:$0xff] %v1535
      %1556 = vst [vmem:[%s219 + $0x90] sm:$0xff] %v1536
      %1557 = vst [vmem:[%s219 + $0x98] sm:$0xff] %v1537
      %v1558 = vadd.f32 %v1520, %v1521
      %v1559 = vadd.f32 %v1558, %v1522
      %v1560 = vadd.f32 %v1559, %v1523
      %v1561 = vadd.f32 %v1560, %v1524
      %v1562 = vadd.f32 %v1561, %v1525
      %v1563 = vadd.f32 %v1562, %v1526
      %v1564 = vadd.f32 %v1563, %v1527
      %v1565 = vadd.f32 %v1564, %v1528
      %v1566 = vadd.f32 %v1565, %v1529
      %v1567 = vadd.f32 %v1566, %v1530
      %v1568 = vadd.f32 %v1567, %v1531
      %v1569 = vadd.f32 %v1568, %v1532
      %v1570 = vadd.f32 %v1569, %v1533
      %v1571 = vadd.f32 %v1570, %v1534
      %v1572 = vadd.f32 %v1571, %v1535
      %v1573 = vrot.slane %v1572, 4
      %v1574 = vadd.f32 %v1572, %v1573
      %v1575 = vrot.slane %v1574, 2
      %v1576 = vadd.f32 %v1574, %v1575
      %v1577 = vrot.slane %v1576, 1
      %v1578 = vadd.f32 %v1576, %v1577
      %v1579 = vmul.f32 %v1520, %v1520
      %v1580 = vmul.f32 %v1521, %v1521
      %v1581 = vmul.f32 %v1522, %v1522
      %v1582 = vmul.f32 %v1523, %v1523
      %v1583 = vmul.f32 %v1524, %v1524
      %v1584 = vmul.f32 %v1525, %v1525
      %v1585 = vmul.f32 %v1526, %v1526
      %v1586 = vmul.f32 %v1527, %v1527
      %v1587 = vmul.f32 %v1528, %v1528
      %v1588 = vmul.f32 %v1529, %v1529
      %v1589 = vmul.f32 %v1530, %v1530
      %v1590 = vmul.f32 %v1531, %v1531
      %v1591 = vmul.f32 %v1532, %v1532
      %v1592 = vmul.f32 %v1533, %v1533
      %v1593 = vmul.f32 %v1534, %v1534
      %v1594 = vmul.f32 %v1535, %v1535
      %v1595 = vadd.f32 %v1579, %v1580
      %v1596 = vadd.f32 %v1595, %v1581
      %v1597 = vadd.f32 %v1596, %v1582
      %v1598 = vadd.f32 %v1597, %v1583
      %v1599 = vadd.f32 %v1598, %v1584
      %v1600 = vadd.f32 %v1599, %v1585
      %v1601 = vadd.f32 %v1600, %v1586
      %v1602 = vadd.f32 %v1601, %v1587
      %v1603 = vadd.f32 %v1602, %v1588
      %v1604 = vadd.f32 %v1603, %v1589
      %v1605 = vadd.f32 %v1604, %v1590
      %v1606 = vadd.f32 %v1605, %v1591
      %v1607 = vadd.f32 %v1606, %v1592
      %v1608 = vadd.f32 %v1607, %v1593
      %v1609 = vadd.f32 %v1608, %v1594
      %v1610 = vrot.slane %v1609, 4
      %v1611 = vadd.f32 %v1609, %v1610
      %v1612 = vrot.slane %v1611, 2
      %v1613 = vadd.f32 %v1611, %v1612
      %v1614 = vrot.slane %v1613, 1
      %v1615 = vadd.f32 %v1613, %v1614
      %vm1616 = vcmask 1040384
      %v1617 = vsel %vm1616, %v1578, %v1615
      %1618 = vst [vmem:[%s227] sm:$0x3] %v1617
      %p1619 = scmp.lt.s32.totalorder %s19, 1
      %s1620 = scalar_select %p1619, %s19, 1
      %p1621 = scmp.lt.s32.totalorder %s20, 1
      %s1622 = scalar_select %p1621, %s20, 1
      %s1623 = smul.addr %s1622, 20
      %s1624 = smul.addr %s1620, 40
      %s1625 = sadd.s32 %s1623, %s1624
      %s1626 = smul.addr %s1625, 8
      %s1627 = scalar_lea.vmem %s2, %s1626
      %p1628 = scmp.lt.s32.totalorder %s19, 1
      %s1629 = scalar_select %p1628, %s19, 1
      %p1630 = scmp.lt.s32.totalorder %s20, 1
      %s1631 = scalar_select %p1630, %s20, 1
      %s1632 = smul.addr %s1629, 2
      %s1633 = sadd.s32 %s1631, %s1632
      %s1634 = smul.addr %s1633, 2
      %s1635 = scalar_lea.vmem %s3, %s1634
      // Predicated region
      $region29: #{basic_block_forward.3} parent=27 // pred_check
        %p1636 = pneg %p96
      $region30: #{basic_block_forward.3} parent=27 // pred_check_branch
        %1638 = sbr.rel (%p1636) target = $region32
      $region31: #{basic_block_forward.3} parent=27 // pred_region
        _
      $region32: #{basic_block_forward.3} parent=27 // pred_fallthru
        _
      // Predicated region
      $region33: #{basic_block_forward.3} parent=27 // pred_check
        %p1639 = pneg %p124
      $region34: #{basic_block_forward.3} parent=27 // pred_check_branch
        %1641 = sbr.rel (%p1639) target = $region36
      $region35: #{basic_block_forward.3} parent=27 // pred_region
        _
      $region36: #{basic_block_forward.3} parent=27 // pred_fallthru
        _
    $region28: #{basic_block_forward.3} parent=5 // pred_fallthru
      _
    %p1642 = scmp.le.s32.totalorder 2, %s10
    // Predicated region
    $region37: #{basic_block_forward.3} parent=5 // pred_check
      %p1643 = pneg %p1642
    $region38: #{basic_block_forward.3} parent=5 // pred_check_branch
      %1645 = sbr.rel (%p1643) target = $region40
    $region39: #{basic_block_forward.3} parent=5 // pred_region
      %s1646 = ssub.s32 %s10, 2
      // Predicated region
      $region41: #{basic_block_forward.3} parent=39 // pred_check
        %p1647 = pneg %p102
      $region42: #{basic_block_forward.3} parent=39 // pred_check_branch
        %1649 = sbr.rel (%p1647) target = $region44
      $region43: #{basic_block_forward.3} parent=39 // pred_region
        %p1650 = scmp.lt.s32.totalorder %s21, 1
        %s1651 = scalar_select %p1650, %s21, 1
        %p1652 = scmp.lt.s32.totalorder %s22, 1
        %s1653 = scalar_select %p1652, %s22, 1
        %s1654 = smul.addr %s1653, 20
        %s1655 = smul.addr %s1651, 40
        %s1656 = sadd.s32 %s1654, %s1655
        %s1657 = smul.addr %s1656, 8
        %s1658 = scalar_lea.vmem %s2, %s1657
      $region44: #{basic_block_forward.3} parent=39 // pred_fallthru
        _
      // Predicated region
      $region45: #{basic_block_forward.3} parent=39 // pred_check
        %p1659 = pneg %p130
      $region46: #{basic_block_forward.3} parent=39 // pred_check_branch
        %1661 = sbr.rel (%p1659) target = $region48
      $region47: #{basic_block_forward.3} parent=39 // pred_region
        %p1662 = scmp.lt.s32.totalorder %s21, 1
        %s1663 = scalar_select %p1662, %s21, 1
        %p1664 = scmp.lt.s32.totalorder %s22, 1
        %s1665 = scalar_select %p1664, %s22, 1
        %s1666 = smul.addr %s1663, 2
        %s1667 = sadd.s32 %s1665, %s1666
        %s1668 = smul.addr %s1667, 2
        %s1669 = scalar_lea.vmem %s3, %s1668
      $region48: #{basic_block_forward.3} parent=39 // pred_fallthru
        _
    $region40: #{basic_block_forward.3} parent=5 // pred_fallthru
      _
  $region6: #{basic_block_forward.3} parent=0 // loop_footer
    %s14 = sadd.s32 1, %s10
  $region7: #{basic_block_forward.3} parent=0 // loop_footer_branch
    %9 = sbr.rel target = $region3
  $region8: #{basic_block_forward.3} parent=0 // loop_exit
    _

// kernel: basic_block_forward.4
$region0: #{basic_block_forward.4}
  #allocation0 [shape = 'u32[]', space=smem, size = 0x4, offset = 0x4, fixed_abs, tag = 'smem constant byte address 0x4 - core index']
  #allocation1 [shape = 'u32[72,128]{1,0:T(1,128)}', space=vmem, size = 0x9000, scoped, tag = 'internal scratch']
  #allocation2 [shape = 'f32[10,32,128]{2,1,0:T(8,128)}', space=vmem, size = 0x28000, scoped, tag = 'scratch operand']
  %s0 = inlined_call_operand.vmem [shape: f32[2,2,10,16,128], index: 0, kind: input, shape index: {}]
  %s1 = inlined_call_operand.vmem [shape: f32[1,128], index: 1, kind: input, shape index: {}]
  %s2 = inlined_call_operand.vmem [shape: f32[1,128], index: 2, kind: input, shape index: {}]
  %s3 = inlined_call_operand.vmem [shape: f32[1152,128], index: 3, kind: input, shape index: {}]
  %s4 = inlined_call_operand.vmem [shape: f32[2,2,8,16,128], index: 4, kind: output, shape index: {0}]
  %s5 = inlined_call_operand.vmem [shape: f32[2,2,2,128], index: 5, kind: output, shape index: {1}]
  %6 = xla_tuple %s4, %s5
  %s7 = sld [smem:[#allocation0]]
  $region57: #{basic_block_forward.4} parent=0
    _
  %s9 = ssub.s32 1, %s7
  %s10 = scalar_select 0, %s9, %s7
  loop: start=0, step=1, limit=6
  $region2: #{basic_block_forward.4} parent=0 // loop_pre_header
    _
  $region3: #{basic_block_forward.4} parent=0 // loop_header
    %s12 = sphi 0, %s16
    %p13 = scmp.ge.s32.totalorder %s12, 6
    %s19 = sphi 0, %s31
    %s20 = sphi 0, %s27
    %s21 = sphi 0, %s19
    %s22 = sphi 0, %s20
    %s23 = sphi 0, %s21
    %s24 = sphi 0, %s22
    %s36 = sphi 0, %s38
    %s39 = sphi 0, %s36
    %s40 = sphi 0, %s39
    %s56 = sphi 0, %s40
    %s60 = sphi 0, %s60
    %s62 = sphi 0, %s60
    %s63 = sphi 0, %s62
    %s77 = sphi 0, %s63
    %s81 = sphi 0, %s81
    %s83 = sphi 0, %s81
    %s84 = sphi 0, %s83
    %s98 = sphi 0, %s84
    %s102 = sphi 0, %s102
    %s104 = sphi 0, %s102
    %s105 = sphi 0, %s104
    %s119 = sphi 0, %s105
    %s127 = sphi 0, %s129
    %s130 = sphi 0, %s127
    %s131 = sphi 0, %s130
    %s147 = sphi 0, %s131
    %s155 = sphi 0, %s157
    %s158 = sphi 0, %s155
    %s159 = sphi 0, %s158
    %s175 = sphi 0, %s159
  $region4: #{basic_block_forward.4} parent=0 // loop_header_branch
    %15 = sbr.rel (%p13) target = $region8
  $region5: #{basic_block_forward.4} parent=0 // loop_body
    %s17 = ssub.s32 %s12, 1
    %s18 = ssub.s32 %s12, 2
    %s25 = sadd.s32 1, %s20
    %p26 = scmp.ge.s32.totalorder %s25, 2
    %s27 = scalar_select %p26, 0, %s25
    %s28 = sadd.s32 1, %s19
    %s29 = scalar_select %p26, %s28, %s19
    %p30 = scmp.ge.s32.totalorder %s29, 2
    %s31 = scalar_select %p30, 0, %s29
    %s32 = ssub.s32 %s19, %s31
    %s33 = ssub.s32 %s20, %s27
    %s34 = sor.u32 %s32, %s33
    %p35 = scmp.eq.s32.totalorder %s34, 0
    %s37 = sadd.s32 %s36, 1
    %s38 = scalar_select %p35, %s36, %s37
    %p41 = pneg %p35
    %p42 = scmp.eq.s32.totalorder %s12, 3
    %p43 = por %p41, %p42
    %p44 = scmp.ne.s32.totalorder %s36, %s39
    %p45 = scmp.eq.s32.totalorder %s12, 0
    %p46 = por %p44, %p45
    %p47 = scmp.ne.s32.totalorder %s36, %s39
    %p48 = scmp.eq.s32.totalorder %s17, 3
    %p49 = por %p47, %p48
    %p50 = scmp.ne.s32.totalorder %s39, %s40
    %p51 = scmp.eq.s32.totalorder %s17, 0
    %p52 = por %p50, %p51
    %p53 = scmp.ne.s32.totalorder %s39, %s40
    %p54 = scmp.eq.s32.totalorder %s18, 3
    %p55 = por %p53, %p54
    %p57 = scmp.ne.s32.totalorder %s40, %s56
    %p58 = scmp.eq.s32.totalorder %s18, 0
    %p59 = por %p57, %p58
    %s61 = sadd.s32 %s60, 1
    %p64 = scmp.eq.s32.totalorder %s12, 3
    %p65 = scmp.ne.s32.totalorder %s60, %s62
    %p66 = scmp.eq.s32.totalorder %s12, 0
    %p67 = por %p65, %p66
    %p68 = scmp.ne.s32.totalorder %s60, %s62
    %p69 = scmp.eq.s32.totalorder %s17, 3
    %p70 = por %p68, %p69
    %p71 = scmp.ne.s32.totalorder %s62, %s63
    %p72 = scmp.eq.s32.totalorder %s17, 0
    %p73 = por %p71, %p72
    %p74 = scmp.ne.s32.totalorder %s62, %s63
    %p75 = scmp.eq.s32.totalorder %s18, 3
    %p76 = por %p74, %p75
    %p78 = scmp.ne.s32.totalorder %s63, %s77
    %p79 = scmp.eq.s32.totalorder %s18, 0
    %p80 = por %p78, %p79
    %s82 = sadd.s32 %s81, 1
    %p85 = scmp.eq.s32.totalorder %s12, 3
    %p86 = scmp.ne.s32.totalorder %s81, %s83
    %p87 = scmp.eq.s32.totalorder %s12, 0
    %p88 = por %p86, %p87
    %p89 = scmp.ne.s32.totalorder %s81, %s83
    %p90 = scmp.eq.s32.totalorder %s17, 3
    %p91 = por %p89, %p90
    %p92 = scmp.ne.s32.totalorder %s83, %s84
    %p93 = scmp.eq.s32.totalorder %s17, 0
    %p94 = por %p92, %p93
    %p95 = scmp.ne.s32.totalorder %s83, %s84
    %p96 = scmp.eq.s32.totalorder %s18, 3
    %p97 = por %p95, %p96
    %p99 = scmp.ne.s32.totalorder %s84, %s98
    %p100 = scmp.eq.s32.totalorder %s18, 0
    %p101 = por %p99, %p100
    %s103 = sadd.s32 %s102, 1
    %p106 = scmp.eq.s32.totalorder %s12, 3
    %p107 = scmp.ne.s32.totalorder %s102, %s104
    %p108 = scmp.eq.s32.totalorder %s12, 0
    %p109 = por %p107, %p108
    %p110 = scmp.ne.s32.totalorder %s102, %s104
    %p111 = scmp.eq.s32.totalorder %s17, 3
    %p112 = por %p110, %p111
    %p113 = scmp.ne.s32.totalorder %s104, %s105
    %p114 = scmp.eq.s32.totalorder %s17, 0
    %p115 = por %p113, %p114
    %p116 = scmp.ne.s32.totalorder %s104, %s105
    %p117 = scmp.eq.s32.totalorder %s18, 3
    %p118 = por %p116, %p117
    %p120 = scmp.ne.s32.totalorder %s105, %s119
    %p121 = scmp.eq.s32.totalorder %s18, 0
    %p122 = por %p120, %p121
    %s123 = ssub.s32 %s19, %s31
    %s124 = ssub.s32 %s20, %s27
    %s125 = sor.u32 %s123, %s124
    %p126 = scmp.eq.s32.totalorder %s125, 0
    %s128 = sadd.s32 %s127, 1
    %s129 = scalar_select %p126, %s127, %s128
    %p132 = pneg %p126
    %p133 = scmp.eq.s32.totalorder %s12, 3
    %p134 = por %p132, %p133
    %p135 = scmp.ne.s32.totalorder %s127, %s130
    %p136 = scmp.eq.s32.totalorder %s12, 0
    %p137 = por %p135, %p136
    %p138 = scmp.ne.s32.totalorder %s127, %s130
    %p139 = scmp.eq.s32.totalorder %s17, 3
    %p140 = por %p138, %p139
    %p141 = scmp.ne.s32.totalorder %s130, %s131
    %p142 = scmp.eq.s32.totalorder %s17, 0
    %p143 = por %p141, %p142
    %p144 = scmp.ne.s32.totalorder %s130, %s131
    %p145 = scmp.eq.s32.totalorder %s18, 3
    %p146 = por %p144, %p145
    %p148 = scmp.ne.s32.totalorder %s131, %s147
    %p149 = scmp.eq.s32.totalorder %s18, 0
    %p150 = por %p148, %p149
    %s151 = ssub.s32 %s19, %s31
    %s152 = ssub.s32 %s20, %s27
    %s153 = sor.u32 %s151, %s152
    %p154 = scmp.eq.s32.totalorder %s153, 0
    %s156 = sadd.s32 %s155, 1
    %s157 = scalar_select %p154, %s155, %s156
    %p160 = pneg %p154
    %p161 = scmp.eq.s32.totalorder %s12, 3
    %p162 = por %p160, %p161
    %p163 = scmp.ne.s32.totalorder %s155, %s158
    %p164 = scmp.eq.s32.totalorder %s12, 0
    %p165 = por %p163, %p164
    %p166 = scmp.ne.s32.totalorder %s155, %s158
    %p167 = scmp.eq.s32.totalorder %s17, 3
    %p168 = por %p166, %p167
    %p169 = scmp.ne.s32.totalorder %s158, %s159
    %p170 = scmp.eq.s32.totalorder %s17, 0
    %p171 = por %p169, %p170
    %p172 = scmp.ne.s32.totalorder %s158, %s159
    %p173 = scmp.eq.s32.totalorder %s18, 3
    %p174 = por %p172, %p173
    %p176 = scmp.ne.s32.totalorder %s159, %s175
    %p177 = scmp.eq.s32.totalorder %s18, 0
    %p178 = por %p176, %p177
    %p179 = scmp.le.s32.totalorder 1, %s12
    %p180 = scmp.lt.s32.totalorder %s12, 5
    %p181 = pnand %p179, %p180
    %p182 = pneg %p181
    // Predicated region
    $region9: #{basic_block_forward.4} parent=5 // pred_check
      _
    $region10: #{basic_block_forward.4} parent=5 // pred_check_branch
      %184 = sbr.rel (%p181) target = $region12
    $region11: #{basic_block_forward.4} parent=5 // pred_region
      %s185 = ssub.s32 %s12, 1
      // Predicated region
      $region13: #{basic_block_forward.4} parent=11 // pred_check
        %p186 = pneg %p73
      $region14: #{basic_block_forward.4} parent=11 // pred_check_branch
        %188 = sbr.rel (%p186) target = $region16
      $region15: #{basic_block_forward.4} parent=11 // pred_region
        _
      $region16: #{basic_block_forward.4} parent=11 // pred_fallthru
        _
      // Predicated region
      $region17: #{basic_block_forward.4} parent=11 // pred_check
        %p189 = pneg %p94
      $region18: #{basic_block_forward.4} parent=11 // pred_check_branch
        %191 = sbr.rel (%p189) target = $region20
      $region19: #{basic_block_forward.4} parent=11 // pred_region
        _
      $region20: #{basic_block_forward.4} parent=11 // pred_fallthru
        _
      // Predicated region
      $region21: #{basic_block_forward.4} parent=11 // pred_check
        %p192 = pneg %p115
      $region22: #{basic_block_forward.4} parent=11 // pred_check_branch
        %194 = sbr.rel (%p192) target = $region24
      $region23: #{basic_block_forward.4} parent=11 // pred_region
        _
      $region24: #{basic_block_forward.4} parent=11 // pred_fallthru
        _
    $region12: #{basic_block_forward.4} parent=5 // pred_fallthru
      _
    %p195 = scmp.lt.s32.totalorder %s12, 4
    // Predicated region
    $region25: #{basic_block_forward.4} parent=5 // pred_check
      %p196 = pneg %p195
    $region26: #{basic_block_forward.4} parent=5 // pred_check_branch
      %198 = sbr.rel (%p196) target = $region28
    $region27: #{basic_block_forward.4} parent=5 // pred_region
      // Predicated region
      $region29: #{basic_block_forward.4} parent=27 // pred_check
        %p199 = pneg %p46
      $region30: #{basic_block_forward.4} parent=27 // pred_check_branch
        %201 = sbr.rel (%p199) target = $region32
      $region31: #{basic_block_forward.4} parent=27 // pred_region
        %p202 = scmp.lt.s32.totalorder %s19, 1
        %s203 = scalar_select %p202, %s19, 1
        %p204 = scmp.lt.s32.totalorder %s20, 1
        %s205 = scalar_select %p204, %s20, 1
        %s206 = smul.addr %s205, 20
        %s207 = smul.addr %s203, 40
        %s208 = sadd.s32 %s206, %s207
        %s209 = smul.addr %s208, 8
        %s210 = scalar_lea.vmem %s0, %s209
      $region32: #{basic_block_forward.4} parent=27 // pred_fallthru
        _
    $region28: #{basic_block_forward.4} parent=5 // pred_fallthru
      _
    %p211 = scmp.le.s32.totalorder 1, %s12
    %p212 = scmp.lt.s32.totalorder %s12, 5
    %p213 = pnand %p211, %p212
    %p214 = pneg %p213
    // Predicated region
    $region33: #{basic_block_forward.4} parent=5 // pred_check
      _
    $region34: #{basic_block_forward.4} parent=5 // pred_check_branch
      %216 = sbr.rel (%p213) target = $region36
    $region35: #{basic_block_forward.4} parent=5 // pred_region
      %s217 = ssub.s32 %s12, 1
      %p218 = scmp.lt.s32.totalorder %s21, 1
      %s219 = scalar_select %p218, %s21, 1
      %p220 = scmp.lt.s32.totalorder %s22, 1
      %s221 = scalar_select %p220, %s22, 1
      %s222 = smul.addr %s221, 20
      %s223 = smul.addr %s219, 40
      %s224 = sadd.s32 %s222, %s223
      %s225 = smul.addr %s224, 8
      %s226 = scalar_lea.vmem %s0, %s225
      %p227 = pneg %p52
      %p228 = pneg %p49
      %p229 = pneg %p73
      %p230 = pneg %p70
      %p231 = pneg %p94
      %p232 = pneg %p91
      %p233 = pneg %p115
      %p234 = pneg %p112
      %p235 = pneg %p143
      %p236 = pneg %p140
      %p237 = scmp.lt.s32.totalorder %s21, 1
      %s238 = scalar_select %p237, %s21, 1
      %p239 = scmp.lt.s32.totalorder %s22, 1
      %s240 = scalar_select %p239, %s22, 1
      %s241 = smul.addr %s240, 16
      %s242 = smul.addr %s238, 32
      %s243 = sadd.s32 %s241, %s242
      %s244 = smul.addr %s243, 8
      %s245 = scalar_lea.vmem %s4, %s244
      %p246 = pneg %p171
      %p247 = pneg %p168
      %p248 = scmp.lt.s32.totalorder %s21, 1
      %s249 = scalar_select %p248, %s21, 1
      %p250 = scmp.lt.s32.totalorder %s22, 1
      %s251 = scalar_select %p250, %s22, 1
      %s252 = smul.addr %s249, 2
      %s253 = sadd.s32 %s251, %s252
      %s254 = smul.addr %s253, 2
      %s255 = scalar_lea.vmem %s5, %s254
      %p256 = scmp.lt.s32.totalorder %s21, 1
      %s257 = scalar_select %p256, %s21, 1
      %p258 = scmp.lt.s32.totalorder %s22, 1
      %s259 = scalar_select %p258, %s22, 1
      %s260 = smul.addr %s259, 20
      %s261 = smul.addr %s257, 40
      %s262 = sadd.s32 %s260, %s261
      %s263 = smul.addr %s262, 8
      %s264 = scalar_lea.vmem %s0, %s263
      %p265 = scmp.lt.s32.totalorder %s21, 1
      %s266 = scalar_select %p265, %s21, 1
      %p267 = scmp.lt.s32.totalorder %s22, 1
      %s268 = scalar_select %p267, %s22, 1
      %s269 = smul.addr %s268, 16
      %s270 = smul.addr %s266, 32
      %s271 = sadd.s32 %s269, %s270
      %s272 = smul.addr %s271, 8
      %s273 = scalar_lea.vmem %s4, %s272
      %p274 = scmp.lt.s32.totalorder %s21, 1
      %s275 = scalar_select %p274, %s21, 1
      %p276 = scmp.lt.s32.totalorder %s22, 1
      %s277 = scalar_select %p276, %s22, 1
      %s278 = smul.addr %s275, 2
      %s279 = sadd.s32 %s277, %s278
      %s280 = smul.addr %s279, 2
      %s281 = scalar_lea.vmem %s5, %s280
      %v282 = vld [vmem:[%s1] sm:$0x1]
      %v283 = vld [vmem:[%s2] sm:$0x1]
      %v284 = vld [vmem:[%s264] sm:$0xff]
      %v285 = vld [vmem:[%s264 + $0x8] sm:$0xff]
      %v286 = vld [vmem:[%s264 + $0x10] sm:$0xff]
      %v287 = vld [vmem:[%s264 + $0x18] sm:$0xff]
      %v288 = vld [vmem:[%s264 + $0x20] sm:$0xff]
      %v289 = vld [vmem:[%s264 + $0x28] sm:$0xff]
      %v290 = vld [vmem:[%s264 + $0x30] sm:$0xff]
      %v291 = vld [vmem:[%s264 + $0x38] sm:$0xff]
      %v292 = vld [vmem:[%s264 + $0x40] sm:$0xff]
      %v293 = vld [vmem:[%s264 + $0x48] sm:$0xff]
      %v294 = vld [vmem:[%s264 + $0x50] sm:$0xff]
      %v295 = vld [vmem:[%s264 + $0x58] sm:$0xff]
      %v296 = vld [vmem:[%s264 + $0x60] sm:$0xff]
      %v297 = vld [vmem:[%s264 + $0x68] sm:$0xff]
      %v298 = vld [vmem:[%s264 + $0x70] sm:$0xff]
      %v299 = vld [vmem:[%s264 + $0x78] sm:$0xff]
      %v300 = vld [vmem:[%s264 + $0x80] sm:$0xff]
      %v301 = vld [vmem:[%s264 + $0x88] sm:$0xff]
      %v302 = vld [vmem:[%s264 + $0x90] sm:$0xff]
      %v303 = vld [vmem:[%s264 + $0x98] sm:$0xff]
      %v305 = vperm.slane %v282, 0
      %v307 = vmul.f32 %v284, %v305
      %v308 = vmul.f32 %v285, %v305
      %v309 = vmul.f32 %v286, %v305
      %v310 = vmul.f32 %v287, %v305
      %v311 = vmul.f32 %v288, %v305
      %v312 = vmul.f32 %v289, %v305
      %v313 = vmul.f32 %v290, %v305
      %v314 = vmul.f32 %v291, %v305
      %v315 = vmul.f32 %v292, %v305
      %v316 = vmul.f32 %v293, %v305
      %v317 = vmul.f32 %v294, %v305
      %v318 = vmul.f32 %v295, %v305
      %v319 = vmul.f32 %v296, %v305
      %v320 = vmul.f32 %v297, %v305
      %v321 = vmul.f32 %v298, %v305
      %v322 = vmul.f32 %v299, %v305
      %v323 = vmul.f32 %v300, %v305
      %v324 = vmul.f32 %v301, %v305
      %v325 = vmul.f32 %v302, %v305
      %v326 = vmul.f32 %v303, %v305
      %v328 = vperm.slane %v283, 0
      %v330 = vadd.f32 %v307, %v328
      %v331 = vadd.f32 %v308, %v328
      %v332 = vadd.f32 %v309, %v328
      %v333 = vadd.f32 %v310, %v328
      %v334 = vadd.f32 %v311, %v328
      %v335 = vadd.f32 %v312, %v328
      %v336 = vadd.f32 %v313, %v328
      %v337 = vadd.f32 %v314, %v328
      %v338 = vadd.f32 %v315, %v328
      %v339 = vadd.f32 %v316, %v328
      %v340 = vadd.f32 %v317, %v328
      %v341 = vadd.f32 %v318, %v328
      %v342 = vadd.f32 %v319, %v328
      %v343 = vadd.f32 %v320, %v328
      %v344 = vadd.f32 %v321, %v328
      %v345 = vadd.f32 %v322, %v328
      %v346 = vadd.f32 %v323, %v328
      %v347 = vadd.f32 %v324, %v328
      %v348 = vadd.f32 %v325, %v328
      %v349 = vadd.f32 %v326, %v328
      %v350 = vmax.f32 %v330, 0.0
      %v351 = vmax.f32 %v331, 0.0
      %v352 = vmax.f32 %v332, 0.0
      %v353 = vmax.f32 %v333, 0.0
      %v354 = vmax.f32 %v334, 0.0
      %v355 = vmax.f32 %v335, 0.0
      %v356 = vmax.f32 %v336, 0.0
      %v357 = vmax.f32 %v337, 0.0
      %v358 = vmax.f32 %v338, 0.0
      %v359 = vmax.f32 %v339, 0.0
      %v360 = vmax.f32 %v340, 0.0
      %v361 = vmax.f32 %v341, 0.0
      %v362 = vmax.f32 %v342, 0.0
      %v363 = vmax.f32 %v343, 0.0
      %v364 = vmax.f32 %v344, 0.0
      %v365 = vmax.f32 %v345, 0.0
      %v366 = vmax.f32 %v346, 0.0
      %v367 = vmax.f32 %v347, 0.0
      %v368 = vmax.f32 %v348, 0.0
      %v369 = vmax.f32 %v349, 0.0
      %370 = vst [vmem:[#allocation2 + $0x7] sm:$0x1] 0.0
      %371 = vst [vmem:[#allocation2 + $0x27] sm:$0x1] 0.0
      %372 = vst [vmem:[#allocation2 + $0x47] sm:$0x1] 0.0
      %373 = vst [vmem:[#allocation2 + $0x67] sm:$0x1] 0.0
      %374 = vst [vmem:[#allocation2 + $0x87] sm:$0x1] 0.0
      %375 = vst [vmem:[#allocation2 + $0xa7] sm:$0x1] 0.0
      %376 = vst [vmem:[#allocation2 + $0xc7] sm:$0x1] 0.0
      %377 = vst [vmem:[#allocation2 + $0xe7] sm:$0x1] 0.0
      %378 = vst [vmem:[#allocation2 + $0x107] sm:$0x1] 0.0
      %379 = vst [vmem:[#allocation2 + $0x127] sm:$0x1] 0.0
      %380 = vst [vmem:[#allocation2 + $0x18] sm:$0x1] 0.0
      %381 = vst [vmem:[#allocation2 + $0x38] sm:$0x1] 0.0
      %382 = vst [vmem:[#allocation2 + $0x58] sm:$0x1] 0.0
      %383 = vst [vmem:[#allocation2 + $0x78] sm:$0x1] 0.0
      %384 = vst [vmem:[#allocation2 + $0x98] sm:$0x1] 0.0
      %385 = vst [vmem:[#allocation2 + $0xb8] sm:$0x1] 0.0
      %386 = vst [vmem:[#allocation2 + $0xd8] sm:$0x1] 0.0
      %387 = vst [vmem:[#allocation2 + $0xf8] sm:$0x1] 0.0
      %388 = vst [vmem:[#allocation2 + $0x118] sm:$0x1] 0.0
      %389 = vst [vmem:[#allocation2 + $0x138] sm:$0x1] 0.0
      %p390 = scmp.gt.s32.totalorder %s22, 0
      %s391 = scalar_select %p390, 1, 0
      %s392 = scvt.s32.f32 %s391
      %p393 = scmp.lt.s32.totalorder %s22, 1
      %s394 = scalar_select %p393, 1, 0
      %s395 = scvt.s32.f32 %s394
      %v396 = vstv %s392
      %v397 = vmul.f32 %v350, %v396
      %v398 = vmul.f32 %v351, %v396
      %399 = vst [vmem:[#allocation2 + $0x8] sm:$0xff] %v397
      %400 = vst [vmem:[#allocation2 + $0x10] sm:$0xff] %v398
      %v401 = vstv %s395
      %v402 = vmul.f32 %v368, %v401
      %v403 = vmul.f32 %v369, %v401
      %s404 = scalar_lea.vmem [#allocation2], 288
      %405 = vst [vmem:[%s404 + $0x8] sm:$0xff] %v402
      %406 = vst [vmem:[%s404 + $0x10] sm:$0xff] %v403
      %s407 = scalar_lea.vmem [#allocation2], 32
      %408 = vst [vmem:[%s407 + $0x8] sm:$0xff] %v352
      %409 = vst [vmem:[%s407 + $0x10] sm:$0xff] %v353
      %410 = vst [vmem:[%s407 + $0x28] sm:$0xff] %v354
      %411 = vst [vmem:[%s407 + $0x30] sm:$0xff] %v355
      %412 = vst [vmem:[%s407 + $0x48] sm:$0xff] %v356
      %413 = vst [vmem:[%s407 + $0x50] sm:$0xff] %v357
      %414 = vst [vmem:[%s407 + $0x68] sm:$0xff] %v358
      %415 = vst [vmem:[%s407 + $0x70] sm:$0xff] %v359
      %416 = vst [vmem:[%s407 + $0x88] sm:$0xff] %v360
      %417 = vst [vmem:[%s407 + $0x90] sm:$0xff] %v361
      %418 = vst [vmem:[%s407 + $0xa8] sm:$0xff] %v362
      %419 = vst [vmem:[%s407 + $0xb0] sm:$0xff] %v363
      %420 = vst [vmem:[%s407 + $0xc8] sm:$0xff] %v364
      %421 = vst [vmem:[%s407 + $0xd0] sm:$0xff] %v365
      %422 = vst [vmem:[%s407 + $0xe8] sm:$0xff] %v366
      %423 = vst [vmem:[%s407 + $0xf0] sm:$0xff] %v367
      %v424 = vld [vmem:[#allocation2 + $0x7] sm:$0xff]
      %v425 = vld [vmem:[#allocation2 + $0xf] sm:$0xff]
      %v426 = vld [vmem:[#allocation2 + $0x27] sm:$0xff]
      %v427 = vld [vmem:[#allocation2 + $0x2f] sm:$0xff]
      %v428 = vld [vmem:[#allocation2 + $0x47] sm:$0xff]
      %v429 = vld [vmem:[#allocation2 + $0x4f] sm:$0xff]
      %v430 = vld [vmem:[#allocation2 + $0x67] sm:$0xff]
      %v431 = vld [vmem:[#allocation2 + $0x6f] sm:$0xff]
      %v432 = vld [vmem:[#allocation2 + $0x87] sm:$0xff]
      %v433 = vld [vmem:[#allocation2 + $0x8f] sm:$0xff]
      %v434 = vld [vmem:[#allocation2 + $0xa7] sm:$0xff]
      %v435 = vld [vmem:[#allocation2 + $0xaf] sm:$0xff]
      %v436 = vld [vmem:[#allocation2 + $0xc7] sm:$0xff]
      %v437 = vld [vmem:[#allocation2 + $0xcf] sm:$0xff]
      %v438 = vld [vmem:[#allocation2 + $0xe7] sm:$0xff]
      %v439 = vld [vmem:[#allocation2 + $0xef] sm:$0xff]
      %v440 = vld [vmem:[#allocation2 + $0x8] sm:$0xff]
      %v441 = vld [vmem:[#allocation2 + $0x10] sm:$0xff]
      %v442 = vld [vmem:[#allocation2 + $0x28] sm:$0xff]
      %v443 = vld [vmem:[#allocation2 + $0x30] sm:$0xff]
      %v444 = vld [vmem:[#allocation2 + $0x48] sm:$0xff]
      %v445 = vld [vmem:[#allocation2 + $0x50] sm:$0xff]
      %v446 = vld [vmem:[#allocation2 + $0x68] sm:$0xff]
      %v447 = vld [vmem:[#allocation2 + $0x70] sm:$0xff]
      %v448 = vld [vmem:[#allocation2 + $0x88] sm:$0xff]
      %v449 = vld [vmem:[#allocation2 + $0x90] sm:$0xff]
      %v450 = vld [vmem:[#allocation2 + $0xa8] sm:$0xff]
      %v451 = vld [vmem:[#allocation2 + $0xb0] sm:$0xff]
      %v452 = vld [vmem:[#allocation2 + $0xc8] sm:$0xff]
      %v453 = vld [vmem:[#allocation2 + $0xd0] sm:$0xff]
      %v454 = vld [vmem:[#allocation2 + $0xe8] sm:$0xff]
      %v455 = vld [vmem:[#allocation2 + $0xf0] sm:$0xff]
      %v456 = vld [vmem:[%s3] sm:$0xff]
      %v457 = vld [vmem:[%s3 + $0x8] sm:$0xff]
      %v458 = vld [vmem:[%s3 + $0x10] sm:$0xff]
      %v459 = vld [vmem:[%s3 + $0x18] sm:$0xff]
      %v460 = vld [vmem:[%s3 + $0x20] sm:$0xff]
      %v461 = vld [vmem:[%s3 + $0x28] sm:$0xff]
      %v462 = vld [vmem:[%s3 + $0x30] sm:$0xff]
      %v463 = vld [vmem:[%s3 + $0x38] sm:$0xff]
      %v464 = vld [vmem:[%s3 + $0x40] sm:$0xff]
      %v465 = vld [vmem:[%s3 + $0x48] sm:$0xff]
      %v466 = vld [vmem:[%s3 + $0x50] sm:$0xff]
      %v467 = vld [vmem:[%s3 + $0x58] sm:$0xff]
      %v468 = vld [vmem:[%s3 + $0x60] sm:$0xff]
      %v469 = vld [vmem:[%s3 + $0x68] sm:$0xff]
      %v470 = vld [vmem:[%s3 + $0x70] sm:$0xff]
      %v471 = vld [vmem:[%s3 + $0x78] sm:$0xff]
      %v472 = vld [vmem:[%s3 + $0x80] sm:$0xff]
      %v473 = vld [vmem:[%s3 + $0x88] sm:$0xff]
      %v474 = vld [vmem:[%s3 + $0x90] sm:$0xff]
      %v475 = vld [vmem:[%s3 + $0x98] sm:$0xff]
      %v476 = vld [vmem:[%s3 + $0xa0] sm:$0xff]
      %v477 = vld [vmem:[%s3 + $0xa8] sm:$0xff]
      %v478 = vld [vmem:[%s3 + $0xb0] sm:$0xff]
      %v479 = vld [vmem:[%s3 + $0xb8] sm:$0xff]
      %v480 = vld [vmem:[%s3 + $0xc0] sm:$0xff]
      %v481 = vld [vmem:[%s3 + $0xc8] sm:$0xff]
      %v482 = vld [vmem:[%s3 + $0xd0] sm:$0xff]
      %v483 = vld [vmem:[%s3 + $0xd8] sm:$0xff]
      %v484 = vld [vmem:[%s3 + $0xe0] sm:$0xff]
      %v485 = vld [vmem:[%s3 + $0xe8] sm:$0xff]
      %v486 = vld [vmem:[%s3 + $0xf0] sm:$0xff]
      %v487 = vld [vmem:[%s3 + $0xf8] sm:$0xff]
      %v488 = vld [vmem:[#allocation2 + $0x9] sm:$0xff]
      %v489 = vld [vmem:[#allocation2 + $0x11] sm:$0xff]
      %v490 = vld [vmem:[#allocation2 + $0x29] sm:$0xff]
      %v491 = vld [vmem:[#allocation2 + $0x31] sm:$0xff]
      %v492 = vld [vmem:[#allocation2 + $0x49] sm:$0xff]
      %v493 = vld [vmem:[#allocation2 + $0x51] sm:$0xff]
      %v494 = vld [vmem:[#allocation2 + $0x69] sm:$0xff]
      %v495 = vld [vmem:[#allocation2 + $0x71] sm:$0xff]
      %v496 = vld [vmem:[#allocation2 + $0x89] sm:$0xff]
      %v497 = vld [vmem:[#allocation2 + $0x91] sm:$0xff]
      %v498 = vld [vmem:[#allocation2 + $0xa9] sm:$0xff]
      %v499 = vld [vmem:[#allocation2 + $0xb1] sm:$0xff]
      %v500 = vld [vmem:[#allocation2 + $0xc9] sm:$0xff]
      %v501 = vld [vmem:[#allocation2 + $0xd1] sm:$0xff]
      %v502 = vld [vmem:[#allocation2 + $0xe9] sm:$0xff]
      %v503 = vld [vmem:[#allocation2 + $0xf1] sm:$0xff]
      %v504 = vld [vmem:[%s407 + $0x7] sm:$0xff]
      %v505 = vld [vmem:[%s407 + $0xf] sm:$0xff]
      %v506 = vld [vmem:[%s407 + $0x27] sm:$0xff]
      %v507 = vld [vmem:[%s407 + $0x2f] sm:$0xff]
      %v508 = vld [vmem:[%s407 + $0x47] sm:$0xff]
      %v509 = vld [vmem:[%s407 + $0x4f] sm:$0xff]
      %v510 = vld [vmem:[%s407 + $0x67] sm:$0xff]
      %v511 = vld [vmem:[%s407 + $0x6f] sm:$0xff]
      %v512 = vld [vmem:[%s407 + $0x87] sm:$0xff]
      %v513 = vld [vmem:[%s407 + $0x8f] sm:$0xff]
      %v514 = vld [vmem:[%s407 + $0xa7] sm:$0xff]
      %v515 = vld [vmem:[%s407 + $0xaf] sm:$0xff]
      %v516 = vld [vmem:[%s407 + $0xc7] sm:$0xff]
      %v517 = vld [vmem:[%s407 + $0xcf] sm:$0xff]
      %v518 = vld [vmem:[%s407 + $0xe7] sm:$0xff]
      %v519 = vld [vmem:[%s407 + $0xef] sm:$0xff]
      %v520 = vld [vmem:[%s3 + $0x100] sm:$0xff]
      %v521 = vld [vmem:[%s3 + $0x108] sm:$0xff]
      %v522 = vld [vmem:[%s3 + $0x110] sm:$0xff]
      %v523 = vld [vmem:[%s3 + $0x118] sm:$0xff]
      %v524 = vld [vmem:[%s3 + $0x120] sm:$0xff]
      %v525 = vld [vmem:[%s3 + $0x128] sm:$0xff]
      %v526 = vld [vmem:[%s3 + $0x130] sm:$0xff]
      %v527 = vld [vmem:[%s3 + $0x138] sm:$0xff]
      %v528 = vld [vmem:[%s3 + $0x140] sm:$0xff]
      %v529 = vld [vmem:[%s3 + $0x148] sm:$0xff]
      %v530 = vld [vmem:[%s3 + $0x150] sm:$0xff]
      %v531 = vld [vmem:[%s3 + $0x158] sm:$0xff]
      %v532 = vld [vmem:[%s3 + $0x160] sm:$0xff]
      %v533 = vld [vmem:[%s3 + $0x168] sm:$0xff]
      %v534 = vld [vmem:[%s3 + $0x170] sm:$0xff]
      %v535 = vld [vmem:[%s3 + $0x178] sm:$0xff]
      %v536 = vld [vmem:[%s3 + $0x180] sm:$0xff]
      %v537 = vld [vmem:[%s3 + $0x188] sm:$0xff]
      %v538 = vld [vmem:[%s3 + $0x190] sm:$0xff]
      %v539 = vld [vmem:[%s3 + $0x198] sm:$0xff]
      %v540 = vld [vmem:[%s3 + $0x1a0] sm:$0xff]
      %v541 = vld [vmem:[%s3 + $0x1a8] sm:$0xff]
      %v542 = vld [vmem:[%s3 + $0x1b0] sm:$0xff]
      %v543 = vld [vmem:[%s3 + $0x1b8] sm:$0xff]
      %v544 = vld [vmem:[%s3 + $0x1c0] sm:$0xff]
      %v545 = vld [vmem:[%s3 + $0x1c8] sm:$0xff]
      %v546 = vld [vmem:[%s3 + $0x1d0] sm:$0xff]
      %v547 = vld [vmem:[%s3 + $0x1d8] sm:$0xff]
      %v548 = vld [vmem:[%s3 + $0x1e0] sm:$0xff]
      %v549 = vld [vmem:[%s3 + $0x1e8] sm:$0xff]
      %v550 = vld [vmem:[%s3 + $0x1f0] sm:$0xff]
      %v551 = vld [vmem:[%s3 + $0x1f8] sm:$0xff]
      %552 = vmatpush.msra.mxu0 %v535
      %553 = vmatpush.msra.mxu0 %v534
      %554 = vmatpush.msra.mxu0 %v533
      %555 = vmatpush.msra.mxu0 %v532
      %556 = vmatpush.msra.mxu0 %v531
      %557 = vmatpush.msra.mxu0 %v530
      %558 = vmatpush.msra.mxu0 %v529
      %559 = vmatpush.msra.mxu0 %v528
      %560 = vmatpush.msra.mxu0 %v527
      %561 = vmatpush.msra.mxu0 %v526
      %562 = vmatpush.msra.mxu0 %v525
      %563 = vmatpush.msra.mxu0 %v524
      %564 = vmatpush.msra.mxu0 %v523
      %565 = vmatpush.msra.mxu0 %v522
      %566 = vmatpush.msra.mxu0 %v521
      %567 = vmatpush.msra.mxu0 %v520
      %568 = vmatmul.f32.gmra.mxu0 %v488
      %v569 = vpop.f32.mrf.mxu0
      %v570 = vadd.f32 0.0, %v569
      %571 = vmatmul.f32.gmra.mxu0 %v489
      %v572 = vpop.f32.mrf.mxu0
      %v573 = vadd.f32 0.0, %v572
      %574 = vmatmul.f32.gmra.mxu0 %v490
      %v575 = vpop.f32.mrf.mxu0
      %v576 = vadd.f32 0.0, %v575
      %577 = vmatmul.f32.gmra.mxu0 %v491
      %v578 = vpop.f32.mrf.mxu0
      %v579 = vadd.f32 0.0, %v578
      %580 = vmatmul.f32.gmra.mxu0 %v492
      %v581 = vpop.f32.mrf.mxu0
      %v582 = vadd.f32 0.0, %v581
      %583 = vmatmul.f32.gmra.mxu0 %v493
      %v584 = vpop.f32.mrf.mxu0
      %v585 = vadd.f32 0.0, %v584
      %586 = vmatmul.f32.gmra.mxu0 %v494
      %v587 = vpop.f32.mrf.mxu0
      %v588 = vadd.f32 0.0, %v587
      %589 = vmatmul.f32.gmra.mxu0 %v495
      %v590 = vpop.f32.mrf.mxu0
      %v591 = vadd.f32 0.0, %v590
      %592 = vmatmul.f32.gmra.mxu0 %v496
      %v593 = vpop.f32.mrf.mxu0
      %v594 = vadd.f32 0.0, %v593
      %595 = vmatmul.f32.gmra.mxu0 %v497
      %v596 = vpop.f32.mrf.mxu0
      %v597 = vadd.f32 0.0, %v596
      %598 = vmatmul.f32.gmra.mxu0 %v498
      %v599 = vpop.f32.mrf.mxu0
      %v600 = vadd.f32 0.0, %v599
      %601 = vmatmul.f32.gmra.mxu0 %v499
      %v602 = vpop.f32.mrf.mxu0
      %v603 = vadd.f32 0.0, %v602
      %604 = vmatmul.f32.gmra.mxu0 %v500
      %v605 = vpop.f32.mrf.mxu0
      %v606 = vadd.f32 0.0, %v605
      %607 = vmatmul.f32.gmra.mxu0 %v501
      %v608 = vpop.f32.mrf.mxu0
      %v609 = vadd.f32 0.0, %v608
      %610 = vmatmul.f32.gmra.mxu0 %v502
      %v611 = vpop.f32.mrf.mxu0
      %v612 = vadd.f32 0.0, %v611
      %613 = vmatmul.f32.gmra.mxu0 %v503
      %v614 = vpop.f32.mrf.mxu0
      %v615 = vadd.f32 0.0, %v614
      %616 = vdwg.mxu0
      %617 = vmatpush.msra.mxu0 %v551
      %618 = vmatpush.msra.mxu0 %v550
      %619 = vmatpush.msra.mxu0 %v549
      %620 = vmatpush.msra.mxu0 %v548
      %621 = vmatpush.msra.mxu0 %v547
      %622 = vmatpush.msra.mxu0 %v546
      %623 = vmatpush.msra.mxu0 %v545
      %624 = vmatpush.msra.mxu0 %v544
      %625 = vmatpush.msra.mxu0 %v543
      %626 = vmatpush.msra.mxu0 %v542
      %627 = vmatpush.msra.mxu0 %v541
      %628 = vmatpush.msra.mxu0 %v540
      %629 = vmatpush.msra.mxu0 %v539
      %630 = vmatpush.msra.mxu0 %v538
      %631 = vmatpush.msra.mxu0 %v537
      %632 = vmatpush.msra.mxu0 %v536
      %633 = vmatmul.f32.gmra.mxu0 %v504
      %v634 = vpop.f32.mrf.mxu0
      %v635 = vadd.f32 %v570, %v634
      %636 = vmatmul.f32.gmra.mxu0 %v505
      %v637 = vpop.f32.mrf.mxu0
      %v638 = vadd.f32 %v573, %v637
      %639 = vmatmul.f32.gmra.mxu0 %v506
      %v640 = vpop.f32.mrf.mxu0
      %v641 = vadd.f32 %v576, %v640
      %642 = vmatmul.f32.gmra.mxu0 %v507
      %v643 = vpop.f32.mrf.mxu0
      %v644 = vadd.f32 %v579, %v643
      %645 = vmatmul.f32.gmra.mxu0 %v508
      %v646 = vpop.f32.mrf.mxu0
      %v647 = vadd.f32 %v582, %v646
      %648 = vmatmul.f32.gmra.mxu0 %v509
      %v649 = vpop.f32.mrf.mxu0
      %v650 = vadd.f32 %v585, %v649
      %651 = vmatmul.f32.gmra.mxu0 %v510
      %v652 = vpop.f32.mrf.mxu0
      %v653 = vadd.f32 %v588, %v652
      %654 = vmatmul.f32.gmra.mxu0 %v511
      %v655 = vpop.f32.mrf.mxu0
      %v656 = vadd.f32 %v591, %v655
      %657 = vmatmul.f32.gmra.mxu0 %v512
      %v658 = vpop.f32.mrf.mxu0
      %v659 = vadd.f32 %v594, %v658
      %660 = vmatmul.f32.gmra.mxu0 %v513
      %v661 = vpop.f32.mrf.mxu0
      %v662 = vadd.f32 %v597, %v661
      %663 = vmatmul.f32.gmra.mxu0 %v514
      %v664 = vpop.f32.mrf.mxu0
      %v665 = vadd.f32 %v600, %v664
      %666 = vmatmul.f32.gmra.mxu0 %v515
      %v667 = vpop.f32.mrf.mxu0
      %v668 = vadd.f32 %v603, %v667
      %669 = vmatmul.f32.gmra.mxu0 %v516
      %v670 = vpop.f32.mrf.mxu0
      %v671 = vadd.f32 %v606, %v670
      %672 = vmatmul.f32.gmra.mxu0 %v517
      %v673 = vpop.f32.mrf.mxu0
      %v674 = vadd.f32 %v609, %v673
      %675 = vmatmul.f32.gmra.mxu0 %v518
      %v676 = vpop.f32.mrf.mxu0
      %v677 = vadd.f32 %v612, %v676
      %678 = vmatmul.f32.gmra.mxu0 %v519
      %v679 = vpop.f32.mrf.mxu0
      %v680 = vadd.f32 %v615, %v679
      %681 = vdwg.mxu0
      %682 = vmatpush.msra.mxu0 %v471
      %683 = vmatpush.msra.mxu0 %v470
      %684 = vmatpush.msra.mxu0 %v469
      %685 = vmatpush.msra.mxu0 %v468
      %686 = vmatpush.msra.mxu0 %v467
      %687 = vmatpush.msra.mxu0 %v466
      %688 = vmatpush.msra.mxu0 %v465
      %689 = vmatpush.msra.mxu0 %v464
      %690 = vmatpush.msra.mxu0 %v463
      %691 = vmatpush.msra.mxu0 %v462
      %692 = vmatpush.msra.mxu0 %v461
      %693 = vmatpush.msra.mxu0 %v460
      %694 = vmatpush.msra.mxu0 %v459
      %695 = vmatpush.msra.mxu0 %v458
      %696 = vmatpush.msra.mxu0 %v457
      %697 = vmatpush.msra.mxu0 %v456
      %698 = vmatmul.f32.gmra.mxu0 %v424
      %v699 = vpop.f32.mrf.mxu0
      %v700 = vadd.f32 %v635, %v699
      %701 = vmatmul.f32.gmra.mxu0 %v425
      %v702 = vpop.f32.mrf.mxu0
      %v703 = vadd.f32 %v638, %v702
      %704 = vmatmul.f32.gmra.mxu0 %v426
      %v705 = vpop.f32.mrf.mxu0
      %v706 = vadd.f32 %v641, %v705
      %707 = vmatmul.f32.gmra.mxu0 %v427
      %v708 = vpop.f32.mrf.mxu0
      %v709 = vadd.f32 %v644, %v708
      %710 = vmatmul.f32.gmra.mxu0 %v428
      %v711 = vpop.f32.mrf.mxu0
      %v712 = vadd.f32 %v647, %v711
      %713 = vmatmul.f32.gmra.mxu0 %v429
      %v714 = vpop.f32.mrf.mxu0
      %v715 = vadd.f32 %v650, %v714
      %716 = vmatmul.f32.gmra.mxu0 %v430
      %v717 = vpop.f32.mrf.mxu0
      %v718 = vadd.f32 %v653, %v717
      %719 = vmatmul.f32.gmra.mxu0 %v431
      %v720 = vpop.f32.mrf.mxu0
      %v721 = vadd.f32 %v656, %v720
      %722 = vmatmul.f32.gmra.mxu0 %v432
      %v723 = vpop.f32.mrf.mxu0
      %v724 = vadd.f32 %v659, %v723
      %725 = vmatmul.f32.gmra.mxu0 %v433
      %v726 = vpop.f32.mrf.mxu0
      %v727 = vadd.f32 %v662, %v726
      %728 = vmatmul.f32.gmra.mxu0 %v434
      %v729 = vpop.f32.mrf.mxu0
      %v730 = vadd.f32 %v665, %v729
      %731 = vmatmul.f32.gmra.mxu0 %v435
      %v732 = vpop.f32.mrf.mxu0
      %v733 = vadd.f32 %v668, %v732
      %734 = vmatmul.f32.gmra.mxu0 %v436
      %v735 = vpop.f32.mrf.mxu0
      %v736 = vadd.f32 %v671, %v735
      %737 = vmatmul.f32.gmra.mxu0 %v437
      %v738 = vpop.f32.mrf.mxu0
      %v739 = vadd.f32 %v674, %v738
      %740 = vmatmul.f32.gmra.mxu0 %v438
      %v741 = vpop.f32.mrf.mxu0
      %v742 = vadd.f32 %v677, %v741
      %743 = vmatmul.f32.gmra.mxu0 %v439
      %v744 = vpop.f32.mrf.mxu0
      %v745 = vadd.f32 %v680, %v744
      %746 = vdwg.mxu0
      %747 = vmatpush.msra.mxu0 %v487
      %748 = vmatpush.msra.mxu0 %v486
      %749 = vmatpush.msra.mxu0 %v485
      %750 = vmatpush.msra.mxu0 %v484
      %751 = vmatpush.msra.mxu0 %v483
      %752 = vmatpush.msra.mxu0 %v482
      %753 = vmatpush.msra.mxu0 %v481
      %754 = vmatpush.msra.mxu0 %v480
      %755 = vmatpush.msra.mxu0 %v479
      %756 = vmatpush.msra.mxu0 %v478
      %757 = vmatpush.msra.mxu0 %v477
      %758 = vmatpush.msra.mxu0 %v476
      %759 = vmatpush.msra.mxu0 %v475
      %760 = vmatpush.msra.mxu0 %v474
      %761 = vmatpush.msra.mxu0 %v473
      %762 = vmatpush.msra.mxu0 %v472
      %763 = vmatmul.f32.gmra.mxu0 %v440
      %v764 = vpop.f32.mrf.mxu0
      %v765 = vadd.f32 %v700, %v764
      %766 = vmatmul.f32.gmra.mxu0 %v441
      %v767 = vpop.f32.mrf.mxu0
      %v768 = vadd.f32 %v703, %v767
      %769 = vmatmul.f32.gmra.mxu0 %v442
      %v770 = vpop.f32.mrf.mxu0
      %v771 = vadd.f32 %v706, %v770
      %772 = vmatmul.f32.gmra.mxu0 %v443
      %v773 = vpop.f32.mrf.mxu0
      %v774 = vadd.f32 %v709, %v773
      %775 = vmatmul.f32.gmra.mxu0 %v444
      %v776 = vpop.f32.mrf.mxu0
      %v777 = vadd.f32 %v712, %v776
      %778 = vmatmul.f32.gmra.mxu0 %v445
      %v779 = vpop.f32.mrf.mxu0
      %v780 = vadd.f32 %v715, %v779
      %781 = vmatmul.f32.gmra.mxu0 %v446
      %v782 = vpop.f32.mrf.mxu0
      %v783 = vadd.f32 %v718, %v782
      %784 = vmatmul.f32.gmra.mxu0 %v447
      %v785 = vpop.f32.mrf.mxu0
      %v786 = vadd.f32 %v721, %v785
      %787 = vmatmul.f32.gmra.mxu0 %v448
      %v788 = vpop.f32.mrf.mxu0
      %v789 = vadd.f32 %v724, %v788
      %790 = vmatmul.f32.gmra.mxu0 %v449
      %v791 = vpop.f32.mrf.mxu0
      %v792 = vadd.f32 %v727, %v791
      %793 = vmatmul.f32.gmra.mxu0 %v450
      %v794 = vpop.f32.mrf.mxu0
      %v795 = vadd.f32 %v730, %v794
      %796 = vmatmul.f32.gmra.mxu0 %v451
      %v797 = vpop.f32.mrf.mxu0
      %v798 = vadd.f32 %v733, %v797
      %799 = vmatmul.f32.gmra.mxu0 %v452
      %v800 = vpop.f32.mrf.mxu0
      %v801 = vadd.f32 %v736, %v800
      %802 = vmatmul.f32.gmra.mxu0 %v453
      %v803 = vpop.f32.mrf.mxu0
      %v804 = vadd.f32 %v739, %v803
      %805 = vmatmul.f32.gmra.mxu0 %v454
      %v806 = vpop.f32.mrf.mxu0
      %v807 = vadd.f32 %v742, %v806
      %808 = vmatmul.f32.gmra.mxu0 %v455
      %v809 = vpop.f32.mrf.mxu0
      %v810 = vadd.f32 %v745, %v809
      %811 = vdwg.mxu0
      %v812 = vld [vmem:[%s407 + $0x8] sm:$0xff]
      %v813 = vld [vmem:[%s407 + $0x10] sm:$0xff]
      %v814 = vld [vmem:[%s407 + $0x28] sm:$0xff]
      %v815 = vld [vmem:[%s407 + $0x30] sm:$0xff]
      %v816 = vld [vmem:[%s407 + $0x48] sm:$0xff]
      %v817 = vld [vmem:[%s407 + $0x50] sm:$0xff]
      %v818 = vld [vmem:[%s407 + $0x68] sm:$0xff]
      %v819 = vld [vmem:[%s407 + $0x70] sm:$0xff]
      %v820 = vld [vmem:[%s407 + $0x88] sm:$0xff]
      %v821 = vld [vmem:[%s407 + $0x90] sm:$0xff]
      %v822 = vld [vmem:[%s407 + $0xa8] sm:$0xff]
      %v823 = vld [vmem:[%s407 + $0xb0] sm:$0xff]
      %v824 = vld [vmem:[%s407 + $0xc8] sm:$0xff]
      %v825 = vld [vmem:[%s407 + $0xd0] sm:$0xff]
      %v826 = vld [vmem:[%s407 + $0xe8] sm:$0xff]
      %v827 = vld [vmem:[%s407 + $0xf0] sm:$0xff]
      %v828 = vld [vmem:[%s407 + $0x9] sm:$0xff]
      %v829 = vld [vmem:[%s407 + $0x11] sm:$0xff]
      %v830 = vld [vmem:[%s407 + $0x29] sm:$0xff]
      %v831 = vld [vmem:[%s407 + $0x31] sm:$0xff]
      %v832 = vld [vmem:[%s407 + $0x49] sm:$0xff]
      %v833 = vld [vmem:[%s407 + $0x51] sm:$0xff]
      %v834 = vld [vmem:[%s407 + $0x69] sm:$0xff]
      %v835 = vld [vmem:[%s407 + $0x71] sm:$0xff]
      %v836 = vld [vmem:[%s407 + $0x89] sm:$0xff]
      %v837 = vld [vmem:[%s407 + $0x91] sm:$0xff]
      %v838 = vld [vmem:[%s407 + $0xa9] sm:$0xff]
      %v839 = vld [vmem:[%s407 + $0xb1] sm:$0xff]
      %v840 = vld [vmem:[%s407 + $0xc9] sm:$0xff]
      %v841 = vld [vmem:[%s407 + $0xd1] sm:$0xff]
      %v842 = vld [vmem:[%s407 + $0xe9] sm:$0xff]
      %v843 = vld [vmem:[%s407 + $0xf1] sm:$0xff]
      %v844 = vld [vmem:[%s3 + $0x200] sm:$0xff]
      %v845 = vld [vmem:[%s3 + $0x208] sm:$0xff]
      %v846 = vld [vmem:[%s3 + $0x210] sm:$0xff]
      %v847 = vld [vmem:[%s3 + $0x218] sm:$0xff]
      %v848 = vld [vmem:[%s3 + $0x220] sm:$0xff]
      %v849 = vld [vmem:[%s3 + $0x228] sm:$0xff]
      %v850 = vld [vmem:[%s3 + $0x230] sm:$0xff]
      %v851 = vld [vmem:[%s3 + $0x238] sm:$0xff]
      %v852 = vld [vmem:[%s3 + $0x240] sm:$0xff]
      %v853 = vld [vmem:[%s3 + $0x248] sm:$0xff]
      %v854 = vld [vmem:[%s3 + $0x250] sm:$0xff]
      %v855 = vld [vmem:[%s3 + $0x258] sm:$0xff]
      %v856 = vld [vmem:[%s3 + $0x260] sm:$0xff]
      %v857 = vld [vmem:[%s3 + $0x268] sm:$0xff]
      %v858 = vld [vmem:[%s3 + $0x270] sm:$0xff]
      %v859 = vld [vmem:[%s3 + $0x278] sm:$0xff]
      %v860 = vld [vmem:[%s3 + $0x280] sm:$0xff]
      %v861 = vld [vmem:[%s3 + $0x288] sm:$0xff]
      %v862 = vld [vmem:[%s3 + $0x290] sm:$0xff]
      %v863 = vld [vmem:[%s3 + $0x298] sm:$0xff]
      %v864 = vld [vmem:[%s3 + $0x2a0] sm:$0xff]
      %v865 = vld [vmem:[%s3 + $0x2a8] sm:$0xff]
      %v866 = vld [vmem:[%s3 + $0x2b0] sm:$0xff]
      %v867 = vld [vmem:[%s3 + $0x2b8] sm:$0xff]
      %v868 = vld [vmem:[%s3 + $0x2c0] sm:$0xff]
      %v869 = vld [vmem:[%s3 + $0x2c8] sm:$0xff]
      %v870 = vld [vmem:[%s3 + $0x2d0] sm:$0xff]
      %v871 = vld [vmem:[%s3 + $0x2d8] sm:$0xff]
      %v872 = vld [vmem:[%s3 + $0x2e0] sm:$0xff]
      %v873 = vld [vmem:[%s3 + $0x2e8] sm:$0xff]
      %v874 = vld [vmem:[%s3 + $0x2f0] sm:$0xff]
      %v875 = vld [vmem:[%s3 + $0x2f8] sm:$0xff]
      %876 = vmatpush.msra.mxu0 %v859
      %877 = vmatpush.msra.mxu0 %v858
      %878 = vmatpush.msra.mxu0 %v857
      %879 = vmatpush.msra.mxu0 %v856
      %880 = vmatpush.msra.mxu0 %v855
      %881 = vmatpush.msra.mxu0 %v854
      %882 = vmatpush.msra.mxu0 %v853
      %883 = vmatpush.msra.mxu0 %v852
      %884 = vmatpush.msra.mxu0 %v851
      %885 = vmatpush.msra.mxu0 %v850
      %886 = vmatpush.msra.mxu0 %v849
      %887 = vmatpush.msra.mxu0 %v848
      %888 = vmatpush.msra.mxu0 %v847
      %889 = vmatpush.msra.mxu0 %v846
      %890 = vmatpush.msra.mxu0 %v845
      %891 = vmatpush.msra.mxu0 %v844
      %892 = vmatmul.f32.gmra.mxu0 %v812
      %v893 = vpop.f32.mrf.mxu0
      %v894 = vadd.f32 0.0, %v893
      %895 = vmatmul.f32.gmra.mxu0 %v813
      %v896 = vpop.f32.mrf.mxu0
      %v897 = vadd.f32 0.0, %v896
      %898 = vmatmul.f32.gmra.mxu0 %v814
      %v899 = vpop.f32.mrf.mxu0
      %v900 = vadd.f32 0.0, %v899
      %901 = vmatmul.f32.gmra.mxu0 %v815
      %v902 = vpop.f32.mrf.mxu0
      %v903 = vadd.f32 0.0, %v902
      %904 = vmatmul.f32.gmra.mxu0 %v816
      %v905 = vpop.f32.mrf.mxu0
      %v906 = vadd.f32 0.0, %v905
      %907 = vmatmul.f32.gmra.mxu0 %v817
      %v908 = vpop.f32.mrf.mxu0
      %v909 = vadd.f32 0.0, %v908
      %910 = vmatmul.f32.gmra.mxu0 %v818
      %v911 = vpop.f32.mrf.mxu0
      %v912 = vadd.f32 0.0, %v911
      %913 = vmatmul.f32.gmra.mxu0 %v819
      %v914 = vpop.f32.mrf.mxu0
      %v915 = vadd.f32 0.0, %v914
      %916 = vmatmul.f32.gmra.mxu0 %v820
      %v917 = vpop.f32.mrf.mxu0
      %v918 = vadd.f32 0.0, %v917
      %919 = vmatmul.f32.gmra.mxu0 %v821
      %v920 = vpop.f32.mrf.mxu0
      %v921 = vadd.f32 0.0, %v920
      %922 = vmatmul.f32.gmra.mxu0 %v822
      %v923 = vpop.f32.mrf.mxu0
      %v924 = vadd.f32 0.0, %v923
      %925 = vmatmul.f32.gmra.mxu0 %v823
      %v926 = vpop.f32.mrf.mxu0
      %v927 = vadd.f32 0.0, %v926
      %928 = vmatmul.f32.gmra.mxu0 %v824
      %v929 = vpop.f32.mrf.mxu0
      %v930 = vadd.f32 0.0, %v929
      %931 = vmatmul.f32.gmra.mxu0 %v825
      %v932 = vpop.f32.mrf.mxu0
      %v933 = vadd.f32 0.0, %v932
      %934 = vmatmul.f32.gmra.mxu0 %v826
      %v935 = vpop.f32.mrf.mxu0
      %v936 = vadd.f32 0.0, %v935
      %937 = vmatmul.f32.gmra.mxu0 %v827
      %v938 = vpop.f32.mrf.mxu0
      %v939 = vadd.f32 0.0, %v938
      %940 = vdwg.mxu0
      %941 = vmatpush.msra.mxu0 %v875
      %942 = vmatpush.msra.mxu0 %v874
      %943 = vmatpush.msra.mxu0 %v873
      %944 = vmatpush.msra.mxu0 %v872
      %945 = vmatpush.msra.mxu0 %v871
      %946 = vmatpush.msra.mxu0 %v870
      %947 = vmatpush.msra.mxu0 %v869
      %948 = vmatpush.msra.mxu0 %v868
      %949 = vmatpush.msra.mxu0 %v867
      %950 = vmatpush.msra.mxu0 %v866
      %951 = vmatpush.msra.mxu0 %v865
      %952 = vmatpush.msra.mxu0 %v864
      %953 = vmatpush.msra.mxu0 %v863
      %954 = vmatpush.msra.mxu0 %v862
      %955 = vmatpush.msra.mxu0 %v861
      %956 = vmatpush.msra.mxu0 %v860
      %957 = vmatmul.f32.gmra.mxu0 %v828
      %v958 = vpop.f32.mrf.mxu0
      %v959 = vadd.f32 %v894, %v958
      %960 = vmatmul.f32.gmra.mxu0 %v829
      %v961 = vpop.f32.mrf.mxu0
      %v962 = vadd.f32 %v897, %v961
      %963 = vmatmul.f32.gmra.mxu0 %v830
      %v964 = vpop.f32.mrf.mxu0
      %v965 = vadd.f32 %v900, %v964
      %966 = vmatmul.f32.gmra.mxu0 %v831
      %v967 = vpop.f32.mrf.mxu0
      %v968 = vadd.f32 %v903, %v967
      %969 = vmatmul.f32.gmra.mxu0 %v832
      %v970 = vpop.f32.mrf.mxu0
      %v971 = vadd.f32 %v906, %v970
      %972 = vmatmul.f32.gmra.mxu0 %v833
      %v973 = vpop.f32.mrf.mxu0
      %v974 = vadd.f32 %v909, %v973
      %975 = vmatmul.f32.gmra.mxu0 %v834
      %v976 = vpop.f32.mrf.mxu0
      %v977 = vadd.f32 %v912, %v976
      %978 = vmatmul.f32.gmra.mxu0 %v835
      %v979 = vpop.f32.mrf.mxu0
      %v980 = vadd.f32 %v915, %v979
      %981 = vmatmul.f32.gmra.mxu0 %v836
      %v982 = vpop.f32.mrf.mxu0
      %v983 = vadd.f32 %v918, %v982
      %984 = vmatmul.f32.gmra.mxu0 %v837
      %v985 = vpop.f32.mrf.mxu0
      %v986 = vadd.f32 %v921, %v985
      %987 = vmatmul.f32.gmra.mxu0 %v838
      %v988 = vpop.f32.mrf.mxu0
      %v989 = vadd.f32 %v924, %v988
      %990 = vmatmul.f32.gmra.mxu0 %v839
      %v991 = vpop.f32.mrf.mxu0
      %v992 = vadd.f32 %v927, %v991
      %993 = vmatmul.f32.gmra.mxu0 %v840
      %v994 = vpop.f32.mrf.mxu0
      %v995 = vadd.f32 %v930, %v994
      %996 = vmatmul.f32.gmra.mxu0 %v841
      %v997 = vpop.f32.mrf.mxu0
      %v998 = vadd.f32 %v933, %v997
      %999 = vmatmul.f32.gmra.mxu0 %v842
      %v1000 = vpop.f32.mrf.mxu0
      %v1001 = vadd.f32 %v936, %v1000
      %1002 = vmatmul.f32.gmra.mxu0 %v843
      %v1003 = vpop.f32.mrf.mxu0
      %v1004 = vadd.f32 %v939, %v1003
      %1005 = vdwg.mxu0
      %v1006 = vadd.f32 %v765, %v959
      %v1007 = vadd.f32 %v768, %v962
      %v1008 = vadd.f32 %v771, %v965
      %v1009 = vadd.f32 %v774, %v968
      %v1010 = vadd.f32 %v777, %v971
      %v1011 = vadd.f32 %v780, %v974
      %v1012 = vadd.f32 %v783, %v977
      %v1013 = vadd.f32 %v786, %v980
      %v1014 = vadd.f32 %v789, %v983
      %v1015 = vadd.f32 %v792, %v986
      %v1016 = vadd.f32 %v795, %v989
      %v1017 = vadd.f32 %v798, %v992
      %v1018 = vadd.f32 %v801, %v995
      %v1019 = vadd.f32 %v804, %v998
      %v1020 = vadd.f32 %v807, %v1001
      %v1021 = vadd.f32 %v810, %v1004
      %s1022 = scalar_lea.vmem [#allocation2], 64
      %v1023 = vld [vmem:[%s1022 + $0x7] sm:$0xff]
      %v1024 = vld [vmem:[%s1022 + $0xf] sm:$0xff]
      %v1025 = vld [vmem:[%s1022 + $0x27] sm:$0xff]
      %v1026 = vld [vmem:[%s1022 + $0x2f] sm:$0xff]
      %v1027 = vld [vmem:[%s1022 + $0x47] sm:$0xff]
      %v1028 = vld [vmem:[%s1022 + $0x4f] sm:$0xff]
      %v1029 = vld [vmem:[%s1022 + $0x67] sm:$0xff]
      %v1030 = vld [vmem:[%s1022 + $0x6f] sm:$0xff]
      %v1031 = vld [vmem:[%s1022 + $0x87] sm:$0xff]
      %v1032 = vld [vmem:[%s1022 + $0x8f] sm:$0xff]
      %v1033 = vld [vmem:[%s1022 + $0xa7] sm:$0xff]
      %v1034 = vld [vmem:[%s1022 + $0xaf] sm:$0xff]
      %v1035 = vld [vmem:[%s1022 + $0xc7] sm:$0xff]
      %v1036 = vld [vmem:[%s1022 + $0xcf] sm:$0xff]
      %v1037 = vld [vmem:[%s1022 + $0xe7] sm:$0xff]
      %v1038 = vld [vmem:[%s1022 + $0xef] sm:$0xff]
      %v1039 = vld [vmem:[%s1022 + $0x8] sm:$0xff]
      %v1040 = vld [vmem:[%s1022 + $0x10] sm:$0xff]
      %v1041 = vld [vmem:[%s1022 + $0x28] sm:$0xff]
      %v1042 = vld [vmem:[%s1022 + $0x30] sm:$0xff]
      %v1043 = vld [vmem:[%s1022 + $0x48] sm:$0xff]
      %v1044 = vld [vmem:[%s1022 + $0x50] sm:$0xff]
      %v1045 = vld [vmem:[%s1022 + $0x68] sm:$0xff]
      %v1046 = vld [vmem:[%s1022 + $0x70] sm:$0xff]
      %v1047 = vld [vmem:[%s1022 + $0x88] sm:$0xff]
      %v1048 = vld [vmem:[%s1022 + $0x90] sm:$0xff]
      %v1049 = vld [vmem:[%s1022 + $0xa8] sm:$0xff]
      %v1050 = vld [vmem:[%s1022 + $0xb0] sm:$0xff]
      %v1051 = vld [vmem:[%s1022 + $0xc8] sm:$0xff]
      %v1052 = vld [vmem:[%s1022 + $0xd0] sm:$0xff]
      %v1053 = vld [vmem:[%s1022 + $0xe8] sm:$0xff]
      %v1054 = vld [vmem:[%s1022 + $0xf0] sm:$0xff]
      %v1055 = vld [vmem:[%s3 + $0x300] sm:$0xff]
      %v1056 = vld [vmem:[%s3 + $0x308] sm:$0xff]
      %v1057 = vld [vmem:[%s3 + $0x310] sm:$0xff]
      %v1058 = vld [vmem:[%s3 + $0x318] sm:$0xff]
      %v1059 = vld [vmem:[%s3 + $0x320] sm:$0xff]
      %v1060 = vld [vmem:[%s3 + $0x328] sm:$0xff]
      %v1061 = vld [vmem:[%s3 + $0x330] sm:$0xff]
      %v1062 = vld [vmem:[%s3 + $0x338] sm:$0xff]
      %v1063 = vld [vmem:[%s3 + $0x340] sm:$0xff]
      %v1064 = vld [vmem:[%s3 + $0x348] sm:$0xff]
      %v1065 = vld [vmem:[%s3 + $0x350] sm:$0xff]
      %v1066 = vld [vmem:[%s3 + $0x358] sm:$0xff]
      %v1067 = vld [vmem:[%s3 + $0x360] sm:$0xff]
      %v1068 = vld [vmem:[%s3 + $0x368] sm:$0xff]
      %v1069 = vld [vmem:[%s3 + $0x370] sm:$0xff]
      %v1070 = vld [vmem:[%s3 + $0x378] sm:$0xff]
      %v1071 = vld [vmem:[%s3 + $0x380] sm:$0xff]
      %v1072 = vld [vmem:[%s3 + $0x388] sm:$0xff]
      %v1073 = vld [vmem:[%s3 + $0x390] sm:$0xff]
      %v1074 = vld [vmem:[%s3 + $0x398] sm:$0xff]
      %v1075 = vld [vmem:[%s3 + $0x3a0] sm:$0xff]
      %v1076 = vld [vmem:[%s3 + $0x3a8] sm:$0xff]
      %v1077 = vld [vmem:[%s3 + $0x3b0] sm:$0xff]
      %v1078 = vld [vmem:[%s3 + $0x3b8] sm:$0xff]
      %v1079 = vld [vmem:[%s3 + $0x3c0] sm:$0xff]
      %v1080 = vld [vmem:[%s3 + $0x3c8] sm:$0xff]
      %v1081 = vld [vmem:[%s3 + $0x3d0] sm:$0xff]
      %v1082 = vld [vmem:[%s3 + $0x3d8] sm:$0xff]
      %v1083 = vld [vmem:[%s3 + $0x3e0] sm:$0xff]
      %v1084 = vld [vmem:[%s3 + $0x3e8] sm:$0xff]
      %v1085 = vld [vmem:[%s3 + $0x3f0] sm:$0xff]
      %v1086 = vld [vmem:[%s3 + $0x3f8] sm:$0xff]
      %1087 = vmatpush.msra.mxu0 %v1070
      %1088 = vmatpush.msra.mxu0 %v1069
      %1089 = vmatpush.msra.mxu0 %v1068
      %1090 = vmatpush.msra.mxu0 %v1067
      %1091 = vmatpush.msra.mxu0 %v1066
      %1092 = vmatpush.msra.mxu0 %v1065
      %1093 = vmatpush.msra.mxu0 %v1064
      %1094 = vmatpush.msra.mxu0 %v1063
      %1095 = vmatpush.msra.mxu0 %v1062
      %1096 = vmatpush.msra.mxu0 %v1061
      %1097 = vmatpush.msra.mxu0 %v1060
      %1098 = vmatpush.msra.mxu0 %v1059
      %1099 = vmatpush.msra.mxu0 %v1058
      %1100 = vmatpush.msra.mxu0 %v1057
      %1101 = vmatpush.msra.mxu0 %v1056
      %1102 = vmatpush.msra.mxu0 %v1055
      %1103 = vmatmul.f32.gmra.mxu0 %v1023
      %v1104 = vpop.f32.mrf.mxu0
      %v1105 = vadd.f32 0.0, %v1104
      %1106 = vmatmul.f32.gmra.mxu0 %v1024
      %v1107 = vpop.f32.mrf.mxu0
      %v1108 = vadd.f32 0.0, %v1107
      %1109 = vmatmul.f32.gmra.mxu0 %v1025
      %v1110 = vpop.f32.mrf.mxu0
      %v1111 = vadd.f32 0.0, %v1110
      %1112 = vmatmul.f32.gmra.mxu0 %v1026
      %v1113 = vpop.f32.mrf.mxu0
      %v1114 = vadd.f32 0.0, %v1113
      %1115 = vmatmul.f32.gmra.mxu0 %v1027
      %v1116 = vpop.f32.mrf.mxu0
      %v1117 = vadd.f32 0.0, %v1116
      %1118 = vmatmul.f32.gmra.mxu0 %v1028
      %v1119 = vpop.f32.mrf.mxu0
      %v1120 = vadd.f32 0.0, %v1119
      %1121 = vmatmul.f32.gmra.mxu0 %v1029
      %v1122 = vpop.f32.mrf.mxu0
      %v1123 = vadd.f32 0.0, %v1122
      %1124 = vmatmul.f32.gmra.mxu0 %v1030
      %v1125 = vpop.f32.mrf.mxu0
      %v1126 = vadd.f32 0.0, %v1125
      %1127 = vmatmul.f32.gmra.mxu0 %v1031
      %v1128 = vpop.f32.mrf.mxu0
      %v1129 = vadd.f32 0.0, %v1128
      %1130 = vmatmul.f32.gmra.mxu0 %v1032
      %v1131 = vpop.f32.mrf.mxu0
      %v1132 = vadd.f32 0.0, %v1131
      %1133 = vmatmul.f32.gmra.mxu0 %v1033
      %v1134 = vpop.f32.mrf.mxu0
      %v1135 = vadd.f32 0.0, %v1134
      %1136 = vmatmul.f32.gmra.mxu0 %v1034
      %v1137 = vpop.f32.mrf.mxu0
      %v1138 = vadd.f32 0.0, %v1137
      %1139 = vmatmul.f32.gmra.mxu0 %v1035
      %v1140 = vpop.f32.mrf.mxu0
      %v1141 = vadd.f32 0.0, %v1140
      %1142 = vmatmul.f32.gmra.mxu0 %v1036
      %v1143 = vpop.f32.mrf.mxu0
      %v1144 = vadd.f32 0.0, %v1143
      %1145 = vmatmul.f32.gmra.mxu0 %v1037
      %v1146 = vpop.f32.mrf.mxu0
      %v1147 = vadd.f32 0.0, %v1146
      %1148 = vmatmul.f32.gmra.mxu0 %v1038
      %v1149 = vpop.f32.mrf.mxu0
      %v1150 = vadd.f32 0.0, %v1149
      %1151 = vdwg.mxu0
      %1152 = vmatpush.msra.mxu0 %v1086
      %1153 = vmatpush.msra.mxu0 %v1085
      %1154 = vmatpush.msra.mxu0 %v1084
      %1155 = vmatpush.msra.mxu0 %v1083
      %1156 = vmatpush.msra.mxu0 %v1082
      %1157 = vmatpush.msra.mxu0 %v1081
      %1158 = vmatpush.msra.mxu0 %v1080
      %1159 = vmatpush.msra.mxu0 %v1079
      %1160 = vmatpush.msra.mxu0 %v1078
      %1161 = vmatpush.msra.mxu0 %v1077
      %1162 = vmatpush.msra.mxu0 %v1076
      %1163 = vmatpush.msra.mxu0 %v1075
      %1164 = vmatpush.msra.mxu0 %v1074
      %1165 = vmatpush.msra.mxu0 %v1073
      %1166 = vmatpush.msra.mxu0 %v1072
      %1167 = vmatpush.msra.mxu0 %v1071
      %1168 = vmatmul.f32.gmra.mxu0 %v1039
      %v1169 = vpop.f32.mrf.mxu0
      %v1170 = vadd.f32 %v1105, %v1169
      %1171 = vmatmul.f32.gmra.mxu0 %v1040
      %v1172 = vpop.f32.mrf.mxu0
      %v1173 = vadd.f32 %v1108, %v1172
      %1174 = vmatmul.f32.gmra.mxu0 %v1041
      %v1175 = vpop.f32.mrf.mxu0
      %v1176 = vadd.f32 %v1111, %v1175
      %1177 = vmatmul.f32.gmra.mxu0 %v1042
      %v1178 = vpop.f32.mrf.mxu0
      %v1179 = vadd.f32 %v1114, %v1178
      %1180 = vmatmul.f32.gmra.mxu0 %v1043
      %v1181 = vpop.f32.mrf.mxu0
      %v1182 = vadd.f32 %v1117, %v1181
      %1183 = vmatmul.f32.gmra.mxu0 %v1044
      %v1184 = vpop.f32.mrf.mxu0
      %v1185 = vadd.f32 %v1120, %v1184
      %1186 = vmatmul.f32.gmra.mxu0 %v1045
      %v1187 = vpop.f32.mrf.mxu0
      %v1188 = vadd.f32 %v1123, %v1187
      %1189 = vmatmul.f32.gmra.mxu0 %v1046
      %v1190 = vpop.f32.mrf.mxu0
      %v1191 = vadd.f32 %v1126, %v1190
      %1192 = vmatmul.f32.gmra.mxu0 %v1047
      %v1193 = vpop.f32.mrf.mxu0
      %v1194 = vadd.f32 %v1129, %v1193
      %1195 = vmatmul.f32.gmra.mxu0 %v1048
      %v1196 = vpop.f32.mrf.mxu0
      %v1197 = vadd.f32 %v1132, %v1196
      %1198 = vmatmul.f32.gmra.mxu0 %v1049
      %v1199 = vpop.f32.mrf.mxu0
      %v1200 = vadd.f32 %v1135, %v1199
      %1201 = vmatmul.f32.gmra.mxu0 %v1050
      %v1202 = vpop.f32.mrf.mxu0
      %v1203 = vadd.f32 %v1138, %v1202
      %1204 = vmatmul.f32.gmra.mxu0 %v1051
      %v1205 = vpop.f32.mrf.mxu0
      %v1206 = vadd.f32 %v1141, %v1205
      %1207 = vmatmul.f32.gmra.mxu0 %v1052
      %v1208 = vpop.f32.mrf.mxu0
      %v1209 = vadd.f32 %v1144, %v1208
      %1210 = vmatmul.f32.gmra.mxu0 %v1053
      %v1211 = vpop.f32.mrf.mxu0
      %v1212 = vadd.f32 %v1147, %v1211
      %1213 = vmatmul.f32.gmra.mxu0 %v1054
      %v1214 = vpop.f32.mrf.mxu0
      %v1215 = vadd.f32 %v1150, %v1214
      %1216 = vdwg.mxu0
      %v1217 = vadd.f32 %v1006, %v1170
      %v1218 = vadd.f32 %v1007, %v1173
      %v1219 = vadd.f32 %v1008, %v1176
      %v1220 = vadd.f32 %v1009, %v1179
      %v1221 = vadd.f32 %v1010, %v1182
      %v1222 = vadd.f32 %v1011, %v1185
      %v1223 = vadd.f32 %v1012, %v1188
      %v1224 = vadd.f32 %v1013, %v1191
      %v1225 = vadd.f32 %v1014, %v1194
      %v1226 = vadd.f32 %v1015, %v1197
      %v1227 = vadd.f32 %v1016, %v1200
      %v1228 = vadd.f32 %v1017, %v1203
      %v1229 = vadd.f32 %v1018, %v1206
      %v1230 = vadd.f32 %v1019, %v1209
      %v1231 = vadd.f32 %v1020, %v1212
      %v1232 = vadd.f32 %v1021, %v1215
      %v1233 = vld [vmem:[%s1022 + $0x9] sm:$0xff]
      %v1234 = vld [vmem:[%s1022 + $0x11] sm:$0xff]
      %v1235 = vld [vmem:[%s1022 + $0x29] sm:$0xff]
      %v1236 = vld [vmem:[%s1022 + $0x31] sm:$0xff]
      %v1237 = vld [vmem:[%s1022 + $0x49] sm:$0xff]
      %v1238 = vld [vmem:[%s1022 + $0x51] sm:$0xff]
      %v1239 = vld [vmem:[%s1022 + $0x69] sm:$0xff]
      %v1240 = vld [vmem:[%s1022 + $0x71] sm:$0xff]
      %v1241 = vld [vmem:[%s1022 + $0x89] sm:$0xff]
      %v1242 = vld [vmem:[%s1022 + $0x91] sm:$0xff]
      %v1243 = vld [vmem:[%s1022 + $0xa9] sm:$0xff]
      %v1244 = vld [vmem:[%s1022 + $0xb1] sm:$0xff]
      %v1245 = vld [vmem:[%s1022 + $0xc9] sm:$0xff]
      %v1246 = vld [vmem:[%s1022 + $0xd1] sm:$0xff]
      %v1247 = vld [vmem:[%s1022 + $0xe9] sm:$0xff]
      %v1248 = vld [vmem:[%s1022 + $0xf1] sm:$0xff]
      %v1249 = vld [vmem:[%s3 + $0x400] sm:$0xff]
      %v1250 = vld [vmem:[%s3 + $0x408] sm:$0xff]
      %v1251 = vld [vmem:[%s3 + $0x410] sm:$0xff]
      %v1252 = vld [vmem:[%s3 + $0x418] sm:$0xff]
      %v1253 = vld [vmem:[%s3 + $0x420] sm:$0xff]
      %v1254 = vld [vmem:[%s3 + $0x428] sm:$0xff]
      %v1255 = vld [vmem:[%s3 + $0x430] sm:$0xff]
      %v1256 = vld [vmem:[%s3 + $0x438] sm:$0xff]
      %v1257 = vld [vmem:[%s3 + $0x440] sm:$0xff]
      %v1258 = vld [vmem:[%s3 + $0x448] sm:$0xff]
      %v1259 = vld [vmem:[%s3 + $0x450] sm:$0xff]
      %v1260 = vld [vmem:[%s3 + $0x458] sm:$0xff]
      %v1261 = vld [vmem:[%s3 + $0x460] sm:$0xff]
      %v1262 = vld [vmem:[%s3 + $0x468] sm:$0xff]
      %v1263 = vld [vmem:[%s3 + $0x470] sm:$0xff]
      %v1264 = vld [vmem:[%s3 + $0x478] sm:$0xff]
      %1265 = vmatpush.msra.mxu0 %v1264
      %1266 = vmatpush.msra.mxu0 %v1263
      %1267 = vmatpush.msra.mxu0 %v1262
      %1268 = vmatpush.msra.mxu0 %v1261
      %1269 = vmatpush.msra.mxu0 %v1260
      %1270 = vmatpush.msra.mxu0 %v1259
      %1271 = vmatpush.msra.mxu0 %v1258
      %1272 = vmatpush.msra.mxu0 %v1257
      %1273 = vmatpush.msra.mxu0 %v1256
      %1274 = vmatpush.msra.mxu0 %v1255
      %1275 = vmatpush.msra.mxu0 %v1254
      %1276 = vmatpush.msra.mxu0 %v1253
      %1277 = vmatpush.msra.mxu0 %v1252
      %1278 = vmatpush.msra.mxu0 %v1251
      %1279 = vmatpush.msra.mxu0 %v1250
      %1280 = vmatpush.msra.mxu0 %v1249
      %1281 = vmatmul.f32.gmra.mxu0 %v1233
      %v1282 = vpop.f32.mrf.mxu0
      %v1283 = vadd.f32 0.0, %v1282
      %1284 = vmatmul.f32.gmra.mxu0 %v1234
      %v1285 = vpop.f32.mrf.mxu0
      %v1286 = vadd.f32 0.0, %v1285
      %1287 = vmatmul.f32.gmra.mxu0 %v1235
      %v1288 = vpop.f32.mrf.mxu0
      %v1289 = vadd.f32 0.0, %v1288
      %1290 = vmatmul.f32.gmra.mxu0 %v1236
      %v1291 = vpop.f32.mrf.mxu0
      %v1292 = vadd.f32 0.0, %v1291
      %1293 = vmatmul.f32.gmra.mxu0 %v1237
      %v1294 = vpop.f32.mrf.mxu0
      %v1295 = vadd.f32 0.0, %v1294
      %1296 = vmatmul.f32.gmra.mxu0 %v1238
      %v1297 = vpop.f32.mrf.mxu0
      %v1298 = vadd.f32 0.0, %v1297
      %1299 = vmatmul.f32.gmra.mxu0 %v1239
      %v1300 = vpop.f32.mrf.mxu0
      %v1301 = vadd.f32 0.0, %v1300
      %1302 = vmatmul.f32.gmra.mxu0 %v1240
      %v1303 = vpop.f32.mrf.mxu0
      %v1304 = vadd.f32 0.0, %v1303
      %1305 = vmatmul.f32.gmra.mxu0 %v1241
      %v1306 = vpop.f32.mrf.mxu0
      %v1307 = vadd.f32 0.0, %v1306
      %1308 = vmatmul.f32.gmra.mxu0 %v1242
      %v1309 = vpop.f32.mrf.mxu0
      %v1310 = vadd.f32 0.0, %v1309
      %1311 = vmatmul.f32.gmra.mxu0 %v1243
      %v1312 = vpop.f32.mrf.mxu0
      %v1313 = vadd.f32 0.0, %v1312
      %1314 = vmatmul.f32.gmra.mxu0 %v1244
      %v1315 = vpop.f32.mrf.mxu0
      %v1316 = vadd.f32 0.0, %v1315
      %1317 = vmatmul.f32.gmra.mxu0 %v1245
      %v1318 = vpop.f32.mrf.mxu0
      %v1319 = vadd.f32 0.0, %v1318
      %1320 = vmatmul.f32.gmra.mxu0 %v1246
      %v1321 = vpop.f32.mrf.mxu0
      %v1322 = vadd.f32 0.0, %v1321
      %1323 = vmatmul.f32.gmra.mxu0 %v1247
      %v1324 = vpop.f32.mrf.mxu0
      %v1325 = vadd.f32 0.0, %v1324
      %1326 = vmatmul.f32.gmra.mxu0 %v1248
      %v1327 = vpop.f32.mrf.mxu0
      %v1328 = vadd.f32 0.0, %v1327
      %1329 = vdwg.mxu0
      %v1330 = vadd.f32 %v1217, %v1283
      %v1331 = vadd.f32 %v1218, %v1286
      %v1332 = vadd.f32 %v1219, %v1289
      %v1333 = vadd.f32 %v1220, %v1292
      %v1334 = vadd.f32 %v1221, %v1295
      %v1335 = vadd.f32 %v1222, %v1298
      %v1336 = vadd.f32 %v1223, %v1301
      %v1337 = vadd.f32 %v1224, %v1304
      %v1338 = vadd.f32 %v1225, %v1307
      %v1339 = vadd.f32 %v1226, %v1310
      %v1340 = vadd.f32 %v1227, %v1313
      %v1341 = vadd.f32 %v1228, %v1316
      %v1342 = vadd.f32 %v1229, %v1319
      %v1343 = vadd.f32 %v1230, %v1322
      %v1344 = vadd.f32 %v1231, %v1325
      %v1345 = vadd.f32 %v1232, %v1328
      %1346 = vst [vmem:[%s273] sm:$0xff] %v1330
      %1347 = vst [vmem:[%s273 + $0x8] sm:$0xff] %v1331
      %1348 = vst [vmem:[%s273 + $0x10] sm:$0xff] %v1332
      %1349 = vst [vmem:[%s273 + $0x18] sm:$0xff] %v1333
      %1350 = vst [vmem:[%s273 + $0x20] sm:$0xff] %v1334
      %1351 = vst [vmem:[%s273 + $0x28] sm:$0xff] %v1335
      %1352 = vst [vmem:[%s273 + $0x30] sm:$0xff] %v1336
      %1353 = vst [vmem:[%s273 + $0x38] sm:$0xff] %v1337
      %1354 = vst [vmem:[%s273 + $0x40] sm:$0xff] %v1338
      %1355 = vst [vmem:[%s273 + $0x48] sm:$0xff] %v1339
      %1356 = vst [vmem:[%s273 + $0x50] sm:$0xff] %v1340
      %1357 = vst [vmem:[%s273 + $0x58] sm:$0xff] %v1341
      %1358 = vst [vmem:[%s273 + $0x60] sm:$0xff] %v1342
      %1359 = vst [vmem:[%s273 + $0x68] sm:$0xff] %v1343
      %1360 = vst [vmem:[%s273 + $0x70] sm:$0xff] %v1344
      %1361 = vst [vmem:[%s273 + $0x78] sm:$0xff] %v1345
      %v1362 = vadd.f32 %v1330, %v1331
      %v1363 = vadd.f32 %v1362, %v1332
      %v1364 = vadd.f32 %v1363, %v1333
      %v1365 = vadd.f32 %v1364, %v1334
      %v1366 = vadd.f32 %v1365, %v1335
      %v1367 = vadd.f32 %v1366, %v1336
      %v1368 = vadd.f32 %v1367, %v1337
      %v1369 = vadd.f32 %v1368, %v1338
      %v1370 = vadd.f32 %v1369, %v1339
      %v1371 = vadd.f32 %v1370, %v1340
      %v1372 = vadd.f32 %v1371, %v1341
      %v1373 = vadd.f32 %v1372, %v1342
      %v1374 = vadd.f32 %v1373, %v1343
      %v1375 = vadd.f32 %v1374, %v1344
      %v1376 = vadd.f32 %v1375, %v1345
      %v1377 = vrot.slane %v1376, 4
      %v1378 = vadd.f32 %v1376, %v1377
      %v1379 = vrot.slane %v1378, 2
      %v1380 = vadd.f32 %v1378, %v1379
      %v1381 = vrot.slane %v1380, 1
      %v1382 = vadd.f32 %v1380, %v1381
      %v1383 = vmul.f32 %v1330, %v1330
      %v1384 = vmul.f32 %v1331, %v1331
      %v1385 = vmul.f32 %v1332, %v1332
      %v1386 = vmul.f32 %v1333, %v1333
      %v1387 = vmul.f32 %v1334, %v1334
      %v1388 = vmul.f32 %v1335, %v1335
      %v1389 = vmul.f32 %v1336, %v1336
      %v1390 = vmul.f32 %v1337, %v1337
      %v1391 = vmul.f32 %v1338, %v1338
      %v1392 = vmul.f32 %v1339, %v1339
      %v1393 = vmul.f32 %v1340, %v1340
      %v1394 = vmul.f32 %v1341, %v1341
      %v1395 = vmul.f32 %v1342, %v1342
      %v1396 = vmul.f32 %v1343, %v1343
      %v1397 = vmul.f32 %v1344, %v1344
      %v1398 = vmul.f32 %v1345, %v1345
      %v1399 = vadd.f32 %v1383, %v1384
      %v1400 = vadd.f32 %v1399, %v1385
      %v1401 = vadd.f32 %v1400, %v1386
      %v1402 = vadd.f32 %v1401, %v1387
      %v1403 = vadd.f32 %v1402, %v1388
      %v1404 = vadd.f32 %v1403, %v1389
      %v1405 = vadd.f32 %v1404, %v1390
      %v1406 = vadd.f32 %v1405, %v1391
      %v1407 = vadd.f32 %v1406, %v1392
      %v1408 = vadd.f32 %v1407, %v1393
      %v1409 = vadd.f32 %v1408, %v1394
      %v1410 = vadd.f32 %v1409, %v1395
      %v1411 = vadd.f32 %v1410, %v1396
      %v1412 = vadd.f32 %v1411, %v1397
      %v1413 = vadd.f32 %v1412, %v1398
      %v1414 = vrot.slane %v1413, 4
      %v1415 = vadd.f32 %v1413, %v1414
      %v1416 = vrot.slane %v1415, 2
      %v1417 = vadd.f32 %v1415, %v1416
      %v1418 = vrot.slane %v1417, 1
      %v1419 = vadd.f32 %v1417, %v1418
      %vm1420 = vcmask 1040384
      %v1421 = vsel %vm1420, %v1382, %v1419
      %1422 = vst [vmem:[%s281] sm:$0x3] %v1421
      %p1423 = scmp.lt.s32.totalorder %s21, 1
      %s1424 = scalar_select %p1423, %s21, 1
      %p1425 = scmp.lt.s32.totalorder %s22, 1
      %s1426 = scalar_select %p1425, %s22, 1
      %s1427 = smul.addr %s1426, 16
      %s1428 = smul.addr %s1424, 32
      %s1429 = sadd.s32 %s1427, %s1428
      %s1430 = smul.addr %s1429, 8
      %s1431 = scalar_lea.vmem %s4, %s1430
      %p1432 = scmp.lt.s32.totalorder %s21, 1
      %s1433 = scalar_select %p1432, %s21, 1
      %p1434 = scmp.lt.s32.totalorder %s22, 1
      %s1435 = scalar_select %p1434, %s22, 1
      %s1436 = smul.addr %s1433, 2
      %s1437 = sadd.s32 %s1435, %s1436
      %s1438 = smul.addr %s1437, 2
      %s1439 = scalar_lea.vmem %s5, %s1438
      // Predicated region
      $region37: #{basic_block_forward.4} parent=35 // pred_check
        %p1440 = pneg %p140
      $region38: #{basic_block_forward.4} parent=35 // pred_check_branch
        %1442 = sbr.rel (%p1440) target = $region40
      $region39: #{basic_block_forward.4} parent=35 // pred_region
        _
      $region40: #{basic_block_forward.4} parent=35 // pred_fallthru
        _
      // Predicated region
      $region41: #{basic_block_forward.4} parent=35 // pred_check
        %p1443 = pneg %p168
      $region42: #{basic_block_forward.4} parent=35 // pred_check_branch
        %1445 = sbr.rel (%p1443) target = $region44
      $region43: #{basic_block_forward.4} parent=35 // pred_region
        _
      $region44: #{basic_block_forward.4} parent=35 // pred_fallthru
        _
    $region36: #{basic_block_forward.4} parent=5 // pred_fallthru
      _
    %p1446 = scmp.le.s32.totalorder 2, %s12
    // Predicated region
    $region45: #{basic_block_forward.4} parent=5 // pred_check
      %p1447 = pneg %p1446
    $region46: #{basic_block_forward.4} parent=5 // pred_check_branch
      %1449 = sbr.rel (%p1447) target = $region48
    $region47: #{basic_block_forward.4} parent=5 // pred_region
      %s1450 = ssub.s32 %s12, 2
      // Predicated region
      $region49: #{basic_block_forward.4} parent=47 // pred_check
        %p1451 = pneg %p146
      $region50: #{basic_block_forward.4} parent=47 // pred_check_branch
        %1453 = sbr.rel (%p1451) target = $region52
      $region51: #{basic_block_forward.4} parent=47 // pred_region
        %p1454 = scmp.lt.s32.totalorder %s23, 1
        %s1455 = scalar_select %p1454, %s23, 1
        %p1456 = scmp.lt.s32.totalorder %s24, 1
        %s1457 = scalar_select %p1456, %s24, 1
        %s1458 = smul.addr %s1457, 16
        %s1459 = smul.addr %s1455, 32
        %s1460 = sadd.s32 %s1458, %s1459
        %s1461 = smul.addr %s1460, 8
        %s1462 = scalar_lea.vmem %s4, %s1461
      $region52: #{basic_block_forward.4} parent=47 // pred_fallthru
        _
      // Predicated region
      $region53: #{basic_block_forward.4} parent=47 // pred_check
        %p1463 = pneg %p174
      $region54: #{basic_block_forward.4} parent=47 // pred_check_branch
        %1465 = sbr.rel (%p1463) target = $region56
      $region55: #{basic_block_forward.4} parent=47 // pred_region
        %p1466 = scmp.lt.s32.totalorder %s23, 1
        %s1467 = scalar_select %p1466, %s23, 1
        %p1468 = scmp.lt.s32.totalorder %s24, 1
        %s1469 = scalar_select %p1468, %s24, 1
        %s1470 = smul.addr %s1467, 2
        %s1471 = sadd.s32 %s1469, %s1470
        %s1472 = smul.addr %s1471, 2
        %s1473 = scalar_lea.vmem %s5, %s1472
      $region56: #{basic_block_forward.4} parent=47 // pred_fallthru
        _
    $region48: #{basic_block_forward.4} parent=5 // pred_fallthru
      _
  $region6: #{basic_block_forward.4} parent=0 // loop_footer
    %s16 = sadd.s32 1, %s12
  $region7: #{basic_block_forward.4} parent=0 // loop_footer_branch
    %11 = sbr.rel target = $region3
  $region8: #{basic_block_forward.4} parent=0 // loop_exit
    _

</llo_original>
